<compile_context>
chip_gen: v5e
topology: v5e:2x2
jax: 0.10.0
libtpu: 0.0.40
codegen_flags: <defaults>
</compile_context>

<pallas_src>
import functools
import math

import jax
import jax.numpy as jnp
import numpy as np
from jax import lax
from jax.experimental import pallas as pl
from jax.experimental.pallas import tpu as pltpu


def _round_up(x, m):
    return ((x + m - 1) // m) * m


# --------------------------------------------------------------------------------- #
# with_conv=True : pad (0,1,0,1) + Conv2d(C, C, kernel=3, stride=2, padding=0)
# --------------------------------------------------------------------------------- #
def _make_conv_kernel(OH, OW):
    OWp = OW + 1          # each output row carries one phantom column (dropped later)
    M = OH * OWp          # rows computed per batch item

    def kernel(p_ref, w_ref, b_ref, out_ref):
        """p_ref  : (1, 4, S_pad, C_in) bf16  parity slabs, spatial flattened row-major
           w_ref  : (9, C_in, C_out)    bf16  tap-major (kh*3 + kw)
           b_ref  : (1, C_out)          f32
           out_ref: (1, M, C_out)       f32
        """
        acc = None
        for kh in range(3):
            for kw in range(3):
                par = 2 * (kh % 2) + (kw % 2)
                off = (kh // 2) * OWp + (kw // 2)
                # Contiguous static slice of the flattened slab -> no per-row gather.
                tap = p_ref[0, par, off:off + M, :]                       # (M, C_in)
                d = jnp.dot(tap, w_ref[3 * kh + kw],
                            preferred_element_type=jnp.float32)           # MXU bf16->f32
                acc = d if acc is None else acc + d
        out_ref[0] = acc + b_ref[...]                                     # f32 bias + store

    return kernel


@functools.partial(jax.jit, static_argnames=("single_buffer",))
def _downsample_conv_impl(x_nchw, weight, bias, *, single_buffer=True):
    B, C, H, W = x_nchw.shape
    C_out = weight.shape[0]
    assert H % 2 == 0 and W % 2 == 0, "even spatial dims expected"
    # TODO(synk): odd H/W (still legal for PyTorch pad (0,1,0,1)) needs differently
    # sized parity slabs; not required for the UNet use case.
    OH, OW = H // 2, W // 2
    OWp = OW + 1
    M = OH * OWp
    S = (OH + 1) * OWp
    S_pad = _round_up(S + 1, 8)          # +1 so the tap at offset OW+2 stays in bounds

    # NCHW -> NHWC, cast to bf16 *before* any data movement: every later pass
    # (pad / parity split / operand DMA) moves half the bytes.
    x_l = jnp.transpose(x_nchw, (0, 2, 3, 1)).astype(jnp.bfloat16)
    x_p = jnp.pad(x_l, ((0, 0), (0, 2), (0, 2), (0, 0)))     # PyTorch (0,1) pad + 1 unread
    xs = x_p.reshape(B, OH + 1, 2, OWp, 2, C)
    # Parity-major stack, spatial flattened: one input, one DMA per grid step.
    p = jnp.transpose(xs, (0, 2, 4, 1, 3, 5)).reshape(B, 4, S, C)
    p = jnp.pad(p, ((0, 0), (0, 0), (0, S_pad - S), (0, 0)))

    # (C_out, C_in, 3, 3) -> (kh, kw, ci, co) -> (9, C_in, C_out), bf16 for the MXU.
    w_mat = jnp.transpose(weight, (2, 3, 1, 0)).reshape(9, C, C_out).astype(jnp.bfloat16)
    b_row = bias.reshape(1, C_out).astype(jnp.float32)

    def _invariant(block_shape, index_map):
        # Grid-invariant operands: no need for a second (double-buffer) VMEM copy.
        if single_buffer:
            return pl.BlockSpec(block_shape, index_map, pipeline_mode=pl.Buffered(1))
        return pl.BlockSpec(block_shape, index_map)

    out = pl.pallas_call(
        _make_conv_kernel(OH, OW),
        out_shape=jax.ShapeDtypeStruct((B, M, C_out), jnp.float32),
        grid_spec=pltpu.PrefetchScalarGridSpec(
            num_scalar_prefetch=0,
            grid=(B,),
            in_specs=[
                pl.BlockSpec((1, 4, S_pad, C), lambda b: (b, 0, 0, 0)),
                _invariant((9, C, C_out), lambda b: (0, 0, 0)),
                _invariant((1, C_out), lambda b: (0, 0)),
            ],
            out_specs=pl.BlockSpec((1, M, C_out), lambda b: (b, 0, 0)),
        ),
        compiler_params=pltpu.CompilerParams(
            dimension_semantics=("parallel",),
            vmem_limit_bytes=32 * 1024 * 1024,
            allow_input_fusion=[True, True, True],
        ),
    )(p, w_mat, b_row)

    # (B, M, C_out) -> drop phantom column -> NCHW (single fused output pass under jit).
    out = out.reshape(B, OH, OWp, C_out)[:, :, :OW, :]
    return jnp.transpose(out, (0, 3, 1, 2))


def downsample_conv_pallas(x_nchw, weight, bias):
    """Downsample.forward with with_conv=True.  x: (B,C,H,W) f32, NCHW like PyTorch."""
    try:
        return _downsample_conv_impl(x_nchw, weight, bias, single_buffer=True)
    except Exception:
        # pl.Buffered(1) unsupported by this jax build -> default double buffering.
        return _downsample_conv_impl(x_nchw, weight, bias, single_buffer=False)


# --------------------------------------------------------------------------------- #
# with_conv=False : avg_pool2d(kernel=2, stride=2)   (kept in f32 for exactness)
# --------------------------------------------------------------------------------- #
def _avgpool_kernel(p_ref, out_ref):
    # p_ref: (1, 4, OH*OW, C) f32 parity stack; out_ref: (1, OH*OW, C) f32
    out_ref[0] = 0.25 * (p_ref[0, 0] + p_ref[0, 1] + p_ref[0, 2] + p_ref[0, 3])


@jax.jit
def downsample_avgpool_pallas(x_nchw):
    B, C, H, W = x_nchw.shape
    assert H % 2 == 0 and W % 2 == 0, "even spatial dims expected"
    OH, OW = H // 2, W // 2
    S = OH * OW

    x_l = jnp.transpose(x_nchw, (0, 2, 3, 1))
    xs = x_l.reshape(B, OH, 2, OW, 2, C)
    p = jnp.transpose(xs, (0, 2, 4, 1, 3, 5)).reshape(B, 4, S, C)   # parity-major stack

    out = pl.pallas_call(
        _avgpool_kernel,
        out_shape=jax.ShapeDtypeStruct((B, S, C), jnp.float32),
        grid_spec=pltpu.PrefetchScalarGridSpec(
            num_scalar_prefetch=0,
            grid=(B,),
            in_specs=[pl.BlockSpec((1, 4, S, C), lambda b: (b, 0, 0, 0))],
            out_specs=pl.BlockSpec((1, S, C), lambda b: (b, 0, 0)),
        ),
        compiler_params=pltpu.CompilerParams(
            dimension_semantics=("parallel",),
            vmem_limit_bytes=32 * 1024 * 1024,
            allow_input_fusion=[True],
        ),
    )(p)

    return jnp.transpose(out.reshape(B, OH, OW, C), (0, 3, 1, 2))


# --------------------------------------------------------------------------------- #
# Pure-JAX references (PyTorch semantics)
# --------------------------------------------------------------------------------- #
def downsample_conv_reference(x, weight, bias):
    x_p = jnp.pad(x, ((0, 0), (0, 0), (0, 1), (0, 1)))   # F.pad(x, (0,1,0,1))
    y = lax.conv_general_dilated(
        x_p, weight, window_strides=(2, 2), padding="VALID",
        dimension_numbers=("NCHW", "OIHW", "NCHW"),
        precision=lax.Precision.HIGHEST)
    return y + bias[None, :, None, None]


def downsample_avgpool_reference(x):
    B, C, H, W = x.shape
    return x.reshape(B, C, H // 2, 2, W // 2, 2).mean(axis=(3, 5))


if __name__ == "__main__":
    B, C, H, W = 2, 128, 16, 16   # C = 128 -> lane-dense loads / stores / MXU N dim

    key = jax.random.PRNGKey(0)
    k_x, k_w, k_b = jax.random.split(key, 3)

    x = jax.random.normal(k_x, (B, C, H, W), dtype=jnp.float32)

    fan_in = C * 3 * 3
    bound = 1.0 / math.sqrt(fan_in)
    weight = jax.random.uniform(k_w, (C, C, 3, 3), jnp.float32, -bound, bound)
    bias = jax.random.uniform(k_b, (C,), jnp.float32, -bound, bound)

    # with_conv=True path (bf16 MXU operands -> relaxed tolerance vs f32 reference)
    out_conv = jax.block_until_ready(downsample_conv_pallas(x, weight, bias))
    ref_conv = jax.block_until_ready(downsample_conv_reference(x, weight, bias))
    np.testing.assert_allclose(np.asarray(out_conv), np.asarray(ref_conv),
                               rtol=2e-2, atol=2e-2)

    # with_conv=False path (pure f32 VPU math -> tight tolerance)
    out_pool = jax.block_until_ready(downsample_avgpool_pallas(x))
    ref_pool = jax.block_until_ready(downsample_avgpool_reference(x))
    np.testing.assert_allclose(np.asarray(out_pool), np.asarray(ref_pool),
                               rtol=1e-5, atol=1e-5)

    print("KERNEL_OK")
</pallas_src>

<mosaic_0001>
module attributes {stable_mosaic.version = 11 : i64} {
  func.func @kernel(%arg0: i32, %arg1: memref<1x4x88x128xbf16, #tpu.memory_space<vmem>>, %arg2: memref<9x128x128xbf16, #tpu.memory_space<vmem>>, %arg3: memref<1x128xf32, #tpu.memory_space<vmem>>, %arg4: memref<1x72x128xf32, #tpu.memory_space<vmem>>) attributes {dimension_semantics = [#tpu.dimension_semantics<parallel>], iteration_bounds = array<i64: 2>, scalar_prefetch = 0 : i64, scratch_operands = 0 : i64, tpu.core_type = #tpu.core_type<tc>, window_params = [{transform_indices = @transform_0, window_bounds = array<i64: 1, 4, 88, 128>}, {pipeline_mode = #tpu.pipeline_mode<synchronous>, transform_indices = @transform_1, window_bounds = array<i64: 9, 128, 128>}, {pipeline_mode = #tpu.pipeline_mode<synchronous>, transform_indices = @transform_2, window_bounds = array<i64: 1, 128>}, {transform_indices = @transform_3, window_bounds = array<i64: 1, 72, 128>}]} {
    %c0 = arith.constant 0 : index
    %c0_0 = arith.constant 0 : index
    %c0_1 = arith.constant 0 : index
    %c0_2 = arith.constant 0 : index
    %0 = vector.load %arg1[%c0, %c0_0, %c0_1, %c0_2] : memref<1x4x88x128xbf16, #tpu.memory_space<vmem>>, vector<1x1x72x128xbf16>
    %1 = vector.shape_cast %0 : vector<1x1x72x128xbf16> to vector<72x128xbf16>
    %c0_3 = arith.constant 0 : index
    %c0_4 = arith.constant 0 : index
    %c0_5 = arith.constant 0 : index
    %2 = vector.load %arg2[%c0_3, %c0_4, %c0_5] : memref<9x128x128xbf16, #tpu.memory_space<vmem>>, vector<1x128x128xbf16>
    %3 = vector.shape_cast %2 : vector<1x128x128xbf16> to vector<128x128xbf16>
    %cst = arith.constant dense<0.000000e+00> : vector<72x128xf32>
    %4 = tpu.matmul %1, %3, %cst {dimension_numbers = #tpu.dot_dimension_numbers<[1], [0], [0], [1], [0, 0, 1, 1], [], []>} : vector<72x128xbf16>, vector<128x128xbf16>, vector<72x128xf32> -> vector<72x128xf32>
    %c0_6 = arith.constant 0 : index
    %c1 = arith.constant 1 : index
    %c0_7 = arith.constant 0 : index
    %c0_8 = arith.constant 0 : index
    %5 = vector.load %arg1[%c0_6, %c1, %c0_7, %c0_8] : memref<1x4x88x128xbf16, #tpu.memory_space<vmem>>, vector<1x1x72x128xbf16>
    %6 = vector.shape_cast %5 : vector<1x1x72x128xbf16> to vector<72x128xbf16>
    %c1_9 = arith.constant 1 : index
    %c0_10 = arith.constant 0 : index
    %c0_11 = arith.constant 0 : index
    %7 = vector.load %arg2[%c1_9, %c0_10, %c0_11] : memref<9x128x128xbf16, #tpu.memory_space<vmem>>, vector<1x128x128xbf16>
    %8 = vector.shape_cast %7 : vector<1x128x128xbf16> to vector<128x128xbf16>
    %cst_12 = arith.constant dense<0.000000e+00> : vector<72x128xf32>
    %9 = tpu.matmul %6, %8, %cst_12 {dimension_numbers = #tpu.dot_dimension_numbers<[1], [0], [0], [1], [0, 0, 1, 1], [], []>} : vector<72x128xbf16>, vector<128x128xbf16>, vector<72x128xf32> -> vector<72x128xf32>
    %10 = arith.addf %4, %9 : vector<72x128xf32>
    %c0_13 = arith.constant 0 : index
    %c0_14 = arith.constant 0 : index
    %c1_15 = arith.constant 1 : index
    %c0_16 = arith.constant 0 : index
    %11 = vector.load %arg1[%c0_13, %c0_14, %c1_15, %c0_16] : memref<1x4x88x128xbf16, #tpu.memory_space<vmem>>, vector<1x1x72x128xbf16>
    %12 = vector.shape_cast %11 : vector<1x1x72x128xbf16> to vector<72x128xbf16>
    %c2 = arith.constant 2 : index
    %c0_17 = arith.constant 0 : index
    %c0_18 = arith.constant 0 : index
    %13 = vector.load %arg2[%c2, %c0_17, %c0_18] : memref<9x128x128xbf16, #tpu.memory_space<vmem>>, vector<1x128x128xbf16>
    %14 = vector.shape_cast %13 : vector<1x128x128xbf16> to vector<128x128xbf16>
    %cst_19 = arith.constant dense<0.000000e+00> : vector<72x128xf32>
    %15 = tpu.matmul %12, %14, %cst_19 {dimension_numbers = #tpu.dot_dimension_numbers<[1], [0], [0], [1], [0, 0, 1, 1], [], []>} : vector<72x128xbf16>, vector<128x128xbf16>, vector<72x128xf32> -> vector<72x128xf32>
    %16 = arith.addf %10, %15 : vector<72x128xf32>
    %c0_20 = arith.constant 0 : index
    %c2_21 = arith.constant 2 : index
    %c0_22 = arith.constant 0 : index
    %c0_23 = arith.constant 0 : index
    %17 = vector.load %arg1[%c0_20, %c2_21, %c0_22, %c0_23] : memref<1x4x88x128xbf16, #tpu.memory_space<vmem>>, vector<1x1x72x128xbf16>
    %18 = vector.shape_cast %17 : vector<1x1x72x128xbf16> to vector<72x128xbf16>
    %c3 = arith.constant 3 : index
    %c0_24 = arith.constant 0 : index
    %c0_25 = arith.constant 0 : index
    %19 = vector.load %arg2[%c3, %c0_24, %c0_25] : memref<9x128x128xbf16, #tpu.memory_space<vmem>>, vector<1x128x128xbf16>
    %20 = vector.shape_cast %19 : vector<1x128x128xbf16> to vector<128x128xbf16>
    %cst_26 = arith.constant dense<0.000000e+00> : vector<72x128xf32>
    %21 = tpu.matmul %18, %20, %cst_26 {dimension_numbers = #tpu.dot_dimension_numbers<[1], [0], [0], [1], [0, 0, 1, 1], [], []>} : vector<72x128xbf16>, vector<128x128xbf16>, vector<72x128xf32> -> vector<72x128xf32>
    %22 = arith.addf %16, %21 : vector<72x128xf32>
    %c0_27 = arith.constant 0 : index
    %c3_28 = arith.constant 3 : index
    %c0_29 = arith.constant 0 : index
    %c0_30 = arith.constant 0 : index
    %23 = vector.load %arg1[%c0_27, %c3_28, %c0_29, %c0_30] : memref<1x4x88x128xbf16, #tpu.memory_space<vmem>>, vector<1x1x72x128xbf16>
    %24 = vector.shape_cast %23 : vector<1x1x72x128xbf16> to vector<72x128xbf16>
    %c4 = arith.constant 4 : index
    %c0_31 = arith.constant 0 : index
    %c0_32 = arith.constant 0 : index
    %25 = vector.load %arg2[%c4, %c0_31, %c0_32] : memref<9x128x128xbf16, #tpu.memory_space<vmem>>, vector<1x128x128xbf16>
    %26 = vector.shape_cast %25 : vector<1x128x128xbf16> to vector<128x128xbf16>
    %cst_33 = arith.constant dense<0.000000e+00> : vector<72x128xf32>
    %27 = tpu.matmul %24, %26, %cst_33 {dimension_numbers = #tpu.dot_dimension_numbers<[1], [0], [0], [1], [0, 0, 1, 1], [], []>} : vector<72x128xbf16>, vector<128x128xbf16>, vector<72x128xf32> -> vector<72x128xf32>
    %28 = arith.addf %22, %27 : vector<72x128xf32>
    %c0_34 = arith.constant 0 : index
    %c2_35 = arith.constant 2 : index
    %c1_36 = arith.constant 1 : index
    %c0_37 = arith.constant 0 : index
    %29 = vector.load %arg1[%c0_34, %c2_35, %c1_36, %c0_37] : memref<1x4x88x128xbf16, #tpu.memory_space<vmem>>, vector<1x1x72x128xbf16>
    %30 = vector.shape_cast %29 : vector<1x1x72x128xbf16> to vector<72x128xbf16>
    %c5 = arith.constant 5 : index
    %c0_38 = arith.constant 0 : index
    %c0_39 = arith.constant 0 : index
    %31 = vector.load %arg2[%c5, %c0_38, %c0_39] : memref<9x128x128xbf16, #tpu.memory_space<vmem>>, vector<1x128x128xbf16>
    %32 = vector.shape_cast %31 : vector<1x128x128xbf16> to vector<128x128xbf16>
    %cst_40 = arith.constant dense<0.000000e+00> : vector<72x128xf32>
    %33 = tpu.matmul %30, %32, %cst_40 {dimension_numbers = #tpu.dot_dimension_numbers<[1], [0], [0], [1], [0, 0, 1, 1], [], []>} : vector<72x128xbf16>, vector<128x128xbf16>, vector<72x128xf32> -> vector<72x128xf32>
    %34 = arith.addf %28, %33 : vector<72x128xf32>
    %c0_41 = arith.constant 0 : index
    %c0_42 = arith.constant 0 : index
    %c9 = arith.constant 9 : index
    %c0_43 = arith.constant 0 : index
    %35 = vector.load %arg1[%c0_41, %c0_42, %c9, %c0_43] : memref<1x4x88x128xbf16, #tpu.memory_space<vmem>>, vector<1x1x72x128xbf16>
    %36 = vector.shape_cast %35 : vector<1x1x72x128xbf16> to vector<72x128xbf16>
    %c6 = arith.constant 6 : index
    %c0_44 = arith.constant 0 : index
    %c0_45 = arith.constant 0 : index
    %37 = vector.load %arg2[%c6, %c0_44, %c0_45] : memref<9x128x128xbf16, #tpu.memory_space<vmem>>, vector<1x128x128xbf16>
    %38 = vector.shape_cast %37 : vector<1x128x128xbf16> to vector<128x128xbf16>
    %cst_46 = arith.constant dense<0.000000e+00> : vector<72x128xf32>
    %39 = tpu.matmul %36, %38, %cst_46 {dimension_numbers = #tpu.dot_dimension_numbers<[1], [0], [0], [1], [0, 0, 1, 1], [], []>} : vector<72x128xbf16>, vector<128x128xbf16>, vector<72x128xf32> -> vector<72x128xf32>
    %40 = arith.addf %34, %39 : vector<72x128xf32>
    %c0_47 = arith.constant 0 : index
    %c1_48 = arith.constant 1 : index
    %c9_49 = arith.constant 9 : index
    %c0_50 = arith.constant 0 : index
    %41 = vector.load %arg1[%c0_47, %c1_48, %c9_49, %c0_50] : memref<1x4x88x128xbf16, #tpu.memory_space<vmem>>, vector<1x1x72x128xbf16>
    %42 = vector.shape_cast %41 : vector<1x1x72x128xbf16> to vector<72x128xbf16>
    %c7 = arith.constant 7 : index
    %c0_51 = arith.constant 0 : index
    %c0_52 = arith.constant 0 : index
    %43 = vector.load %arg2[%c7, %c0_51, %c0_52] : memref<9x128x128xbf16, #tpu.memory_space<vmem>>, vector<1x128x128xbf16>
    %44 = vector.shape_cast %43 : vector<1x128x128xbf16> to vector<128x128xbf16>
    %cst_53 = arith.constant dense<0.000000e+00> : vector<72x128xf32>
    %45 = tpu.matmul %42, %44, %cst_53 {dimension_numbers = #tpu.dot_dimension_numbers<[1], [0], [0], [1], [0, 0, 1, 1], [], []>} : vector<72x128xbf16>, vector<128x128xbf16>, vector<72x128xf32> -> vector<72x128xf32>
    %46 = arith.addf %40, %45 : vector<72x128xf32>
    %c0_54 = arith.constant 0 : index
    %c0_55 = arith.constant 0 : index
    %c10 = arith.constant 10 : index
    %c0_56 = arith.constant 0 : index
    %47 = vector.load %arg1[%c0_54, %c0_55, %c10, %c0_56] : memref<1x4x88x128xbf16, #tpu.memory_space<vmem>>, vector<1x1x72x128xbf16>
    %48 = vector.shape_cast %47 : vector<1x1x72x128xbf16> to vector<72x128xbf16>
    %c8 = arith.constant 8 : index
    %c0_57 = arith.constant 0 : index
    %c0_58 = arith.constant 0 : index
    %49 = vector.load %arg2[%c8, %c0_57, %c0_58] : memref<9x128x128xbf16, #tpu.memory_space<vmem>>, vector<1x128x128xbf16>
    %50 = vector.shape_cast %49 : vector<1x128x128xbf16> to vector<128x128xbf16>
    %cst_59 = arith.constant dense<0.000000e+00> : vector<72x128xf32>
    %51 = tpu.matmul %48, %50, %cst_59 {dimension_numbers = #tpu.dot_dimension_numbers<[1], [0], [0], [1], [0, 0, 1, 1], [], []>} : vector<72x128xbf16>, vector<128x128xbf16>, vector<72x128xf32> -> vector<72x128xf32>
    %52 = arith.addf %46, %51 : vector<72x128xf32>
    %c0_60 = arith.constant 0 : index
    %c0_61 = arith.constant 0 : index
    %53 = vector.load %arg3[%c0_60, %c0_61] : memref<1x128xf32, #tpu.memory_space<vmem>>, vector<1x128xf32>
    %54 = vector.broadcast %53 : vector<1x128xf32> to vector<72x128xf32>
    %55 = arith.addf %52, %54 : vector<72x128xf32>
    %c0_62 = arith.constant 0 : index
    %c0_63 = arith.constant 0 : index
    %c0_64 = arith.constant 0 : index
    %56 = vector.load %arg4[%c0_62, %c0_63, %c0_64] : memref<1x72x128xf32, #tpu.memory_space<vmem>>, vector<1x72x128xf32>
    %57 = vector.shape_cast %56 : vector<1x72x128xf32> to vector<72x128xf32>
    %58 = vector.shape_cast %55 : vector<72x128xf32> to vector<1x72x128xf32>
    tpu.vector_store %arg4[%c0_62, %c0_63, %c0_64], %58 {strides = array<i32>} : memref<1x72x128xf32, #tpu.memory_space<vmem>>, vector<1x72x128xf32>,
    return
  }
  func.func @transform_0(%arg0: i32) -> (i32, i32, i32, i32) {
    %c0_i32 = arith.constant 0 : i32
    %c0_i32_0 = arith.constant 0 : i32
    %c0_i32_1 = arith.constant 0 : i32
    %c0_i32_2 = arith.constant 0 : i32
    return %arg0, %c0_i32, %c0_i32_0, %c0_i32_1 : i32, i32, i32, i32
  }
  func.func @transform_1(%arg0: i32) -> (i32, i32, i32) {
    %c0_i32 = arith.constant 0 : i32
    %c0_i32_0 = arith.constant 0 : i32
    %c0_i32_1 = arith.constant 0 : i32
    %c0_i32_2 = arith.constant 0 : i32
    return %c0_i32, %c0_i32_0, %c0_i32_1 : i32, i32, i32
  }
  func.func @transform_2(%arg0: i32) -> (i32, i32) {
    %c0_i32 = arith.constant 0 : i32
    %c0_i32_0 = arith.constant 0 : i32
    %c0_i32_1 = arith.constant 0 : i32
    return %c0_i32, %c0_i32_0 : i32, i32
  }
  func.func @transform_3(%arg0: i32) -> (i32, i32, i32) {
    %c0_i32 = arith.constant 0 : i32
    %c0_i32_0 = arith.constant 0 : i32
    %c0_i32_1 = arith.constant 0 : i32
    return %arg0, %c0_i32, %c0_i32_0 : i32, i32, i32
  }
}

module attributes {stable_mosaic.version = 11 : i64} {
  func.func @kernel(%arg0: i32, %arg1: memref<1x4x88x128xbf16, #tpu.memory_space<vmem>>, %arg2: memref<9x128x128xbf16, #tpu.memory_space<vmem>>, %arg3: memref<1x128xf32, #tpu.memory_space<vmem>>, %arg4: memref<1x72x128xf32, #tpu.memory_space<vmem>>) attributes {dimension_semantics = [#tpu.dimension_semantics<parallel>], iteration_bounds = array<i64: 2>, scalar_prefetch = 0 : i64, scratch_operands = 0 : i64, tpu.core_type = #tpu.core_type<tc>, window_params = [{transform_indices = @transform_0, window_bounds = array<i64: 1, 4, 88, 128>}, {pipeline_mode = #tpu.pipeline_mode<synchronous>, transform_indices = @transform_1, window_bounds = array<i64: 9, 128, 128>}, {pipeline_mode = #tpu.pipeline_mode<synchronous>, transform_indices = @transform_2, window_bounds = array<i64: 1, 128>}, {transform_indices = @transform_3, window_bounds = array<i64: 1, 72, 128>}]} {
    %c0 = arith.constant 0 : index
    %c0_0 = arith.constant 0 : index
    %c0_1 = arith.constant 0 : index
    %c0_2 = arith.constant 0 : index
    %0 = vector.load %arg1[%c0, %c0_0, %c0_1, %c0_2] : memref<1x4x88x128xbf16, #tpu.memory_space<vmem>>, vector<1x1x72x128xbf16>
    %1 = vector.shape_cast %0 : vector<1x1x72x128xbf16> to vector<72x128xbf16>
    %c0_3 = arith.constant 0 : index
    %c0_4 = arith.constant 0 : index
    %c0_5 = arith.constant 0 : index
    %2 = vector.load %arg2[%c0_3, %c0_4, %c0_5] : memref<9x128x128xbf16, #tpu.memory_space<vmem>>, vector<1x128x128xbf16>
    %3 = vector.shape_cast %2 : vector<1x128x128xbf16> to vector<128x128xbf16>
    %cst = arith.constant dense<0.000000e+00> : vector<72x128xf32>
    %4 = tpu.matmul %1, %3, %cst {dimension_numbers = #tpu.dot_dimension_numbers<[1], [0], [0], [1], [0, 0, 1, 1], [], []>} : vector<72x128xbf16>, vector<128x128xbf16>, vector<72x128xf32> -> vector<72x128xf32>
    %c0_6 = arith.constant 0 : index
    %c1 = arith.constant 1 : index
    %c0_7 = arith.constant 0 : index
    %c0_8 = arith.constant 0 : index
    %5 = vector.load %arg1[%c0_6, %c1, %c0_7, %c0_8] : memref<1x4x88x128xbf16, #tpu.memory_space<vmem>>, vector<1x1x72x128xbf16>
    %6 = vector.shape_cast %5 : vector<1x1x72x128xbf16> to vector<72x128xbf16>
    %c1_9 = arith.constant 1 : index
    %c0_10 = arith.constant 0 : index
    %c0_11 = arith.constant 0 : index
    %7 = vector.load %arg2[%c1_9, %c0_10, %c0_11] : memref<9x128x128xbf16, #tpu.memory_space<vmem>>, vector<1x128x128xbf16>
    %8 = vector.shape_cast %7 : vector<1x128x128xbf16> to vector<128x128xbf16>
    %cst_12 = arith.constant dense<0.000000e+00> : vector<72x128xf32>
    %9 = tpu.matmul %6, %8, %cst_12 {dimension_numbers = #tpu.dot_dimension_numbers<[1], [0], [0], [1], [0, 0, 1, 1], [], []>} : vector<72x128xbf16>, vector<128x128xbf16>, vector<72x128xf32> -> vector<72x128xf32>
    %10 = arith.addf %4, %9 : vector<72x128xf32>
    %c0_13 = arith.constant 0 : index
    %c0_14 = arith.constant 0 : index
    %c1_15 = arith.constant 1 : index
    %c0_16 = arith.constant 0 : index
    %11 = vector.load %arg1[%c0_13, %c0_14, %c1_15, %c0_16] : memref<1x4x88x128xbf16, #tpu.memory_space<vmem>>, vector<1x1x72x128xbf16>
    %12 = vector.shape_cast %11 : vector<1x1x72x128xbf16> to vector<72x128xbf16>
    %c2 = arith.constant 2 : index
    %c0_17 = arith.constant 0 : index
    %c0_18 = arith.constant 0 : index
    %13 = vector.load %arg2[%c2, %c0_17, %c0_18] : memref<9x128x128xbf16, #tpu.memory_space<vmem>>, vector<1x128x128xbf16>
    %14 = vector.shape_cast %13 : vector<1x128x128xbf16> to vector<128x128xbf16>
    %cst_19 = arith.constant dense<0.000000e+00> : vector<72x128xf32>
    %15 = tpu.matmul %12, %14, %cst_19 {dimension_numbers = #tpu.dot_dimension_numbers<[1], [0], [0], [1], [0, 0, 1, 1], [], []>} : vector<72x128xbf16>, vector<128x128xbf16>, vector<72x128xf32> -> vector<72x128xf32>
    %16 = arith.addf %10, %15 : vector<72x128xf32>
    %c0_20 = arith.constant 0 : index
    %c2_21 = arith.constant 2 : index
    %c0_22 = arith.constant 0 : index
    %c0_23 = arith.constant 0 : index
    %17 = vector.load %arg1[%c0_20, %c2_21, %c0_22, %c0_23] : memref<1x4x88x128xbf16, #tpu.memory_space<vmem>>, vector<1x1x72x128xbf16>
    %18 = vector.shape_cast %17 : vector<1x1x72x128xbf16> to vector<72x128xbf16>
    %c3 = arith.constant 3 : index
    %c0_24 = arith.constant 0 : index
    %c0_25 = arith.constant 0 : index
    %19 = vector.load %arg2[%c3, %c0_24, %c0_25] : memref<9x128x128xbf16, #tpu.memory_space<vmem>>, vector<1x128x128xbf16>
    %20 = vector.shape_cast %19 : vector<1x128x128xbf16> to vector<128x128xbf16>
    %cst_26 = arith.constant dense<0.000000e+00> : vector<72x128xf32>
    %21 = tpu.matmul %18, %20, %cst_26 {dimension_numbers = #tpu.dot_dimension_numbers<[1], [0], [0], [1], [0, 0, 1, 1], [], []>} : vector<72x128xbf16>, vector<128x128xbf16>, vector<72x128xf32> -> vector<72x128xf32>
    %22 = arith.addf %16, %21 : vector<72x128xf32>
    %c0_27 = arith.constant 0 : index
    %c3_28 = arith.constant 3 : index
    %c0_29 = arith.constant 0 : index
    %c0_30 = arith.constant 0 : index
    %23 = vector.load %arg1[%c0_27, %c3_28, %c0_29, %c0_30] : memref<1x4x88x128xbf16, #tpu.memory_space<vmem>>, vector<1x1x72x128xbf16>
    %24 = vector.shape_cast %23 : vector<1x1x72x128xbf16> to vector<72x128xbf16>
    %c4 = arith.constant 4 : index
    %c0_31 = arith.constant 0 : index
    %c0_32 = arith.constant 0 : index
    %25 = vector.load %arg2[%c4, %c0_31, %c0_32] : memref<9x128x128xbf16, #tpu.memory_space<vmem>>, vector<1x128x128xbf16>
    %26 = vector.shape_cast %25 : vector<1x128x128xbf16> to vector<128x128xbf16>
    %cst_33 = arith.constant dense<0.000000e+00> : vector<72x128xf32>
    %27 = tpu.matmul %24, %26, %cst_33 {dimension_numbers = #tpu.dot_dimension_numbers<[1], [0], [0], [1], [0, 0, 1, 1], [], []>} : vector<72x128xbf16>, vector<128x128xbf16>, vector<72x128xf32> -> vector<72x128xf32>
    %28 = arith.addf %22, %27 : vector<72x128xf32>
    %c0_34 = arith.constant 0 : index
    %c2_35 = arith.constant 2 : index
    %c1_36 = arith.constant 1 : index
    %c0_37 = arith.constant 0 : index
    %29 = vector.load %arg1[%c0_34, %c2_35, %c1_36, %c0_37] : memref<1x4x88x128xbf16, #tpu.memory_space<vmem>>, vector<1x1x72x128xbf16>
    %30 = vector.shape_cast %29 : vector<1x1x72x128xbf16> to vector<72x128xbf16>
    %c5 = arith.constant 5 : index
    %c0_38 = arith.constant 0 : index
    %c0_39 = arith.constant 0 : index
    %31 = vector.load %arg2[%c5, %c0_38, %c0_39] : memref<9x128x128xbf16, #tpu.memory_space<vmem>>, vector<1x128x128xbf16>
    %32 = vector.shape_cast %31 : vector<1x128x128xbf16> to vector<128x128xbf16>
    %cst_40 = arith.constant dense<0.000000e+00> : vector<72x128xf32>
    %33 = tpu.matmul %30, %32, %cst_40 {dimension_numbers = #tpu.dot_dimension_numbers<[1], [0], [0], [1], [0, 0, 1, 1], [], []>} : vector<72x128xbf16>, vector<128x128xbf16>, vector<72x128xf32> -> vector<72x128xf32>
    %34 = arith.addf %28, %33 : vector<72x128xf32>
    %c0_41 = arith.constant 0 : index
    %c0_42 = arith.constant 0 : index
    %c9 = arith.constant 9 : index
    %c0_43 = arith.constant 0 : index
    %35 = vector.load %arg1[%c0_41, %c0_42, %c9, %c0_43] : memref<1x4x88x128xbf16, #tpu.memory_space<vmem>>, vector<1x1x72x128xbf16>
    %36 = vector.shape_cast %35 : vector<1x1x72x128xbf16> to vector<72x128xbf16>
    %c6 = arith.constant 6 : index
    %c0_44 = arith.constant 0 : index
    %c0_45 = arith.constant 0 : index
    %37 = vector.load %arg2[%c6, %c0_44, %c0_45] : memref<9x128x128xbf16, #tpu.memory_space<vmem>>, vector<1x128x128xbf16>
    %38 = vector.shape_cast %37 : vector<1x128x128xbf16> to vector<128x128xbf16>
    %cst_46 = arith.constant dense<0.000000e+00> : vector<72x128xf32>
    %39 = tpu.matmul %36, %38, %cst_46 {dimension_numbers = #tpu.dot_dimension_numbers<[1], [0], [0], [1], [0, 0, 1, 1], [], []>} : vector<72x128xbf16>, vector<128x128xbf16>, vector<72x128xf32> -> vector<72x128xf32>
    %40 = arith.addf %34, %39 : vector<72x128xf32>
    %c0_47 = arith.constant 0 : index
    %c1_48 = arith.constant 1 : index
    %c9_49 = arith.constant 9 : index
    %c0_50 = arith.constant 0 : index
    %41 = vector.load %arg1[%c0_47, %c1_48, %c9_49, %c0_50] : memref<1x4x88x128xbf16, #tpu.memory_space<vmem>>, vector<1x1x72x128xbf16>
    %42 = vector.shape_cast %41 : vector<1x1x72x128xbf16> to vector<72x128xbf16>
    %c7 = arith.constant 7 : index
    %c0_51 = arith.constant 0 : index
    %c0_52 = arith.constant 0 : index
    %43 = vector.load %arg2[%c7, %c0_51, %c0_52] : memref<9x128x128xbf16, #tpu.memory_space<vmem>>, vector<1x128x128xbf16>
    %44 = vector.shape_cast %43 : vector<1x128x128xbf16> to vector<128x128xbf16>
    %cst_53 = arith.constant dense<0.000000e+00> : vector<72x128xf32>
    %45 = tpu.matmul %42, %44, %cst_53 {dimension_numbers = #tpu.dot_dimension_numbers<[1], [0], [0], [1], [0, 0, 1, 1], [], []>} : vector<72x128xbf16>, vector<128x128xbf16>, vector<72x128xf32> -> vector<72x128xf32>
    %46 = arith.addf %40, %45 : vector<72x128xf32>
    %c0_54 = arith.constant 0 : index
    %c0_55 = arith.constant 0 : index
    %c10 = arith.constant 10 : index
    %c0_56 = arith.constant 0 : index
    %47 = vector.load %arg1[%c0_54, %c0_55, %c10, %c0_56] : memref<1x4x88x128xbf16, #tpu.memory_space<vmem>>, vector<1x1x72x128xbf16>
    %48 = vector.shape_cast %47 : vector<1x1x72x128xbf16> to vector<72x128xbf16>
    %c8 = arith.constant 8 : index
    %c0_57 = arith.constant 0 : index
    %c0_58 = arith.constant 0 : index
    %49 = vector.load %arg2[%c8, %c0_57, %c0_58] : memref<9x128x128xbf16, #tpu.memory_space<vmem>>, vector<1x128x128xbf16>
    %50 = vector.shape_cast %49 : vector<1x128x128xbf16> to vector<128x128xbf16>
    %cst_59 = arith.constant dense<0.000000e+00> : vector<72x128xf32>
    %51 = tpu.matmul %48, %50, %cst_59 {dimension_numbers = #tpu.dot_dimension_numbers<[1], [0], [0], [1], [0, 0, 1, 1], [], []>} : vector<72x128xbf16>, vector<128x128xbf16>, vector<72x128xf32> -> vector<72x128xf32>
    %52 = arith.addf %46, %51 : vector<72x128xf32>
    %c0_60 = arith.constant 0 : index
    %c0_61 = arith.constant 0 : index
    %53 = vector.load %arg3[%c0_60, %c0_61] : memref<1x128xf32, #tpu.memory_space<vmem>>, vector<1x128xf32>
    %54 = vector.broadcast %53 : vector<1x128xf32> to vector<72x128xf32>
    %55 = arith.addf %52, %54 : vector<72x128xf32>
    %c0_62 = arith.constant 0 : index
    %c0_63 = arith.constant 0 : index
    %c0_64 = arith.constant 0 : index
    %56 = vector.load %arg4[%c0_62, %c0_63, %c0_64] : memref<1x72x128xf32, #tpu.memory_space<vmem>>, vector<1x72x128xf32>
    %57 = vector.shape_cast %56 : vector<1x72x128xf32> to vector<72x128xf32>
    %58 = vector.shape_cast %55 : vector<72x128xf32> to vector<1x72x128xf32>
    tpu.vector_store %arg4[%c0_62, %c0_63, %c0_64], %58 {strides = array<i32>} : memref<1x72x128xf32, #tpu.memory_space<vmem>>, vector<1x72x128xf32>,
    return
  }
  func.func @transform_0(%arg0: i32) -> (i32, i32, i32, i32) {
    %c0_i32 = arith.constant 0 : i32
    %c0_i32_0 = arith.constant 0 : i32
    %c0_i32_1 = arith.constant 0 : i32
    %c0_i32_2 = arith.constant 0 : i32
    return %arg0, %c0_i32, %c0_i32_0, %c0_i32_1 : i32, i32, i32, i32
  }
  func.func @transform_1(%arg0: i32) -> (i32, i32, i32) {
    %c0_i32 = arith.constant 0 : i32
    %c0_i32_0 = arith.constant 0 : i32
    %c0_i32_1 = arith.constant 0 : i32
    %c0_i32_2 = arith.constant 0 : i32
    return %c0_i32, %c0_i32_0, %c0_i32_1 : i32, i32, i32
  }
  func.func @transform_2(%arg0: i32) -> (i32, i32) {
    %c0_i32 = arith.constant 0 : i32
    %c0_i32_0 = arith.constant 0 : i32
    %c0_i32_1 = arith.constant 0 : i32
    return %c0_i32, %c0_i32_0 : i32, i32
  }
  func.func @transform_3(%arg0: i32) -> (i32, i32, i32) {
    %c0_i32 = arith.constant 0 : i32
    %c0_i32_0 = arith.constant 0 : i32
    %c0_i32_1 = arith.constant 0 : i32
    return %arg0, %c0_i32, %c0_i32_0 : i32, i32, i32
  }
}

</mosaic_0001>

<llo_original>
// kernel: _downsample_conv_impl.2
$region0: #{_downsample_conv_impl.2}
  #allocation0 [shape = 'u32[]', space=smem, size = 0x4, offset = 0x4, fixed_abs, tag = 'smem constant byte address 0x4 - core index']
  #allocation1 [shape = 'u32[72,128]{1,0:T(1,128)}', space=vmem, size = 0x9000, scoped, tag = 'internal scratch']
  #allocation2 [shape = 'u32[2048]{0}', space=vmem, size = 0x2000, scoped, tag = 'scoped memory for _downsample_conv_impl.2']
  #allocation3 [shape = 'u32[2048]{0}', space=vmem, size = 0x2000, scoped, tag = 'scoped memory for _downsample_conv_impl.2']
  #allocation4 [shape = 'u32[2048]{0}', space=vmem, size = 0x2000, scoped, tag = 'scoped memory for _downsample_conv_impl.2']
  #allocation5 [shape = 'u32[2048]{0}', space=vmem, size = 0x2000, scoped, tag = 'scoped memory for _downsample_conv_impl.2']
  #allocation6 [shape = 'u32[2048]{0}', space=vmem, size = 0x2000, scoped, tag = 'scoped memory for _downsample_conv_impl.2']
  %s0 = inlined_call_operand.vmem [shape: bf16[9,128,128], index: 0, kind: input, shape index: {}]
  %s1 = inlined_call_operand.vmem [shape: bf16[2,4,81,128], index: 1, kind: input, shape index: {}]
  %s2 = inlined_call_operand.<no memory space> [shape: bf16[], index: 2, kind: input, shape index: {}]
  %s3 = inlined_call_operand.vmem [shape: f32[128], index: 3, kind: input, shape index: {}]
  %s4 = inlined_call_operand.vmem [shape: f32[2,72,128], index: 4, kind: output, shape index: {}]
  %s5 = sld [smem:[#allocation0]]
  $region45: #{_downsample_conv_impl.2} parent=0
    _
  %s7 = ssub.s32 1, %s5
  %s8 = scalar_select 0, %s7, %s5
  %v9 = vstv %s2
  %v10 = vunpack.i.l.bf16 %v9
  %v12 = vunpack.i.h.bf16 %v9
  loop: start=0, step=1, limit=4
  $region2: #{_downsample_conv_impl.2} parent=0 // loop_pre_header
    _
  $region3: #{_downsample_conv_impl.2} parent=0 // loop_header
    %s15 = sphi 0, %s19
    %p16 = scmp.ge.s32.totalorder %s15, 4
    %s25 = sphi 0, %s27
    %s28 = sphi 0, %s25
    %s29 = sphi 0, %s28
    %s45 = sphi 0, %s29
    %s49 = sphi 0, %s49
    %s51 = sphi 0, %s49
    %s52 = sphi 0, %s51
    %s66 = sphi 0, %s52
    %s70 = sphi 0, %s70
    %s72 = sphi 0, %s70
    %s73 = sphi 0, %s72
    %s87 = sphi 0, %s73
    %s93 = sphi 0, %s95
    %s96 = sphi 0, %s93
    %s97 = sphi 0, %s96
    %s113 = sphi 0, %s97
  $region4: #{_downsample_conv_impl.2} parent=0 // loop_header_branch
    %18 = sbr.rel (%p16) target = $region8
  $region5: #{_downsample_conv_impl.2} parent=0 // loop_body
    %s20 = ssub.s32 %s15, 1
    %s21 = ssub.s32 %s15, 2
    %s22 = sadd.s32 %s15, 1
    %s23 = ssub.s32 %s15, %s22
    %p24 = scmp.eq.s32.totalorder %s23, 0
    %s26 = sadd.s32 %s25, 1
    %s27 = scalar_select %p24, %s25, %s26
    %p30 = pneg %p24
    %p31 = scmp.eq.s32.totalorder %s15, 1
    %p32 = por %p30, %p31
    %p33 = scmp.ne.s32.totalorder %s25, %s28
    %p34 = scmp.eq.s32.totalorder %s15, 0
    %p35 = por %p33, %p34
    %p36 = scmp.ne.s32.totalorder %s25, %s28
    %p37 = scmp.eq.s32.totalorder %s20, 1
    %p38 = por %p36, %p37
    %p39 = scmp.ne.s32.totalorder %s28, %s29
    %p40 = scmp.eq.s32.totalorder %s20, 0
    %p41 = por %p39, %p40
    %p42 = scmp.ne.s32.totalorder %s28, %s29
    %p43 = scmp.eq.s32.totalorder %s21, 1
    %p44 = por %p42, %p43
    %p46 = scmp.ne.s32.totalorder %s29, %s45
    %p47 = scmp.eq.s32.totalorder %s21, 0
    %p48 = por %p46, %p47
    %s50 = sadd.s32 %s49, 1
    %p53 = scmp.eq.s32.totalorder %s15, 1
    %p54 = scmp.ne.s32.totalorder %s49, %s51
    %p55 = scmp.eq.s32.totalorder %s15, 0
    %p56 = por %p54, %p55
    %p57 = scmp.ne.s32.totalorder %s49, %s51
    %p58 = scmp.eq.s32.totalorder %s20, 1
    %p59 = por %p57, %p58
    %p60 = scmp.ne.s32.totalorder %s51, %s52
    %p61 = scmp.eq.s32.totalorder %s20, 0
    %p62 = por %p60, %p61
    %p63 = scmp.ne.s32.totalorder %s51, %s52
    %p64 = scmp.eq.s32.totalorder %s21, 1
    %p65 = por %p63, %p64
    %p67 = scmp.ne.s32.totalorder %s52, %s66
    %p68 = scmp.eq.s32.totalorder %s21, 0
    %p69 = por %p67, %p68
    %s71 = sadd.s32 %s70, 1
    %p74 = scmp.eq.s32.totalorder %s15, 1
    %p75 = scmp.ne.s32.totalorder %s70, %s72
    %p76 = scmp.eq.s32.totalorder %s15, 0
    %p77 = por %p75, %p76
    %p78 = scmp.ne.s32.totalorder %s70, %s72
    %p79 = scmp.eq.s32.totalorder %s20, 1
    %p80 = por %p78, %p79
    %p81 = scmp.ne.s32.totalorder %s72, %s73
    %p82 = scmp.eq.s32.totalorder %s20, 0
    %p83 = por %p81, %p82
    %p84 = scmp.ne.s32.totalorder %s72, %s73
    %p85 = scmp.eq.s32.totalorder %s21, 1
    %p86 = por %p84, %p85
    %p88 = scmp.ne.s32.totalorder %s73, %s87
    %p89 = scmp.eq.s32.totalorder %s21, 0
    %p90 = por %p88, %p89
    %s91 = ssub.s32 %s15, %s22
    %p92 = scmp.eq.s32.totalorder %s91, 0
    %s94 = sadd.s32 %s93, 1
    %s95 = scalar_select %p92, %s93, %s94
    %p98 = pneg %p92
    %p99 = scmp.eq.s32.totalorder %s15, 1
    %p100 = por %p98, %p99
    %p101 = scmp.ne.s32.totalorder %s93, %s96
    %p102 = scmp.eq.s32.totalorder %s15, 0
    %p103 = por %p101, %p102
    %p104 = scmp.ne.s32.totalorder %s93, %s96
    %p105 = scmp.eq.s32.totalorder %s20, 1
    %p106 = por %p104, %p105
    %p107 = scmp.ne.s32.totalorder %s96, %s97
    %p108 = scmp.eq.s32.totalorder %s20, 0
    %p109 = por %p107, %p108
    %p110 = scmp.ne.s32.totalorder %s96, %s97
    %p111 = scmp.eq.s32.totalorder %s21, 1
    %p112 = por %p110, %p111
    %p114 = scmp.ne.s32.totalorder %s97, %s113
    %p115 = scmp.eq.s32.totalorder %s21, 0
    %p116 = por %p114, %p115
    %p117 = scmp.le.s32.totalorder 1, %s15
    %p118 = scmp.lt.s32.totalorder %s15, 3
    %p119 = pnand %p117, %p118
    %p120 = pneg %p119
    // Predicated region
    $region9: #{_downsample_conv_impl.2} parent=5 // pred_check
      _
    $region10: #{_downsample_conv_impl.2} parent=5 // pred_check_branch
      %122 = sbr.rel (%p119) target = $region12
    $region11: #{_downsample_conv_impl.2} parent=5 // pred_region
      %s123 = ssub.s32 %s15, 1
      // Predicated region
      $region13: #{_downsample_conv_impl.2} parent=11 // pred_check
        %p124 = pneg %p62
      $region14: #{_downsample_conv_impl.2} parent=11 // pred_check_branch
        %126 = sbr.rel (%p124) target = $region16
      $region15: #{_downsample_conv_impl.2} parent=11 // pred_region
        _
      $region16: #{_downsample_conv_impl.2} parent=11 // pred_fallthru
        _
      // Predicated region
      $region17: #{_downsample_conv_impl.2} parent=11 // pred_check
        %p127 = pneg %p83
      $region18: #{_downsample_conv_impl.2} parent=11 // pred_check_branch
        %129 = sbr.rel (%p127) target = $region20
      $region19: #{_downsample_conv_impl.2} parent=11 // pred_region
        _
      $region20: #{_downsample_conv_impl.2} parent=11 // pred_fallthru
        _
    $region12: #{_downsample_conv_impl.2} parent=5 // pred_fallthru
      _
    %p130 = scmp.lt.s32.totalorder %s15, 2
    // Predicated region
    $region21: #{_downsample_conv_impl.2} parent=5 // pred_check
      %p131 = pneg %p130
    $region22: #{_downsample_conv_impl.2} parent=5 // pred_check_branch
      %133 = sbr.rel (%p131) target = $region24
    $region23: #{_downsample_conv_impl.2} parent=5 // pred_region
      // Predicated region
      $region25: #{_downsample_conv_impl.2} parent=23 // pred_check
        %p134 = pneg %p35
      $region26: #{_downsample_conv_impl.2} parent=23 // pred_check_branch
        %136 = sbr.rel (%p134) target = $region28
      $region27: #{_downsample_conv_impl.2} parent=23 // pred_region
        %p137 = scmp.lt.s32.totalorder %s15, 1
        %s138 = scalar_select %p137, %s15, 1
        %s139 = smul.addr %s138, 44
        %s140 = smul.addr %s139, 4
        %s141 = scalar_lea.vmem %s1, %s140
      $region28: #{_downsample_conv_impl.2} parent=23 // pred_fallthru
        _
    $region24: #{_downsample_conv_impl.2} parent=5 // pred_fallthru
      _
    %p142 = scmp.le.s32.totalorder 1, %s15
    %p143 = scmp.lt.s32.totalorder %s15, 3
    %p144 = pnand %p142, %p143
    %p145 = pneg %p144
    // Predicated region
    $region29: #{_downsample_conv_impl.2} parent=5 // pred_check
      _
    $region30: #{_downsample_conv_impl.2} parent=5 // pred_check_branch
      %147 = sbr.rel (%p144) target = $region32
    $region31: #{_downsample_conv_impl.2} parent=5 // pred_region
      #allocation7 [shape = 'u8[90112]{0}', space=vmem, size = 0x16000, dematerialized = true, scoped, tag = 'FusionAdapter Buffer %fusion.1 = bf16[2,4,88,128]{3,2,1,0:T(8,128)(2,1)} fusion(%param_1.3, %param_2.2), kind=kLoop, calls=%fused_computation.2.clone, metadata={op_name="jit(_downsample_conv_impl)/jit(_pad)/pad" stack_frame_id=12}']
      #allocation8 [shape = 'u8[512]{0}', space=vmem, size = 0x400, dematerialized = true, scoped, tag = 'FusionAdapter Buffer %fusion.2 = f32[1,128]{1,0:T(1,128)} fusion(%param_3.1), kind=kLoop, calls=%fused_computation.5.clone, metadata={op_name="jit(_downsample_conv_impl)/reshape" stack_frame_id=14}']
      %s148 = ssub.s32 %s15, 1
      %p149 = scmp.lt.s32.totalorder %s20, 1
      %s150 = scalar_select %p149, %s20, 1
      %s151 = smul.addr %s150, 44
      %s152 = smul.addr %s151, 4
      %s153 = scalar_lea.vmem %s1, %s152
      %p154 = pneg %p41
      %p155 = pneg %p38
      %p156 = pneg %p62
      %p157 = pneg %p59
      %p158 = pneg %p83
      %p159 = pneg %p80
      %p160 = pneg %p109
      %p161 = pneg %p106
      %p162 = scmp.lt.s32.totalorder %s20, 1
      %s163 = scalar_select %p162, %s20, 1
      %s164 = smul.addr %s163, 9
      %s165 = smul.addr %s164, 8
      %s166 = scalar_lea.vmem %s4, %s165
      %p167 = scmp.lt.s32.totalorder %s20, 1
      %s168 = scalar_select %p167, %s20, 1
      %s169 = smul.addr %s168, 44
      %s170 = smul.addr %s169, 4
      %s171 = scalar_lea.vmem %s1, %s170
      %p172 = scmp.lt.s32.totalorder %s20, 1
      %s173 = scalar_select %p172, %s20, 1
      %s174 = smul.addr %s173, 9
      %s175 = smul.addr %s174, 8
      %s176 = scalar_lea.vmem %s4, %s175
      %v177 = vld [vmem:[%s171] sm:$0xf]
      %v178 = vunpack.c.l.bf16 %v177
      %v179 = vunpack.c.h.bf16 %v177
      %v180 = vlaneseq
      %v181 = vshrl.u32 %v180, 7
      %vm183 = vcmp.lt.s32.totalorder %v181, 81
      %v184 = vsel %vm183, %v178, %v10
      %v185 = vpack.c.bf16 0.0, %v184
      %s187 = ssub.s32 16, 1
      %188 = vst [vmem:[#allocation7] sm:%s187] %v185
      %s189 = scalar_lea.vmem %s171, 4
      %v190 = vld [vmem:[%s189] sm:$0xf]
      %v191 = vunpack.c.l.bf16 %v190
      %v192 = vunpack.c.h.bf16 %v190
      %v193 = vlaneseq
      %v194 = vshrl.u32 %v193, 7
      %v195 = vadd.s32 %v194, 8
      %vm196 = vcmp.lt.s32.totalorder %v195, 81
      %v197 = vsel %vm196, %v191, %v10
      %s198 = scalar_lea.vmem [#allocation7], 4
      %v199 = vpack.c.bf16 0.0, %v197
      %s201 = ssub.s32 16, 1
      %202 = vst [vmem:[%s198] sm:%s201] %v199
      %s203 = scalar_lea.vmem %s171, 8
      %v204 = vld [vmem:[%s203] sm:$0xf]
      %v205 = vunpack.c.l.bf16 %v204
      %v206 = vunpack.c.h.bf16 %v204
      %v207 = vlaneseq
      %v208 = vshrl.u32 %v207, 7
      %v209 = vadd.s32 %v208, 16
      %vm210 = vcmp.lt.s32.totalorder %v209, 81
      %v211 = vsel %vm210, %v205, %v10
      %s212 = scalar_lea.vmem [#allocation7], 8
      %v213 = vpack.c.bf16 0.0, %v211
      %s215 = ssub.s32 16, 1
      %216 = vst [vmem:[%s212] sm:%s215] %v213
      %s217 = scalar_lea.vmem %s171, 12
      %v218 = vld [vmem:[%s217] sm:$0xf]
      %v219 = vunpack.c.l.bf16 %v218
      %v220 = vunpack.c.h.bf16 %v218
      %v221 = vlaneseq
      %v222 = vshrl.u32 %v221, 7
      %v223 = vadd.s32 %v222, 24
      %vm224 = vcmp.lt.s32.totalorder %v223, 81
      %v225 = vsel %vm224, %v219, %v10
      %s226 = scalar_lea.vmem [#allocation7], 12
      %v227 = vpack.c.bf16 0.0, %v225
      %s229 = ssub.s32 16, 1
      %230 = vst [vmem:[%s226] sm:%s229] %v227
      %s231 = scalar_lea.vmem %s171, 16
      %v232 = vld [vmem:[%s231] sm:$0xf]
      %v233 = vunpack.c.l.bf16 %v232
      %v234 = vunpack.c.h.bf16 %v232
      %v235 = vlaneseq
      %v236 = vshrl.u32 %v235, 7
      %v237 = vadd.s32 %v236, 32
      %vm238 = vcmp.lt.s32.totalorder %v237, 81
      %v239 = vsel %vm238, %v233, %v10
      %s240 = scalar_lea.vmem [#allocation7], 16
      %v241 = vpack.c.bf16 0.0, %v239
      %s243 = ssub.s32 16, 1
      %244 = vst [vmem:[%s240] sm:%s243] %v241
      %s245 = scalar_lea.vmem %s171, 20
      %v246 = vld [vmem:[%s245] sm:$0xf]
      %v247 = vunpack.c.l.bf16 %v246
      %v248 = vunpack.c.h.bf16 %v246
      %v249 = vlaneseq
      %v250 = vshrl.u32 %v249, 7
      %v251 = vadd.s32 %v250, 40
      %vm252 = vcmp.lt.s32.totalorder %v251, 81
      %v253 = vsel %vm252, %v247, %v10
      %s254 = scalar_lea.vmem [#allocation7], 20
      %v255 = vpack.c.bf16 0.0, %v253
      %s257 = ssub.s32 16, 1
      %258 = vst [vmem:[%s254] sm:%s257] %v255
      %s259 = scalar_lea.vmem %s171, 24
      %v260 = vld [vmem:[%s259] sm:$0xf]
      %v261 = vunpack.c.l.bf16 %v260
      %v262 = vunpack.c.h.bf16 %v260
      %v263 = vlaneseq
      %v264 = vshrl.u32 %v263, 7
      %v265 = vadd.s32 %v264, 48
      %vm266 = vcmp.lt.s32.totalorder %v265, 81
      %v267 = vsel %vm266, %v261, %v10
      %s268 = scalar_lea.vmem [#allocation7], 24
      %v269 = vpack.c.bf16 0.0, %v267
      %s271 = ssub.s32 16, 1
      %272 = vst [vmem:[%s268] sm:%s271] %v269
      %s273 = scalar_lea.vmem %s171, 28
      %v274 = vld [vmem:[%s273] sm:$0xf]
      %v275 = vunpack.c.l.bf16 %v274
      %v276 = vunpack.c.h.bf16 %v274
      %v277 = vlaneseq
      %v278 = vshrl.u32 %v277, 7
      %v279 = vadd.s32 %v278, 56
      %vm280 = vcmp.lt.s32.totalorder %v279, 81
      %v281 = vsel %vm280, %v275, %v10
      %s282 = scalar_lea.vmem [#allocation7], 28
      %v283 = vpack.c.bf16 0.0, %v281
      %s285 = ssub.s32 16, 1
      %286 = vst [vmem:[%s282] sm:%s285] %v283
      %s287 = scalar_lea.vmem %s171, 32
      %v288 = vld [vmem:[%s287] sm:$0xf]
      %v289 = vunpack.c.l.bf16 %v288
      %v290 = vunpack.c.h.bf16 %v288
      %v291 = vlaneseq
      %v292 = vshrl.u32 %v291, 7
      %v293 = vadd.s32 %v292, 64
      %vm294 = vcmp.lt.s32.totalorder %v293, 81
      %v295 = vsel %vm294, %v289, %v10
      %s296 = scalar_lea.vmem [#allocation7], 32
      %v297 = vpack.c.bf16 0.0, %v295
      %s299 = ssub.s32 16, 1
      %300 = vst [vmem:[%s296] sm:%s299] %v297
      %s301 = scalar_lea.vmem %s171, 36
      %v302 = vld [vmem:[%s301] sm:$0xf]
      %v303 = vunpack.c.l.bf16 %v302
      %v304 = vunpack.c.h.bf16 %v302
      %v305 = vlaneseq
      %v306 = vshrl.u32 %v305, 7
      %v307 = vadd.s32 %v306, 72
      %vm308 = vcmp.lt.s32.totalorder %v307, 81
      %v309 = vsel %vm308, %v303, %v10
      %s310 = scalar_lea.vmem [#allocation7], 36
      %v311 = vpack.c.bf16 0.0, %v309
      %s313 = ssub.s32 16, 1
      %314 = vst [vmem:[%s310] sm:%s313] %v311
      %s315 = scalar_lea.vmem %s171, 40
      %s317 = sor.u32 255, 127
      %s318 = sand.u32 %s317, 85
      %s319 = sshrl.u32 %s318, 1
      %s320 = sor.u32 %s318, %s319
      %s321 = sand.u32 51, %s320
      %s322 = sshrl.u32 %s321, 2
      %s323 = sor.u32 %s321, %s322
      %s324 = sand.u32 15, %s323
      %v325 = vld [vmem:[%s315] sm:%s324]
      %v326 = vunpack.c.l.bf16 %v325
      %v327 = vunpack.c.h.bf16 %v325
      %v328 = vlaneseq
      %v329 = vshrl.u32 %v328, 7
      %v330 = vadd.s32 %v329, 80
      %vm331 = vcmp.lt.s32.totalorder %v330, 81
      %v332 = vsel %vm331, %v326, %v10
      %s333 = scalar_lea.vmem [#allocation7], 40
      %v334 = vpack.c.bf16 0.0, %v332
      %s336 = ssub.s32 16, 1
      %337 = vst [vmem:[%s333] sm:%s336] %v334
      %s338 = scalar_lea.vmem %s171, 44
      %v339 = vld [vmem:[%s338] sm:$0xf]
      %v340 = vunpack.c.l.bf16 %v339
      %v341 = vunpack.c.h.bf16 %v339
      %v342 = vlaneseq
      %v343 = vshrl.u32 %v342, 7
      %vm345 = vcmp.lt.s32.totalorder %v343, 81
      %v346 = vsel %vm345, %v340, %v10
      %s347 = scalar_lea.vmem [#allocation7], 44
      %v348 = vpack.c.bf16 0.0, %v346
      %s350 = ssub.s32 16, 1
      %351 = vst [vmem:[%s347] sm:%s350] %v348
      %s352 = scalar_lea.vmem %s171, 48
      %v353 = vld [vmem:[%s352] sm:$0xf]
      %v354 = vunpack.c.l.bf16 %v353
      %v355 = vunpack.c.h.bf16 %v353
      %v356 = vlaneseq
      %v357 = vshrl.u32 %v356, 7
      %v358 = vadd.s32 %v357, 8
      %vm359 = vcmp.lt.s32.totalorder %v358, 81
      %v360 = vsel %vm359, %v354, %v10
      %s361 = scalar_lea.vmem [#allocation7], 48
      %v362 = vpack.c.bf16 0.0, %v360
      %s364 = ssub.s32 16, 1
      %365 = vst [vmem:[%s361] sm:%s364] %v362
      %s366 = scalar_lea.vmem %s171, 52
      %v367 = vld [vmem:[%s366] sm:$0xf]
      %v368 = vunpack.c.l.bf16 %v367
      %v369 = vunpack.c.h.bf16 %v367
      %v370 = vlaneseq
      %v371 = vshrl.u32 %v370, 7
      %v372 = vadd.s32 %v371, 16
      %vm373 = vcmp.lt.s32.totalorder %v372, 81
      %v374 = vsel %vm373, %v368, %v10
      %s375 = scalar_lea.vmem [#allocation7], 52
      %v376 = vpack.c.bf16 0.0, %v374
      %s378 = ssub.s32 16, 1
      %379 = vst [vmem:[%s375] sm:%s378] %v376
      %s380 = scalar_lea.vmem %s171, 56
      %v381 = vld [vmem:[%s380] sm:$0xf]
      %v382 = vunpack.c.l.bf16 %v381
      %v383 = vunpack.c.h.bf16 %v381
      %v384 = vlaneseq
      %v385 = vshrl.u32 %v384, 7
      %v386 = vadd.s32 %v385, 24
      %vm387 = vcmp.lt.s32.totalorder %v386, 81
      %v388 = vsel %vm387, %v382, %v10
      %s389 = scalar_lea.vmem [#allocation7], 56
      %v390 = vpack.c.bf16 0.0, %v388
      %s392 = ssub.s32 16, 1
      %393 = vst [vmem:[%s389] sm:%s392] %v390
      %s394 = scalar_lea.vmem %s171, 60
      %v395 = vld [vmem:[%s394] sm:$0xf]
      %v396 = vunpack.c.l.bf16 %v395
      %v397 = vunpack.c.h.bf16 %v395
      %v398 = vlaneseq
      %v399 = vshrl.u32 %v398, 7
      %v400 = vadd.s32 %v399, 32
      %vm401 = vcmp.lt.s32.totalorder %v400, 81
      %v402 = vsel %vm401, %v396, %v10
      %s403 = scalar_lea.vmem [#allocation7], 60
      %v404 = vpack.c.bf16 0.0, %v402
      %s406 = ssub.s32 16, 1
      %407 = vst [vmem:[%s403] sm:%s406] %v404
      %s408 = scalar_lea.vmem %s171, 64
      %v409 = vld [vmem:[%s408] sm:$0xf]
      %v410 = vunpack.c.l.bf16 %v409
      %v411 = vunpack.c.h.bf16 %v409
      %v412 = vlaneseq
      %v413 = vshrl.u32 %v412, 7
      %v414 = vadd.s32 %v413, 40
      %vm415 = vcmp.lt.s32.totalorder %v414, 81
      %v416 = vsel %vm415, %v410, %v10
      %s417 = scalar_lea.vmem [#allocation7], 64
      %v418 = vpack.c.bf16 0.0, %v416
      %s420 = ssub.s32 16, 1
      %421 = vst [vmem:[%s417] sm:%s420] %v418
      %s422 = scalar_lea.vmem %s171, 68
      %v423 = vld [vmem:[%s422] sm:$0xf]
      %v424 = vunpack.c.l.bf16 %v423
      %v425 = vunpack.c.h.bf16 %v423
      %v426 = vlaneseq
      %v427 = vshrl.u32 %v426, 7
      %v428 = vadd.s32 %v427, 48
      %vm429 = vcmp.lt.s32.totalorder %v428, 81
      %v430 = vsel %vm429, %v424, %v10
      %s431 = scalar_lea.vmem [#allocation7], 68
      %v432 = vpack.c.bf16 0.0, %v430
      %s434 = ssub.s32 16, 1
      %435 = vst [vmem:[%s431] sm:%s434] %v432
      %s436 = scalar_lea.vmem %s171, 72
      %v437 = vld [vmem:[%s436] sm:$0xf]
      %v438 = vunpack.c.l.bf16 %v437
      %v439 = vunpack.c.h.bf16 %v437
      %v440 = vlaneseq
      %v441 = vshrl.u32 %v440, 7
      %v442 = vadd.s32 %v441, 56
      %vm443 = vcmp.lt.s32.totalorder %v442, 81
      %v444 = vsel %vm443, %v438, %v10
      %s445 = scalar_lea.vmem [#allocation7], 72
      %v446 = vpack.c.bf16 0.0, %v444
      %s448 = ssub.s32 16, 1
      %449 = vst [vmem:[%s445] sm:%s448] %v446
      %s450 = scalar_lea.vmem %s171, 76
      %v451 = vld [vmem:[%s450] sm:$0xf]
      %v452 = vunpack.c.l.bf16 %v451
      %v453 = vunpack.c.h.bf16 %v451
      %v454 = vlaneseq
      %v455 = vshrl.u32 %v454, 7
      %v456 = vadd.s32 %v455, 64
      %vm457 = vcmp.lt.s32.totalorder %v456, 81
      %v458 = vsel %vm457, %v452, %v10
      %s459 = scalar_lea.vmem [#allocation7], 76
      %v460 = vpack.c.bf16 0.0, %v458
      %s462 = ssub.s32 16, 1
      %463 = vst [vmem:[%s459] sm:%s462] %v460
      %s464 = scalar_lea.vmem %s171, 80
      %v465 = vld [vmem:[%s464] sm:$0xf]
      %v466 = vunpack.c.l.bf16 %v465
      %v467 = vunpack.c.h.bf16 %v465
      %v468 = vlaneseq
      %v469 = vshrl.u32 %v468, 7
      %v470 = vadd.s32 %v469, 72
      %vm471 = vcmp.lt.s32.totalorder %v470, 81
      %v472 = vsel %vm471, %v466, %v10
      %s473 = scalar_lea.vmem [#allocation7], 80
      %v474 = vpack.c.bf16 0.0, %v472
      %s476 = ssub.s32 16, 1
      %477 = vst [vmem:[%s473] sm:%s476] %v474
      %s478 = scalar_lea.vmem %s171, 84
      %s480 = sor.u32 255, 127
      %s481 = sand.u32 %s480, 85
      %s482 = sshrl.u32 %s481, 1
      %s483 = sor.u32 %s481, %s482
      %s484 = sand.u32 51, %s483
      %s485 = sshrl.u32 %s484, 2
      %s486 = sor.u32 %s484, %s485
      %s487 = sand.u32 15, %s486
      %v488 = vld [vmem:[%s478] sm:%s487]
      %v489 = vunpack.c.l.bf16 %v488
      %v490 = vunpack.c.h.bf16 %v488
      %v491 = vlaneseq
      %v492 = vshrl.u32 %v491, 7
      %v493 = vadd.s32 %v492, 80
      %vm494 = vcmp.lt.s32.totalorder %v493, 81
      %v495 = vsel %vm494, %v489, %v10
      %s496 = scalar_lea.vmem [#allocation7], 84
      %v497 = vpack.c.bf16 0.0, %v495
      %s499 = ssub.s32 16, 1
      %500 = vst [vmem:[%s496] sm:%s499] %v497
      %s501 = scalar_lea.vmem %s171, 88
      %v502 = vld [vmem:[%s501] sm:$0xf]
      %v503 = vunpack.c.l.bf16 %v502
      %v504 = vunpack.c.h.bf16 %v502
      %v505 = vlaneseq
      %v506 = vshrl.u32 %v505, 7
      %vm508 = vcmp.lt.s32.totalorder %v506, 81
      %v509 = vsel %vm508, %v503, %v10
      %s510 = scalar_lea.vmem [#allocation7], 88
      %v511 = vpack.c.bf16 0.0, %v509
      %s513 = ssub.s32 16, 1
      %514 = vst [vmem:[%s510] sm:%s513] %v511
      %s515 = scalar_lea.vmem %s171, 92
      %v516 = vld [vmem:[%s515] sm:$0xf]
      %v517 = vunpack.c.l.bf16 %v516
      %v518 = vunpack.c.h.bf16 %v516
      %v519 = vlaneseq
      %v520 = vshrl.u32 %v519, 7
      %v521 = vadd.s32 %v520, 8
      %vm522 = vcmp.lt.s32.totalorder %v521, 81
      %v523 = vsel %vm522, %v517, %v10
      %s524 = scalar_lea.vmem [#allocation7], 92
      %v525 = vpack.c.bf16 0.0, %v523
      %s527 = ssub.s32 16, 1
      %528 = vst [vmem:[%s524] sm:%s527] %v525
      %s529 = scalar_lea.vmem %s171, 96
      %v530 = vld [vmem:[%s529] sm:$0xf]
      %v531 = vunpack.c.l.bf16 %v530
      %v532 = vunpack.c.h.bf16 %v530
      %v533 = vlaneseq
      %v534 = vshrl.u32 %v533, 7
      %v535 = vadd.s32 %v534, 16
      %vm536 = vcmp.lt.s32.totalorder %v535, 81
      %v537 = vsel %vm536, %v531, %v10
      %s538 = scalar_lea.vmem [#allocation7], 96
      %v539 = vpack.c.bf16 0.0, %v537
      %s541 = ssub.s32 16, 1
      %542 = vst [vmem:[%s538] sm:%s541] %v539
      %s543 = scalar_lea.vmem %s171, 100
      %v544 = vld [vmem:[%s543] sm:$0xf]
      %v545 = vunpack.c.l.bf16 %v544
      %v546 = vunpack.c.h.bf16 %v544
      %v547 = vlaneseq
      %v548 = vshrl.u32 %v547, 7
      %v549 = vadd.s32 %v548, 24
      %vm550 = vcmp.lt.s32.totalorder %v549, 81
      %v551 = vsel %vm550, %v545, %v10
      %s552 = scalar_lea.vmem [#allocation7], 100
      %v553 = vpack.c.bf16 0.0, %v551
      %s555 = ssub.s32 16, 1
      %556 = vst [vmem:[%s552] sm:%s555] %v553
      %s557 = scalar_lea.vmem %s171, 104
      %v558 = vld [vmem:[%s557] sm:$0xf]
      %v559 = vunpack.c.l.bf16 %v558
      %v560 = vunpack.c.h.bf16 %v558
      %v561 = vlaneseq
      %v562 = vshrl.u32 %v561, 7
      %v563 = vadd.s32 %v562, 32
      %vm564 = vcmp.lt.s32.totalorder %v563, 81
      %v565 = vsel %vm564, %v559, %v10
      %s566 = scalar_lea.vmem [#allocation7], 104
      %v567 = vpack.c.bf16 0.0, %v565
      %s569 = ssub.s32 16, 1
      %570 = vst [vmem:[%s566] sm:%s569] %v567
      %s571 = scalar_lea.vmem %s171, 108
      %v572 = vld [vmem:[%s571] sm:$0xf]
      %v573 = vunpack.c.l.bf16 %v572
      %v574 = vunpack.c.h.bf16 %v572
      %v575 = vlaneseq
      %v576 = vshrl.u32 %v575, 7
      %v577 = vadd.s32 %v576, 40
      %vm578 = vcmp.lt.s32.totalorder %v577, 81
      %v579 = vsel %vm578, %v573, %v10
      %s580 = scalar_lea.vmem [#allocation7], 108
      %v581 = vpack.c.bf16 0.0, %v579
      %s583 = ssub.s32 16, 1
      %584 = vst [vmem:[%s580] sm:%s583] %v581
      %s585 = scalar_lea.vmem %s171, 112
      %v586 = vld [vmem:[%s585] sm:$0xf]
      %v587 = vunpack.c.l.bf16 %v586
      %v588 = vunpack.c.h.bf16 %v586
      %v589 = vlaneseq
      %v590 = vshrl.u32 %v589, 7
      %v591 = vadd.s32 %v590, 48
      %vm592 = vcmp.lt.s32.totalorder %v591, 81
      %v593 = vsel %vm592, %v587, %v10
      %s594 = scalar_lea.vmem [#allocation7], 112
      %v595 = vpack.c.bf16 0.0, %v593
      %s597 = ssub.s32 16, 1
      %598 = vst [vmem:[%s594] sm:%s597] %v595
      %s599 = scalar_lea.vmem %s171, 116
      %v600 = vld [vmem:[%s599] sm:$0xf]
      %v601 = vunpack.c.l.bf16 %v600
      %v602 = vunpack.c.h.bf16 %v600
      %v603 = vlaneseq
      %v604 = vshrl.u32 %v603, 7
      %v605 = vadd.s32 %v604, 56
      %vm606 = vcmp.lt.s32.totalorder %v605, 81
      %v607 = vsel %vm606, %v601, %v10
      %s608 = scalar_lea.vmem [#allocation7], 116
      %v609 = vpack.c.bf16 0.0, %v607
      %s611 = ssub.s32 16, 1
      %612 = vst [vmem:[%s608] sm:%s611] %v609
      %s613 = scalar_lea.vmem %s171, 120
      %v614 = vld [vmem:[%s613] sm:$0xf]
      %v615 = vunpack.c.l.bf16 %v614
      %v616 = vunpack.c.h.bf16 %v614
      %v617 = vlaneseq
      %v618 = vshrl.u32 %v617, 7
      %v619 = vadd.s32 %v618, 64
      %vm620 = vcmp.lt.s32.totalorder %v619, 81
      %v621 = vsel %vm620, %v615, %v10
      %s622 = scalar_lea.vmem [#allocation7], 120
      %v623 = vpack.c.bf16 0.0, %v621
      %s625 = ssub.s32 16, 1
      %626 = vst [vmem:[%s622] sm:%s625] %v623
      %s627 = scalar_lea.vmem %s171, 124
      %v628 = vld [vmem:[%s627] sm:$0xf]
      %v629 = vunpack.c.l.bf16 %v628
      %v630 = vunpack.c.h.bf16 %v628
      %v631 = vlaneseq
      %v632 = vshrl.u32 %v631, 7
      %v633 = vadd.s32 %v632, 72
      %vm634 = vcmp.lt.s32.totalorder %v633, 81
      %v635 = vsel %vm634, %v629, %v10
      %s636 = scalar_lea.vmem [#allocation7], 124
      %v637 = vpack.c.bf16 0.0, %v635
      %s639 = ssub.s32 16, 1
      %640 = vst [vmem:[%s636] sm:%s639] %v637
      %s641 = scalar_lea.vmem %s171, 128
      %s643 = sor.u32 255, 127
      %s644 = sand.u32 %s643, 85
      %s645 = sshrl.u32 %s644, 1
      %s646 = sor.u32 %s644, %s645
      %s647 = sand.u32 51, %s646
      %s648 = sshrl.u32 %s647, 2
      %s649 = sor.u32 %s647, %s648
      %s650 = sand.u32 15, %s649
      %v651 = vld [vmem:[%s641] sm:%s650]
      %v652 = vunpack.c.l.bf16 %v651
      %v653 = vunpack.c.h.bf16 %v651
      %v654 = vlaneseq
      %v655 = vshrl.u32 %v654, 7
      %v656 = vadd.s32 %v655, 80
      %vm657 = vcmp.lt.s32.totalorder %v656, 81
      %v658 = vsel %vm657, %v652, %v10
      %s659 = scalar_lea.vmem [#allocation7], 128
      %v660 = vpack.c.bf16 0.0, %v658
      %s662 = ssub.s32 16, 1
      %663 = vst [vmem:[%s659] sm:%s662] %v660
      %s664 = scalar_lea.vmem %s171, 132
      %v665 = vld [vmem:[%s664] sm:$0xf]
      %v666 = vunpack.c.l.bf16 %v665
      %v667 = vunpack.c.h.bf16 %v665
      %v668 = vlaneseq
      %v669 = vshrl.u32 %v668, 7
      %vm671 = vcmp.lt.s32.totalorder %v669, 81
      %v672 = vsel %vm671, %v666, %v10
      %s673 = scalar_lea.vmem [#allocation7], 132
      %v674 = vpack.c.bf16 0.0, %v672
      %s676 = ssub.s32 16, 1
      %677 = vst [vmem:[%s673] sm:%s676] %v674
      %s678 = scalar_lea.vmem %s171, 136
      %v679 = vld [vmem:[%s678] sm:$0xf]
      %v680 = vunpack.c.l.bf16 %v679
      %v681 = vunpack.c.h.bf16 %v679
      %v682 = vlaneseq
      %v683 = vshrl.u32 %v682, 7
      %v684 = vadd.s32 %v683, 8
      %vm685 = vcmp.lt.s32.totalorder %v684, 81
      %v686 = vsel %vm685, %v680, %v10
      %s687 = scalar_lea.vmem [#allocation7], 136
      %v688 = vpack.c.bf16 0.0, %v686
      %s690 = ssub.s32 16, 1
      %691 = vst [vmem:[%s687] sm:%s690] %v688
      %s692 = scalar_lea.vmem %s171, 140
      %v693 = vld [vmem:[%s692] sm:$0xf]
      %v694 = vunpack.c.l.bf16 %v693
      %v695 = vunpack.c.h.bf16 %v693
      %v696 = vlaneseq
      %v697 = vshrl.u32 %v696, 7
      %v698 = vadd.s32 %v697, 16
      %vm699 = vcmp.lt.s32.totalorder %v698, 81
      %v700 = vsel %vm699, %v694, %v10
      %s701 = scalar_lea.vmem [#allocation7], 140
      %v702 = vpack.c.bf16 0.0, %v700
      %s704 = ssub.s32 16, 1
      %705 = vst [vmem:[%s701] sm:%s704] %v702
      %s706 = scalar_lea.vmem %s171, 144
      %v707 = vld [vmem:[%s706] sm:$0xf]
      %v708 = vunpack.c.l.bf16 %v707
      %v709 = vunpack.c.h.bf16 %v707
      %v710 = vlaneseq
      %v711 = vshrl.u32 %v710, 7
      %v712 = vadd.s32 %v711, 24
      %vm713 = vcmp.lt.s32.totalorder %v712, 81
      %v714 = vsel %vm713, %v708, %v10
      %s715 = scalar_lea.vmem [#allocation7], 144
      %v716 = vpack.c.bf16 0.0, %v714
      %s718 = ssub.s32 16, 1
      %719 = vst [vmem:[%s715] sm:%s718] %v716
      %s720 = scalar_lea.vmem %s171, 148
      %v721 = vld [vmem:[%s720] sm:$0xf]
      %v722 = vunpack.c.l.bf16 %v721
      %v723 = vunpack.c.h.bf16 %v721
      %v724 = vlaneseq
      %v725 = vshrl.u32 %v724, 7
      %v726 = vadd.s32 %v725, 32
      %vm727 = vcmp.lt.s32.totalorder %v726, 81
      %v728 = vsel %vm727, %v722, %v10
      %s729 = scalar_lea.vmem [#allocation7], 148
      %v730 = vpack.c.bf16 0.0, %v728
      %s732 = ssub.s32 16, 1
      %733 = vst [vmem:[%s729] sm:%s732] %v730
      %s734 = scalar_lea.vmem %s171, 152
      %v735 = vld [vmem:[%s734] sm:$0xf]
      %v736 = vunpack.c.l.bf16 %v735
      %v737 = vunpack.c.h.bf16 %v735
      %v738 = vlaneseq
      %v739 = vshrl.u32 %v738, 7
      %v740 = vadd.s32 %v739, 40
      %vm741 = vcmp.lt.s32.totalorder %v740, 81
      %v742 = vsel %vm741, %v736, %v10
      %s743 = scalar_lea.vmem [#allocation7], 152
      %v744 = vpack.c.bf16 0.0, %v742
      %s746 = ssub.s32 16, 1
      %747 = vst [vmem:[%s743] sm:%s746] %v744
      %s748 = scalar_lea.vmem %s171, 156
      %v749 = vld [vmem:[%s748] sm:$0xf]
      %v750 = vunpack.c.l.bf16 %v749
      %v751 = vunpack.c.h.bf16 %v749
      %v752 = vlaneseq
      %v753 = vshrl.u32 %v752, 7
      %v754 = vadd.s32 %v753, 48
      %vm755 = vcmp.lt.s32.totalorder %v754, 81
      %v756 = vsel %vm755, %v750, %v10
      %s757 = scalar_lea.vmem [#allocation7], 156
      %v758 = vpack.c.bf16 0.0, %v756
      %s760 = ssub.s32 16, 1
      %761 = vst [vmem:[%s757] sm:%s760] %v758
      %s762 = scalar_lea.vmem %s171, 160
      %v763 = vld [vmem:[%s762] sm:$0xf]
      %v764 = vunpack.c.l.bf16 %v763
      %v765 = vunpack.c.h.bf16 %v763
      %v766 = vlaneseq
      %v767 = vshrl.u32 %v766, 7
      %v768 = vadd.s32 %v767, 56
      %vm769 = vcmp.lt.s32.totalorder %v768, 81
      %v770 = vsel %vm769, %v764, %v10
      %s771 = scalar_lea.vmem [#allocation7], 160
      %v772 = vpack.c.bf16 0.0, %v770
      %s774 = ssub.s32 16, 1
      %775 = vst [vmem:[%s771] sm:%s774] %v772
      %s776 = scalar_lea.vmem %s171, 164
      %v777 = vld [vmem:[%s776] sm:$0xf]
      %v778 = vunpack.c.l.bf16 %v777
      %v779 = vunpack.c.h.bf16 %v777
      %v780 = vlaneseq
      %v781 = vshrl.u32 %v780, 7
      %v782 = vadd.s32 %v781, 64
      %vm783 = vcmp.lt.s32.totalorder %v782, 81
      %v784 = vsel %vm783, %v778, %v10
      %s785 = scalar_lea.vmem [#allocation7], 164
      %v786 = vpack.c.bf16 0.0, %v784
      %s788 = ssub.s32 16, 1
      %789 = vst [vmem:[%s785] sm:%s788] %v786
      %s790 = scalar_lea.vmem %s171, 168
      %v791 = vld [vmem:[%s790] sm:$0xf]
      %v792 = vunpack.c.l.bf16 %v791
      %v793 = vunpack.c.h.bf16 %v791
      %v794 = vlaneseq
      %v795 = vshrl.u32 %v794, 7
      %v796 = vadd.s32 %v795, 72
      %vm797 = vcmp.lt.s32.totalorder %v796, 81
      %v798 = vsel %vm797, %v792, %v10
      %s799 = scalar_lea.vmem [#allocation7], 168
      %v800 = vpack.c.bf16 0.0, %v798
      %s802 = ssub.s32 16, 1
      %803 = vst [vmem:[%s799] sm:%s802] %v800
      %s804 = scalar_lea.vmem %s171, 172
      %s806 = sor.u32 255, 127
      %s807 = sand.u32 %s806, 85
      %s808 = sshrl.u32 %s807, 1
      %s809 = sor.u32 %s807, %s808
      %s810 = sand.u32 51, %s809
      %s811 = sshrl.u32 %s810, 2
      %s812 = sor.u32 %s810, %s811
      %s813 = sand.u32 15, %s812
      %v814 = vld [vmem:[%s804] sm:%s813]
      %v815 = vunpack.c.l.bf16 %v814
      %v816 = vunpack.c.h.bf16 %v814
      %v817 = vlaneseq
      %v818 = vshrl.u32 %v817, 7
      %v819 = vadd.s32 %v818, 80
      %vm820 = vcmp.lt.s32.totalorder %v819, 81
      %v821 = vsel %vm820, %v815, %v10
      %s822 = scalar_lea.vmem [#allocation7], 172
      %v823 = vpack.c.bf16 0.0, %v821
      %s825 = ssub.s32 16, 1
      %826 = vst [vmem:[%s822] sm:%s825] %v823
      %v827 = vld [vmem:[%s3] sm:$0x1]
      %s829 = ssub.s32 2, 1
      %830 = vst [vmem:[#allocation8] sm:%s829] %v827
      %v831 = vld [vmem:[#allocation7] sm:$0xf]
      %v832 = vld [vmem:[#allocation7 + $0x4] sm:$0xf]
      %v833 = vld [vmem:[#allocation7 + $0x8] sm:$0xf]
      %v834 = vld [vmem:[#allocation7 + $0xc] sm:$0xf]
      %v835 = vld [vmem:[#allocation7 + $0x10] sm:$0xf]
      %v836 = vld [vmem:[#allocation7 + $0x14] sm:$0xf]
      %v837 = vld [vmem:[#allocation7 + $0x18] sm:$0xf]
      %v838 = vld [vmem:[#allocation7 + $0x1c] sm:$0xf]
      %v839 = vld [vmem:[#allocation7 + $0x20] sm:$0xf]
      %v840 = vld [vmem:[%s0] sm:$0xf]
      %v841 = vld [vmem:[%s0 + $0x4] sm:$0xf]
      %v842 = vld [vmem:[%s0 + $0x8] sm:$0xf]
      %v843 = vld [vmem:[%s0 + $0xc] sm:$0xf]
      %v844 = vld [vmem:[%s0 + $0x10] sm:$0xf]
      %v845 = vld [vmem:[%s0 + $0x14] sm:$0xf]
      %v846 = vld [vmem:[%s0 + $0x18] sm:$0xf]
      %v847 = vld [vmem:[%s0 + $0x1c] sm:$0xf]
      %v848 = vld [vmem:[%s0 + $0x20] sm:$0xf]
      %v849 = vld [vmem:[%s0 + $0x24] sm:$0xf]
      %v850 = vld [vmem:[%s0 + $0x28] sm:$0xf]
      %v851 = vld [vmem:[%s0 + $0x2c] sm:$0xf]
      %v852 = vld [vmem:[%s0 + $0x30] sm:$0xf]
      %v853 = vld [vmem:[%s0 + $0x34] sm:$0xf]
      %v854 = vld [vmem:[%s0 + $0x38] sm:$0xf]
      %v855 = vld [vmem:[%s0 + $0x3c] sm:$0xf]
      %s856 = scalar_lea.vmem [#allocation7], 44
      %v857 = vld [vmem:[%s856] sm:$0xf]
      %v858 = vld [vmem:[%s856 + $0x4] sm:$0xf]
      %v859 = vld [vmem:[%s856 + $0x8] sm:$0xf]
      %v860 = vld [vmem:[%s856 + $0xc] sm:$0xf]
      %v861 = vld [vmem:[%s856 + $0x10] sm:$0xf]
      %v862 = vld [vmem:[%s856 + $0x14] sm:$0xf]
      %v863 = vld [vmem:[%s856 + $0x18] sm:$0xf]
      %v864 = vld [vmem:[%s856 + $0x1c] sm:$0xf]
      %v865 = vld [vmem:[%s856 + $0x20] sm:$0xf]
      %s866 = scalar_lea.vmem %s0, 64
      %v867 = vld [vmem:[%s866] sm:$0xf]
      %v868 = vld [vmem:[%s866 + $0x4] sm:$0xf]
      %v869 = vld [vmem:[%s866 + $0x8] sm:$0xf]
      %v870 = vld [vmem:[%s866 + $0xc] sm:$0xf]
      %v871 = vld [vmem:[%s866 + $0x10] sm:$0xf]
      %v872 = vld [vmem:[%s866 + $0x14] sm:$0xf]
      %v873 = vld [vmem:[%s866 + $0x18] sm:$0xf]
      %v874 = vld [vmem:[%s866 + $0x1c] sm:$0xf]
      %v875 = vld [vmem:[%s866 + $0x20] sm:$0xf]
      %v876 = vld [vmem:[%s866 + $0x24] sm:$0xf]
      %v877 = vld [vmem:[%s866 + $0x28] sm:$0xf]
      %v878 = vld [vmem:[%s866 + $0x2c] sm:$0xf]
      %v879 = vld [vmem:[%s866 + $0x30] sm:$0xf]
      %v880 = vld [vmem:[%s866 + $0x34] sm:$0xf]
      %v881 = vld [vmem:[%s866 + $0x38] sm:$0xf]
      %v882 = vld [vmem:[%s866 + $0x3c] sm:$0xf]
      %v892 = vunpack.c.l.b16 %v857
      %v893 = vunpack.c.l.b16 %v858
      %v894 = vunpack.c.l.b16 %v859
      %v895 = vunpack.c.l.b16 %v860
      %v896 = vunpack.c.l.b16 %v861
      %v897 = vunpack.c.l.b16 %v862
      %v898 = vunpack.c.l.b16 %v863
      %v899 = vunpack.c.l.b16 %v864
      %v900 = vunpack.c.l.b16 %v865
      %v901 = vpack.c.b16 %v893, %v892
      %v902 = vpack.c.b16 %v895, %v894
      %v903 = vpack.c.b16 %v897, %v896
      %v904 = vpack.c.b16 %v899, %v898
      %v905 = vpack.c.b16 %v900, %v900
      %v927 = vunpack.c.l.b16 %v867
      %v928 = vunpack.c.l.b16 %v868
      %v929 = vunpack.c.l.b16 %v869
      %v930 = vunpack.c.l.b16 %v870
      %v931 = vunpack.c.l.b16 %v871
      %v932 = vunpack.c.l.b16 %v872
      %v933 = vunpack.c.l.b16 %v873
      %v934 = vunpack.c.l.b16 %v874
      %v935 = vunpack.c.l.b16 %v875
      %v936 = vunpack.c.l.b16 %v876
      %v937 = vunpack.c.l.b16 %v877
      %v938 = vunpack.c.l.b16 %v878
      %v939 = vunpack.c.l.b16 %v879
      %v940 = vunpack.c.l.b16 %v880
      %v941 = vunpack.c.l.b16 %v881
      %v942 = vunpack.c.l.b16 %v882
      %v943 = vpack.c.b16 %v928, %v927
      %v944 = vpack.c.b16 %v930, %v929
      %v945 = vpack.c.b16 %v932, %v931
      %v946 = vpack.c.b16 %v934, %v933
      %v947 = vpack.c.b16 %v936, %v935
      %v948 = vpack.c.b16 %v938, %v937
      %v949 = vpack.c.b16 %v940, %v939
      %v950 = vpack.c.b16 %v942, %v941
      %959 = vmatpush.bf16.msra.mxu0 %v950
      %960 = vmatpush.bf16.msra.mxu0 %v949
      %961 = vmatpush.bf16.msra.mxu0 %v948
      %962 = vmatpush.bf16.msra.mxu0 %v947
      %963 = vmatpush.bf16.msra.mxu0 %v946
      %964 = vmatpush.bf16.msra.mxu0 %v945
      %965 = vmatpush.bf16.msra.mxu0 %v944
      %966 = vmatpush.bf16.msra.mxu0 %v943
      %967 = vmatmul.bf16.gmra.mxu0 %v901
      %v968 = vpop.f32.mrf.mxu0
      %v969 = vadd.f32 0.0, %v968
      %v970 = vpop.f32.mrf.mxu0
      %v971 = vadd.f32 0.0, %v970
      %972 = vmatmul.bf16.gmra.mxu0 %v902
      %v973 = vpop.f32.mrf.mxu0
      %v974 = vadd.f32 0.0, %v973
      %v975 = vpop.f32.mrf.mxu0
      %v976 = vadd.f32 0.0, %v975
      %977 = vmatmul.bf16.gmra.mxu0 %v903
      %v978 = vpop.f32.mrf.mxu0
      %v979 = vadd.f32 0.0, %v978
      %v980 = vpop.f32.mrf.mxu0
      %v981 = vadd.f32 0.0, %v980
      %982 = vmatmul.bf16.gmra.mxu0 %v904
      %v983 = vpop.f32.mrf.mxu0
      %v984 = vadd.f32 0.0, %v983
      %v985 = vpop.f32.mrf.mxu0
      %v986 = vadd.f32 0.0, %v985
      %987 = vmatmul.bf16.gmra.mxu0 %v905
      %v988 = vpop.f32.mrf.mxu0
      %v989 = vadd.f32 0.0, %v988
      %v990 = vpop.f32.mrf.mxu0
      %991 = vdwg.mxu0
      %v1001 = vunpack.c.l.b16 %v831
      %v1002 = vunpack.c.l.b16 %v832
      %v1003 = vunpack.c.l.b16 %v833
      %v1004 = vunpack.c.l.b16 %v834
      %v1005 = vunpack.c.l.b16 %v835
      %v1006 = vunpack.c.l.b16 %v836
      %v1007 = vunpack.c.l.b16 %v837
      %v1008 = vunpack.c.l.b16 %v838
      %v1009 = vunpack.c.l.b16 %v839
      %v1010 = vpack.c.b16 %v1002, %v1001
      %v1011 = vpack.c.b16 %v1004, %v1003
      %v1012 = vpack.c.b16 %v1006, %v1005
      %v1013 = vpack.c.b16 %v1008, %v1007
      %v1014 = vpack.c.b16 %v1009, %v1009
      %v1036 = vunpack.c.l.b16 %v840
      %v1037 = vunpack.c.l.b16 %v841
      %v1038 = vunpack.c.l.b16 %v842
      %v1039 = vunpack.c.l.b16 %v843
      %v1040 = vunpack.c.l.b16 %v844
      %v1041 = vunpack.c.l.b16 %v845
      %v1042 = vunpack.c.l.b16 %v846
      %v1043 = vunpack.c.l.b16 %v847
      %v1044 = vunpack.c.l.b16 %v848
      %v1045 = vunpack.c.l.b16 %v849
      %v1046 = vunpack.c.l.b16 %v850
      %v1047 = vunpack.c.l.b16 %v851
      %v1048 = vunpack.c.l.b16 %v852
      %v1049 = vunpack.c.l.b16 %v853
      %v1050 = vunpack.c.l.b16 %v854
      %v1051 = vunpack.c.l.b16 %v855
      %v1052 = vpack.c.b16 %v1037, %v1036
      %v1053 = vpack.c.b16 %v1039, %v1038
      %v1054 = vpack.c.b16 %v1041, %v1040
      %v1055 = vpack.c.b16 %v1043, %v1042
      %v1056 = vpack.c.b16 %v1045, %v1044
      %v1057 = vpack.c.b16 %v1047, %v1046
      %v1058 = vpack.c.b16 %v1049, %v1048
      %v1059 = vpack.c.b16 %v1051, %v1050
      %1068 = vmatpush.bf16.msra.mxu0 %v1059
      %1069 = vmatpush.bf16.msra.mxu0 %v1058
      %1070 = vmatpush.bf16.msra.mxu0 %v1057
      %1071 = vmatpush.bf16.msra.mxu0 %v1056
      %1072 = vmatpush.bf16.msra.mxu0 %v1055
      %1073 = vmatpush.bf16.msra.mxu0 %v1054
      %1074 = vmatpush.bf16.msra.mxu0 %v1053
      %1075 = vmatpush.bf16.msra.mxu0 %v1052
      %1076 = vmatmul.bf16.gmra.mxu0 %v1010
      %v1077 = vpop.f32.mrf.mxu0
      %v1078 = vadd.f32 %v969, %v1077
      %v1079 = vpop.f32.mrf.mxu0
      %v1080 = vadd.f32 %v971, %v1079
      %1081 = vmatmul.bf16.gmra.mxu0 %v1011
      %v1082 = vpop.f32.mrf.mxu0
      %v1083 = vadd.f32 %v974, %v1082
      %v1084 = vpop.f32.mrf.mxu0
      %v1085 = vadd.f32 %v976, %v1084
      %1086 = vmatmul.bf16.gmra.mxu0 %v1012
      %v1087 = vpop.f32.mrf.mxu0
      %v1088 = vadd.f32 %v979, %v1087
      %v1089 = vpop.f32.mrf.mxu0
      %v1090 = vadd.f32 %v981, %v1089
      %1091 = vmatmul.bf16.gmra.mxu0 %v1013
      %v1092 = vpop.f32.mrf.mxu0
      %v1093 = vadd.f32 %v984, %v1092
      %v1094 = vpop.f32.mrf.mxu0
      %v1095 = vadd.f32 %v986, %v1094
      %1096 = vmatmul.bf16.gmra.mxu0 %v1014
      %v1097 = vpop.f32.mrf.mxu0
      %v1098 = vadd.f32 %v989, %v1097
      %v1099 = vpop.f32.mrf.mxu0
      %1100 = vdwg.mxu0
      %v1101 = vld [vmem:[#allocation7] sm:$0xf]
      %v1102 = vld [vmem:[#allocation7 + $0x4] sm:$0xf]
      %v1103 = vld [vmem:[#allocation7 + $0x8] sm:$0xf]
      %v1104 = vld [vmem:[#allocation7 + $0xc] sm:$0xf]
      %v1105 = vld [vmem:[#allocation7 + $0x10] sm:$0xf]
      %v1106 = vld [vmem:[#allocation7 + $0x14] sm:$0xf]
      %v1107 = vld [vmem:[#allocation7 + $0x18] sm:$0xf]
      %v1108 = vld [vmem:[#allocation7 + $0x1c] sm:$0xf]
      %v1109 = vld [vmem:[#allocation7 + $0x20] sm:$0xf]
      %v1110 = vld [vmem:[#allocation7 + $0x24] sm:$0x1]
      %s1111 = scalar_lea.vmem %s0, 128
      %v1112 = vld [vmem:[%s1111] sm:$0xf]
      %v1113 = vld [vmem:[%s1111 + $0x4] sm:$0xf]
      %v1114 = vld [vmem:[%s1111 + $0x8] sm:$0xf]
      %v1115 = vld [vmem:[%s1111 + $0xc] sm:$0xf]
      %v1116 = vld [vmem:[%s1111 + $0x10] sm:$0xf]
      %v1117 = vld [vmem:[%s1111 + $0x14] sm:$0xf]
      %v1118 = vld [vmem:[%s1111 + $0x18] sm:$0xf]
      %v1119 = vld [vmem:[%s1111 + $0x1c] sm:$0xf]
      %v1120 = vld [vmem:[%s1111 + $0x20] sm:$0xf]
      %v1121 = vld [vmem:[%s1111 + $0x24] sm:$0xf]
      %v1122 = vld [vmem:[%s1111 + $0x28] sm:$0xf]
      %v1123 = vld [vmem:[%s1111 + $0x2c] sm:$0xf]
      %v1124 = vld [vmem:[%s1111 + $0x30] sm:$0xf]
      %v1125 = vld [vmem:[%s1111 + $0x34] sm:$0xf]
      %v1126 = vld [vmem:[%s1111 + $0x38] sm:$0xf]
      %v1127 = vld [vmem:[%s1111 + $0x3c] sm:$0xf]
      %v1138 = vunpack.c.l.b16 %v1101
      %v1139 = vunpack.c.l.b16 %v1102
      %v1140 = vunpack.c.l.b16 %v1103
      %v1141 = vunpack.c.l.b16 %v1104
      %v1142 = vunpack.c.l.b16 %v1105
      %v1143 = vunpack.c.l.b16 %v1106
      %v1144 = vunpack.c.l.b16 %v1107
      %v1145 = vunpack.c.l.b16 %v1108
      %v1146 = vunpack.c.l.b16 %v1109
      %v1147 = vunpack.c.l.b16 %v1110
      %v1148 = vpack.c.b16 %v1139, %v1138
      %v1149 = vpack.c.b16 %v1141, %v1140
      %v1150 = vpack.c.b16 %v1143, %v1142
      %v1151 = vpack.c.b16 %v1145, %v1144
      %v1152 = vpack.c.b16 %v1147, %v1146
      %vm1153 = vsmask.f32 7424
      %v1155 = vshrl.u32 %v1148, 16
      %v1157 = vshll.u32 %v1148, 16
      %v1159 = vrot.slane %v1157, 1
      %v1160 = vor.u32 %v1155, %v1159
      %v1162 = vshll.u32 %v1149, 16
      %v1164 = vrot.slane %v1162, 1
      %v1165 = vsel %vm1153, %v1160, %v1164
      %v1166 = vshrl.u32 %v1149, 16
      %v1168 = vor.u32 %v1166, %v1164
      %v1170 = vshll.u32 %v1150, 16
      %v1172 = vrot.slane %v1170, 1
      %v1173 = vsel %vm1153, %v1168, %v1172
      %v1174 = vshrl.u32 %v1150, 16
      %v1176 = vor.u32 %v1174, %v1172
      %v1178 = vshll.u32 %v1151, 16
      %v1180 = vrot.slane %v1178, 1
      %v1181 = vsel %vm1153, %v1176, %v1180
      %v1182 = vshrl.u32 %v1151, 16
      %v1184 = vor.u32 %v1182, %v1180
      %v1186 = vshll.u32 %v1152, 16
      %v1188 = vrot.slane %v1186, 1
      %v1189 = vsel %vm1153, %v1184, %v1188
      %v1190 = vshrl.u32 %v1152, 16
      %v1192 = vor.u32 %v1190, %v1188
      %v1214 = vunpack.c.l.b16 %v1112
      %v1215 = vunpack.c.l.b16 %v1113
      %v1216 = vunpack.c.l.b16 %v1114
      %v1217 = vunpack.c.l.b16 %v1115
      %v1218 = vunpack.c.l.b16 %v1116
      %v1219 = vunpack.c.l.b16 %v1117
      %v1220 = vunpack.c.l.b16 %v1118
      %v1221 = vunpack.c.l.b16 %v1119
      %v1222 = vunpack.c.l.b16 %v1120
      %v1223 = vunpack.c.l.b16 %v1121
      %v1224 = vunpack.c.l.b16 %v1122
      %v1225 = vunpack.c.l.b16 %v1123
      %v1226 = vunpack.c.l.b16 %v1124
      %v1227 = vunpack.c.l.b16 %v1125
      %v1228 = vunpack.c.l.b16 %v1126
      %v1229 = vunpack.c.l.b16 %v1127
      %v1230 = vpack.c.b16 %v1215, %v1214
      %v1231 = vpack.c.b16 %v1217, %v1216
      %v1232 = vpack.c.b16 %v1219, %v1218
      %v1233 = vpack.c.b16 %v1221, %v1220
      %v1234 = vpack.c.b16 %v1223, %v1222
      %v1235 = vpack.c.b16 %v1225, %v1224
      %v1236 = vpack.c.b16 %v1227, %v1226
      %v1237 = vpack.c.b16 %v1229, %v1228
      %1246 = vmatpush.bf16.msra.mxu0 %v1237
      %1247 = vmatpush.bf16.msra.mxu0 %v1236
      %1248 = vmatpush.bf16.msra.mxu0 %v1235
      %1249 = vmatpush.bf16.msra.mxu0 %v1234
      %1250 = vmatpush.bf16.msra.mxu0 %v1233
      %1251 = vmatpush.bf16.msra.mxu0 %v1232
      %1252 = vmatpush.bf16.msra.mxu0 %v1231
      %1253 = vmatpush.bf16.msra.mxu0 %v1230
      %1254 = vmatmul.bf16.gmra.mxu0 %v1165
      %v1255 = vpop.f32.mrf.mxu0
      %v1256 = vadd.f32 0.0, %v1255
      %v1257 = vpop.f32.mrf.mxu0
      %v1258 = vadd.f32 0.0, %v1257
      %1259 = vmatmul.bf16.gmra.mxu0 %v1173
      %v1260 = vpop.f32.mrf.mxu0
      %v1261 = vadd.f32 0.0, %v1260
      %v1262 = vpop.f32.mrf.mxu0
      %v1263 = vadd.f32 0.0, %v1262
      %1264 = vmatmul.bf16.gmra.mxu0 %v1181
      %v1265 = vpop.f32.mrf.mxu0
      %v1266 = vadd.f32 0.0, %v1265
      %v1267 = vpop.f32.mrf.mxu0
      %v1268 = vadd.f32 0.0, %v1267
      %1269 = vmatmul.bf16.gmra.mxu0 %v1189
      %v1270 = vpop.f32.mrf.mxu0
      %v1271 = vadd.f32 0.0, %v1270
      %v1272 = vpop.f32.mrf.mxu0
      %v1273 = vadd.f32 0.0, %v1272
      %1274 = vmatmul.bf16.gmra.mxu0 %v1192
      %v1275 = vpop.f32.mrf.mxu0
      %v1276 = vadd.f32 0.0, %v1275
      %v1277 = vpop.f32.mrf.mxu0
      %1278 = vdwg.mxu0
      %v1279 = vadd.f32 %v1078, %v1256
      %v1280 = vadd.f32 %v1080, %v1258
      %v1281 = vadd.f32 %v1083, %v1261
      %v1282 = vadd.f32 %v1085, %v1263
      %v1283 = vadd.f32 %v1088, %v1266
      %v1284 = vadd.f32 %v1090, %v1268
      %v1285 = vadd.f32 %v1093, %v1271
      %v1286 = vadd.f32 %v1095, %v1273
      %v1287 = vadd.f32 %v1098, %v1276
      %s1288 = scalar_lea.vmem [#allocation7], 88
      %v1289 = vld [vmem:[%s1288] sm:$0xf]
      %v1290 = vld [vmem:[%s1288 + $0x4] sm:$0xf]
      %v1291 = vld [vmem:[%s1288 + $0x8] sm:$0xf]
      %v1292 = vld [vmem:[%s1288 + $0xc] sm:$0xf]
      %v1293 = vld [vmem:[%s1288 + $0x10] sm:$0xf]
      %v1294 = vld [vmem:[%s1288 + $0x14] sm:$0xf]
      %v1295 = vld [vmem:[%s1288 + $0x18] sm:$0xf]
      %v1296 = vld [vmem:[%s1288 + $0x1c] sm:$0xf]
      %v1297 = vld [vmem:[%s1288 + $0x20] sm:$0xf]
      %s1298 = scalar_lea.vmem %s0, 192
      %v1299 = vld [vmem:[%s1298] sm:$0xf]
      %v1300 = vld [vmem:[%s1298 + $0x4] sm:$0xf]
      %v1301 = vld [vmem:[%s1298 + $0x8] sm:$0xf]
      %v1302 = vld [vmem:[%s1298 + $0xc] sm:$0xf]
      %v1303 = vld [vmem:[%s1298 + $0x10] sm:$0xf]
      %v1304 = vld [vmem:[%s1298 + $0x14] sm:$0xf]
      %v1305 = vld [vmem:[%s1298 + $0x18] sm:$0xf]
      %v1306 = vld [vmem:[%s1298 + $0x1c] sm:$0xf]
      %v1307 = vld [vmem:[%s1298 + $0x20] sm:$0xf]
      %v1308 = vld [vmem:[%s1298 + $0x24] sm:$0xf]
      %v1309 = vld [vmem:[%s1298 + $0x28] sm:$0xf]
      %v1310 = vld [vmem:[%s1298 + $0x2c] sm:$0xf]
      %v1311 = vld [vmem:[%s1298 + $0x30] sm:$0xf]
      %v1312 = vld [vmem:[%s1298 + $0x34] sm:$0xf]
      %v1313 = vld [vmem:[%s1298 + $0x38] sm:$0xf]
      %v1314 = vld [vmem:[%s1298 + $0x3c] sm:$0xf]
      %v1324 = vunpack.c.l.b16 %v1289
      %v1325 = vunpack.c.l.b16 %v1290
      %v1326 = vunpack.c.l.b16 %v1291
      %v1327 = vunpack.c.l.b16 %v1292
      %v1328 = vunpack.c.l.b16 %v1293
      %v1329 = vunpack.c.l.b16 %v1294
      %v1330 = vunpack.c.l.b16 %v1295
      %v1331 = vunpack.c.l.b16 %v1296
      %v1332 = vunpack.c.l.b16 %v1297
      %v1333 = vpack.c.b16 %v1325, %v1324
      %v1334 = vpack.c.b16 %v1327, %v1326
      %v1335 = vpack.c.b16 %v1329, %v1328
      %v1336 = vpack.c.b16 %v1331, %v1330
      %v1337 = vpack.c.b16 %v1332, %v1332
      %v1359 = vunpack.c.l.b16 %v1299
      %v1360 = vunpack.c.l.b16 %v1300
      %v1361 = vunpack.c.l.b16 %v1301
      %v1362 = vunpack.c.l.b16 %v1302
      %v1363 = vunpack.c.l.b16 %v1303
      %v1364 = vunpack.c.l.b16 %v1304
      %v1365 = vunpack.c.l.b16 %v1305
      %v1366 = vunpack.c.l.b16 %v1306
      %v1367 = vunpack.c.l.b16 %v1307
      %v1368 = vunpack.c.l.b16 %v1308
      %v1369 = vunpack.c.l.b16 %v1309
      %v1370 = vunpack.c.l.b16 %v1310
      %v1371 = vunpack.c.l.b16 %v1311
      %v1372 = vunpack.c.l.b16 %v1312
      %v1373 = vunpack.c.l.b16 %v1313
      %v1374 = vunpack.c.l.b16 %v1314
      %v1375 = vpack.c.b16 %v1360, %v1359
      %v1376 = vpack.c.b16 %v1362, %v1361
      %v1377 = vpack.c.b16 %v1364, %v1363
      %v1378 = vpack.c.b16 %v1366, %v1365
      %v1379 = vpack.c.b16 %v1368, %v1367
      %v1380 = vpack.c.b16 %v1370, %v1369
      %v1381 = vpack.c.b16 %v1372, %v1371
      %v1382 = vpack.c.b16 %v1374, %v1373
      %1391 = vmatpush.bf16.msra.mxu0 %v1382
      %1392 = vmatpush.bf16.msra.mxu0 %v1381
      %1393 = vmatpush.bf16.msra.mxu0 %v1380
      %1394 = vmatpush.bf16.msra.mxu0 %v1379
      %1395 = vmatpush.bf16.msra.mxu0 %v1378
      %1396 = vmatpush.bf16.msra.mxu0 %v1377
      %1397 = vmatpush.bf16.msra.mxu0 %v1376
      %1398 = vmatpush.bf16.msra.mxu0 %v1375
      %1399 = vmatmul.bf16.gmra.mxu0 %v1333
      %v1400 = vpop.f32.mrf.mxu0
      %v1401 = vadd.f32 0.0, %v1400
      %v1402 = vpop.f32.mrf.mxu0
      %v1403 = vadd.f32 0.0, %v1402
      %1404 = vmatmul.bf16.gmra.mxu0 %v1334
      %v1405 = vpop.f32.mrf.mxu0
      %v1406 = vadd.f32 0.0, %v1405
      %v1407 = vpop.f32.mrf.mxu0
      %v1408 = vadd.f32 0.0, %v1407
      %1409 = vmatmul.bf16.gmra.mxu0 %v1335
      %v1410 = vpop.f32.mrf.mxu0
      %v1411 = vadd.f32 0.0, %v1410
      %v1412 = vpop.f32.mrf.mxu0
      %v1413 = vadd.f32 0.0, %v1412
      %1414 = vmatmul.bf16.gmra.mxu0 %v1336
      %v1415 = vpop.f32.mrf.mxu0
      %v1416 = vadd.f32 0.0, %v1415
      %v1417 = vpop.f32.mrf.mxu0
      %v1418 = vadd.f32 0.0, %v1417
      %1419 = vmatmul.bf16.gmra.mxu0 %v1337
      %v1420 = vpop.f32.mrf.mxu0
      %v1421 = vadd.f32 0.0, %v1420
      %v1422 = vpop.f32.mrf.mxu0
      %1423 = vdwg.mxu0
      %v1424 = vadd.f32 %v1279, %v1401
      %v1425 = vadd.f32 %v1280, %v1403
      %v1426 = vadd.f32 %v1281, %v1406
      %v1427 = vadd.f32 %v1282, %v1408
      %v1428 = vadd.f32 %v1283, %v1411
      %v1429 = vadd.f32 %v1284, %v1413
      %v1430 = vadd.f32 %v1285, %v1416
      %v1431 = vadd.f32 %v1286, %v1418
      %v1432 = vadd.f32 %v1287, %v1421
      %s1433 = scalar_lea.vmem [#allocation7], 132
      %v1434 = vld [vmem:[%s1433] sm:$0xf]
      %v1435 = vld [vmem:[%s1433 + $0x4] sm:$0xf]
      %v1436 = vld [vmem:[%s1433 + $0x8] sm:$0xf]
      %v1437 = vld [vmem:[%s1433 + $0xc] sm:$0xf]
      %v1438 = vld [vmem:[%s1433 + $0x10] sm:$0xf]
      %v1439 = vld [vmem:[%s1433 + $0x14] sm:$0xf]
      %v1440 = vld [vmem:[%s1433 + $0x18] sm:$0xf]
      %v1441 = vld [vmem:[%s1433 + $0x1c] sm:$0xf]
      %v1442 = vld [vmem:[%s1433 + $0x20] sm:$0xf]
      %s1443 = scalar_lea.vmem %s0, 256
      %v1444 = vld [vmem:[%s1443] sm:$0xf]
      %v1445 = vld [vmem:[%s1443 + $0x4] sm:$0xf]
      %v1446 = vld [vmem:[%s1443 + $0x8] sm:$0xf]
      %v1447 = vld [vmem:[%s1443 + $0xc] sm:$0xf]
      %v1448 = vld [vmem:[%s1443 + $0x10] sm:$0xf]
      %v1449 = vld [vmem:[%s1443 + $0x14] sm:$0xf]
      %v1450 = vld [vmem:[%s1443 + $0x18] sm:$0xf]
      %v1451 = vld [vmem:[%s1443 + $0x1c] sm:$0xf]
      %v1452 = vld [vmem:[%s1443 + $0x20] sm:$0xf]
      %v1453 = vld [vmem:[%s1443 + $0x24] sm:$0xf]
      %v1454 = vld [vmem:[%s1443 + $0x28] sm:$0xf]
      %v1455 = vld [vmem:[%s1443 + $0x2c] sm:$0xf]
      %v1456 = vld [vmem:[%s1443 + $0x30] sm:$0xf]
      %v1457 = vld [vmem:[%s1443 + $0x34] sm:$0xf]
      %v1458 = vld [vmem:[%s1443 + $0x38] sm:$0xf]
      %v1459 = vld [vmem:[%s1443 + $0x3c] sm:$0xf]
      %v1469 = vunpack.c.l.b16 %v1434
      %v1470 = vunpack.c.l.b16 %v1435
      %v1471 = vunpack.c.l.b16 %v1436
      %v1472 = vunpack.c.l.b16 %v1437
      %v1473 = vunpack.c.l.b16 %v1438
      %v1474 = vunpack.c.l.b16 %v1439
      %v1475 = vunpack.c.l.b16 %v1440
      %v1476 = vunpack.c.l.b16 %v1441
      %v1477 = vunpack.c.l.b16 %v1442
      %v1478 = vpack.c.b16 %v1470, %v1469
      %v1479 = vpack.c.b16 %v1472, %v1471
      %v1480 = vpack.c.b16 %v1474, %v1473
      %v1481 = vpack.c.b16 %v1476, %v1475
      %v1482 = vpack.c.b16 %v1477, %v1477
      %v1504 = vunpack.c.l.b16 %v1444
      %v1505 = vunpack.c.l.b16 %v1445
      %v1506 = vunpack.c.l.b16 %v1446
      %v1507 = vunpack.c.l.b16 %v1447
      %v1508 = vunpack.c.l.b16 %v1448
      %v1509 = vunpack.c.l.b16 %v1449
      %v1510 = vunpack.c.l.b16 %v1450
      %v1511 = vunpack.c.l.b16 %v1451
      %v1512 = vunpack.c.l.b16 %v1452
      %v1513 = vunpack.c.l.b16 %v1453
      %v1514 = vunpack.c.l.b16 %v1454
      %v1515 = vunpack.c.l.b16 %v1455
      %v1516 = vunpack.c.l.b16 %v1456
      %v1517 = vunpack.c.l.b16 %v1457
      %v1518 = vunpack.c.l.b16 %v1458
      %v1519 = vunpack.c.l.b16 %v1459
      %v1520 = vpack.c.b16 %v1505, %v1504
      %v1521 = vpack.c.b16 %v1507, %v1506
      %v1522 = vpack.c.b16 %v1509, %v1508
      %v1523 = vpack.c.b16 %v1511, %v1510
      %v1524 = vpack.c.b16 %v1513, %v1512
      %v1525 = vpack.c.b16 %v1515, %v1514
      %v1526 = vpack.c.b16 %v1517, %v1516
      %v1527 = vpack.c.b16 %v1519, %v1518
      %1536 = vmatpush.bf16.msra.mxu0 %v1527
      %1537 = vmatpush.bf16.msra.mxu0 %v1526
      %1538 = vmatpush.bf16.msra.mxu0 %v1525
      %1539 = vmatpush.bf16.msra.mxu0 %v1524
      %1540 = vmatpush.bf16.msra.mxu0 %v1523
      %1541 = vmatpush.bf16.msra.mxu0 %v1522
      %1542 = vmatpush.bf16.msra.mxu0 %v1521
      %1543 = vmatpush.bf16.msra.mxu0 %v1520
      %1544 = vmatmul.bf16.gmra.mxu0 %v1478
      %v1545 = vpop.f32.mrf.mxu0
      %v1546 = vadd.f32 0.0, %v1545
      %v1547 = vpop.f32.mrf.mxu0
      %v1548 = vadd.f32 0.0, %v1547
      %1549 = vmatmul.bf16.gmra.mxu0 %v1479
      %v1550 = vpop.f32.mrf.mxu0
      %v1551 = vadd.f32 0.0, %v1550
      %v1552 = vpop.f32.mrf.mxu0
      %v1553 = vadd.f32 0.0, %v1552
      %1554 = vmatmul.bf16.gmra.mxu0 %v1480
      %v1555 = vpop.f32.mrf.mxu0
      %v1556 = vadd.f32 0.0, %v1555
      %v1557 = vpop.f32.mrf.mxu0
      %v1558 = vadd.f32 0.0, %v1557
      %1559 = vmatmul.bf16.gmra.mxu0 %v1481
      %v1560 = vpop.f32.mrf.mxu0
      %v1561 = vadd.f32 0.0, %v1560
      %v1562 = vpop.f32.mrf.mxu0
      %v1563 = vadd.f32 0.0, %v1562
      %1564 = vmatmul.bf16.gmra.mxu0 %v1482
      %v1565 = vpop.f32.mrf.mxu0
      %v1566 = vadd.f32 0.0, %v1565
      %v1567 = vpop.f32.mrf.mxu0
      %1568 = vdwg.mxu0
      %v1569 = vadd.f32 %v1424, %v1546
      %v1570 = vadd.f32 %v1425, %v1548
      %v1571 = vadd.f32 %v1426, %v1551
      %v1572 = vadd.f32 %v1427, %v1553
      %v1573 = vadd.f32 %v1428, %v1556
      %v1574 = vadd.f32 %v1429, %v1558
      %v1575 = vadd.f32 %v1430, %v1561
      %v1576 = vadd.f32 %v1431, %v1563
      %v1577 = vadd.f32 %v1432, %v1566
      %v1578 = vld [vmem:[%s1288] sm:$0xf]
      %v1579 = vld [vmem:[%s1288 + $0x4] sm:$0xf]
      %v1580 = vld [vmem:[%s1288 + $0x8] sm:$0xf]
      %v1581 = vld [vmem:[%s1288 + $0xc] sm:$0xf]
      %v1582 = vld [vmem:[%s1288 + $0x10] sm:$0xf]
      %v1583 = vld [vmem:[%s1288 + $0x14] sm:$0xf]
      %v1584 = vld [vmem:[%s1288 + $0x18] sm:$0xf]
      %v1585 = vld [vmem:[%s1288 + $0x1c] sm:$0xf]
      %v1586 = vld [vmem:[%s1288 + $0x20] sm:$0xf]
      %v1587 = vld [vmem:[%s1288 + $0x24] sm:$0x1]
      %s1588 = scalar_lea.vmem %s0, 320
      %v1589 = vld [vmem:[%s1588] sm:$0xf]
      %v1590 = vld [vmem:[%s1588 + $0x4] sm:$0xf]
      %v1591 = vld [vmem:[%s1588 + $0x8] sm:$0xf]
      %v1592 = vld [vmem:[%s1588 + $0xc] sm:$0xf]
      %v1593 = vld [vmem:[%s1588 + $0x10] sm:$0xf]
      %v1594 = vld [vmem:[%s1588 + $0x14] sm:$0xf]
      %v1595 = vld [vmem:[%s1588 + $0x18] sm:$0xf]
      %v1596 = vld [vmem:[%s1588 + $0x1c] sm:$0xf]
      %v1597 = vld [vmem:[%s1588 + $0x20] sm:$0xf]
      %v1598 = vld [vmem:[%s1588 + $0x24] sm:$0xf]
      %v1599 = vld [vmem:[%s1588 + $0x28] sm:$0xf]
      %v1600 = vld [vmem:[%s1588 + $0x2c] sm:$0xf]
      %v1601 = vld [vmem:[%s1588 + $0x30] sm:$0xf]
      %v1602 = vld [vmem:[%s1588 + $0x34] sm:$0xf]
      %v1603 = vld [vmem:[%s1588 + $0x38] sm:$0xf]
      %v1604 = vld [vmem:[%s1588 + $0x3c] sm:$0xf]
      %v1615 = vunpack.c.l.b16 %v1578
      %v1616 = vunpack.c.l.b16 %v1579
      %v1617 = vunpack.c.l.b16 %v1580
      %v1618 = vunpack.c.l.b16 %v1581
      %v1619 = vunpack.c.l.b16 %v1582
      %v1620 = vunpack.c.l.b16 %v1583
      %v1621 = vunpack.c.l.b16 %v1584
      %v1622 = vunpack.c.l.b16 %v1585
      %v1623 = vunpack.c.l.b16 %v1586
      %v1624 = vunpack.c.l.b16 %v1587
      %v1625 = vpack.c.b16 %v1616, %v1615
      %v1626 = vpack.c.b16 %v1618, %v1617
      %v1627 = vpack.c.b16 %v1620, %v1619
      %v1628 = vpack.c.b16 %v1622, %v1621
      %v1629 = vpack.c.b16 %v1624, %v1623
      %v1631 = vshrl.u32 %v1625, 16
      %v1633 = vshll.u32 %v1625, 16
      %v1635 = vrot.slane %v1633, 1
      %v1636 = vor.u32 %v1631, %v1635
      %v1638 = vshll.u32 %v1626, 16
      %v1640 = vrot.slane %v1638, 1
      %v1641 = vsel %vm1153, %v1636, %v1640
      %v1642 = vshrl.u32 %v1626, 16
      %v1644 = vor.u32 %v1642, %v1640
      %v1646 = vshll.u32 %v1627, 16
      %v1648 = vrot.slane %v1646, 1
      %v1649 = vsel %vm1153, %v1644, %v1648
      %v1650 = vshrl.u32 %v1627, 16
      %v1652 = vor.u32 %v1650, %v1648
      %v1654 = vshll.u32 %v1628, 16
      %v1656 = vrot.slane %v1654, 1
      %v1657 = vsel %vm1153, %v1652, %v1656
      %v1658 = vshrl.u32 %v1628, 16
      %v1660 = vor.u32 %v1658, %v1656
      %v1662 = vshll.u32 %v1629, 16
      %v1664 = vrot.slane %v1662, 1
      %v1665 = vsel %vm1153, %v1660, %v1664
      %v1666 = vshrl.u32 %v1629, 16
      %v1668 = vor.u32 %v1666, %v1664
      %v1690 = vunpack.c.l.b16 %v1589
      %v1691 = vunpack.c.l.b16 %v1590
      %v1692 = vunpack.c.l.b16 %v1591
      %v1693 = vunpack.c.l.b16 %v1592
      %v1694 = vunpack.c.l.b16 %v1593
      %v1695 = vunpack.c.l.b16 %v1594
      %v1696 = vunpack.c.l.b16 %v1595
      %v1697 = vunpack.c.l.b16 %v1596
      %v1698 = vunpack.c.l.b16 %v1597
      %v1699 = vunpack.c.l.b16 %v1598
      %v1700 = vunpack.c.l.b16 %v1599
      %v1701 = vunpack.c.l.b16 %v1600
      %v1702 = vunpack.c.l.b16 %v1601
      %v1703 = vunpack.c.l.b16 %v1602
      %v1704 = vunpack.c.l.b16 %v1603
      %v1705 = vunpack.c.l.b16 %v1604
      %v1706 = vpack.c.b16 %v1691, %v1690
      %v1707 = vpack.c.b16 %v1693, %v1692
      %v1708 = vpack.c.b16 %v1695, %v1694
      %v1709 = vpack.c.b16 %v1697, %v1696
      %v1710 = vpack.c.b16 %v1699, %v1698
      %v1711 = vpack.c.b16 %v1701, %v1700
      %v1712 = vpack.c.b16 %v1703, %v1702
      %v1713 = vpack.c.b16 %v1705, %v1704
      %1722 = vmatpush.bf16.msra.mxu0 %v1713
      %1723 = vmatpush.bf16.msra.mxu0 %v1712
      %1724 = vmatpush.bf16.msra.mxu0 %v1711
      %1725 = vmatpush.bf16.msra.mxu0 %v1710
      %1726 = vmatpush.bf16.msra.mxu0 %v1709
      %1727 = vmatpush.bf16.msra.mxu0 %v1708
      %1728 = vmatpush.bf16.msra.mxu0 %v1707
      %1729 = vmatpush.bf16.msra.mxu0 %v1706
      %1730 = vmatmul.bf16.gmra.mxu0 %v1641
      %v1731 = vpop.f32.mrf.mxu0
      %v1732 = vadd.f32 0.0, %v1731
      %v1733 = vpop.f32.mrf.mxu0
      %v1734 = vadd.f32 0.0, %v1733
      %1735 = vmatmul.bf16.gmra.mxu0 %v1649
      %v1736 = vpop.f32.mrf.mxu0
      %v1737 = vadd.f32 0.0, %v1736
      %v1738 = vpop.f32.mrf.mxu0
      %v1739 = vadd.f32 0.0, %v1738
      %1740 = vmatmul.bf16.gmra.mxu0 %v1657
      %v1741 = vpop.f32.mrf.mxu0
      %v1742 = vadd.f32 0.0, %v1741
      %v1743 = vpop.f32.mrf.mxu0
      %v1744 = vadd.f32 0.0, %v1743
      %1745 = vmatmul.bf16.gmra.mxu0 %v1665
      %v1746 = vpop.f32.mrf.mxu0
      %v1747 = vadd.f32 0.0, %v1746
      %v1748 = vpop.f32.mrf.mxu0
      %v1749 = vadd.f32 0.0, %v1748
      %1750 = vmatmul.bf16.gmra.mxu0 %v1668
      %v1751 = vpop.f32.mrf.mxu0
      %v1752 = vadd.f32 0.0, %v1751
      %v1753 = vpop.f32.mrf.mxu0
      %1754 = vdwg.mxu0
      %v1755 = vadd.f32 %v1569, %v1732
      %v1756 = vadd.f32 %v1570, %v1734
      %v1757 = vadd.f32 %v1571, %v1737
      %v1758 = vadd.f32 %v1572, %v1739
      %v1759 = vadd.f32 %v1573, %v1742
      %v1760 = vadd.f32 %v1574, %v1744
      %v1761 = vadd.f32 %v1575, %v1747
      %v1762 = vadd.f32 %v1576, %v1749
      %v1763 = vadd.f32 %v1577, %v1752
      %v1764 = vld [vmem:[#allocation7 + $0x4] sm:$0xf]
      %v1765 = vld [vmem:[#allocation7 + $0x8] sm:$0xf]
      %v1766 = vld [vmem:[#allocation7 + $0xc] sm:$0xf]
      %v1767 = vld [vmem:[#allocation7 + $0x10] sm:$0xf]
      %v1768 = vld [vmem:[#allocation7 + $0x14] sm:$0xf]
      %v1769 = vld [vmem:[#allocation7 + $0x18] sm:$0xf]
      %v1770 = vld [vmem:[#allocation7 + $0x1c] sm:$0xf]
      %v1771 = vld [vmem:[#allocation7 + $0x20] sm:$0xf]
      %v1772 = vld [vmem:[#allocation7 + $0x24] sm:$0xf]
      %v1773 = vld [vmem:[#allocation7 + $0x28] sm:$0x1]
      %s1774 = scalar_lea.vmem %s0, 384
      %v1775 = vld [vmem:[%s1774] sm:$0xf]
      %v1776 = vld [vmem:[%s1774 + $0x4] sm:$0xf]
      %v1777 = vld [vmem:[%s1774 + $0x8] sm:$0xf]
      %v1778 = vld [vmem:[%s1774 + $0xc] sm:$0xf]
      %v1779 = vld [vmem:[%s1774 + $0x10] sm:$0xf]
      %v1780 = vld [vmem:[%s1774 + $0x14] sm:$0xf]
      %v1781 = vld [vmem:[%s1774 + $0x18] sm:$0xf]
      %v1782 = vld [vmem:[%s1774 + $0x1c] sm:$0xf]
      %v1783 = vld [vmem:[%s1774 + $0x20] sm:$0xf]
      %v1784 = vld [vmem:[%s1774 + $0x24] sm:$0xf]
      %v1785 = vld [vmem:[%s1774 + $0x28] sm:$0xf]
      %v1786 = vld [vmem:[%s1774 + $0x2c] sm:$0xf]
      %v1787 = vld [vmem:[%s1774 + $0x30] sm:$0xf]
      %v1788 = vld [vmem:[%s1774 + $0x34] sm:$0xf]
      %v1789 = vld [vmem:[%s1774 + $0x38] sm:$0xf]
      %v1790 = vld [vmem:[%s1774 + $0x3c] sm:$0xf]
      %v1801 = vunpack.c.l.b16 %v1764
      %v1802 = vunpack.c.l.b16 %v1765
      %v1803 = vunpack.c.l.b16 %v1766
      %v1804 = vunpack.c.l.b16 %v1767
      %v1805 = vunpack.c.l.b16 %v1768
      %v1806 = vunpack.c.l.b16 %v1769
      %v1807 = vunpack.c.l.b16 %v1770
      %v1808 = vunpack.c.l.b16 %v1771
      %v1809 = vunpack.c.l.b16 %v1772
      %v1810 = vunpack.c.l.b16 %v1773
      %v1811 = vpack.c.b16 %v1802, %v1801
      %v1812 = vpack.c.b16 %v1804, %v1803
      %v1813 = vpack.c.b16 %v1806, %v1805
      %v1814 = vpack.c.b16 %v1808, %v1807
      %v1815 = vpack.c.b16 %v1810, %v1809
      %v1817 = vshrl.u32 %v1811, 16
      %v1819 = vshll.u32 %v1811, 16
      %v1821 = vrot.slane %v1819, 1
      %v1822 = vor.u32 %v1817, %v1821
      %v1824 = vshll.u32 %v1812, 16
      %v1826 = vrot.slane %v1824, 1
      %v1827 = vsel %vm1153, %v1822, %v1826
      %v1828 = vshrl.u32 %v1812, 16
      %v1830 = vor.u32 %v1828, %v1826
      %v1832 = vshll.u32 %v1813, 16
      %v1834 = vrot.slane %v1832, 1
      %v1835 = vsel %vm1153, %v1830, %v1834
      %v1836 = vshrl.u32 %v1813, 16
      %v1838 = vor.u32 %v1836, %v1834
      %v1840 = vshll.u32 %v1814, 16
      %v1842 = vrot.slane %v1840, 1
      %v1843 = vsel %vm1153, %v1838, %v1842
      %v1844 = vshrl.u32 %v1814, 16
      %v1846 = vor.u32 %v1844, %v1842
      %v1848 = vshll.u32 %v1815, 16
      %v1850 = vrot.slane %v1848, 1
      %v1851 = vsel %vm1153, %v1846, %v1850
      %v1852 = vshrl.u32 %v1815, 16
      %v1854 = vor.u32 %v1852, %v1850
      %v1876 = vunpack.c.l.b16 %v1775
      %v1877 = vunpack.c.l.b16 %v1776
      %v1878 = vunpack.c.l.b16 %v1777
      %v1879 = vunpack.c.l.b16 %v1778
      %v1880 = vunpack.c.l.b16 %v1779
      %v1881 = vunpack.c.l.b16 %v1780
      %v1882 = vunpack.c.l.b16 %v1781
      %v1883 = vunpack.c.l.b16 %v1782
      %v1884 = vunpack.c.l.b16 %v1783
      %v1885 = vunpack.c.l.b16 %v1784
      %v1886 = vunpack.c.l.b16 %v1785
      %v1887 = vunpack.c.l.b16 %v1786
      %v1888 = vunpack.c.l.b16 %v1787
      %v1889 = vunpack.c.l.b16 %v1788
      %v1890 = vunpack.c.l.b16 %v1789
      %v1891 = vunpack.c.l.b16 %v1790
      %v1892 = vpack.c.b16 %v1877, %v1876
      %v1893 = vpack.c.b16 %v1879, %v1878
      %v1894 = vpack.c.b16 %v1881, %v1880
      %v1895 = vpack.c.b16 %v1883, %v1882
      %v1896 = vpack.c.b16 %v1885, %v1884
      %v1897 = vpack.c.b16 %v1887, %v1886
      %v1898 = vpack.c.b16 %v1889, %v1888
      %v1899 = vpack.c.b16 %v1891, %v1890
      %1908 = vmatpush.bf16.msra.mxu0 %v1899
      %1909 = vmatpush.bf16.msra.mxu0 %v1898
      %1910 = vmatpush.bf16.msra.mxu0 %v1897
      %1911 = vmatpush.bf16.msra.mxu0 %v1896
      %1912 = vmatpush.bf16.msra.mxu0 %v1895
      %1913 = vmatpush.bf16.msra.mxu0 %v1894
      %1914 = vmatpush.bf16.msra.mxu0 %v1893
      %1915 = vmatpush.bf16.msra.mxu0 %v1892
      %1916 = vmatmul.bf16.gmra.mxu0 %v1827
      %v1917 = vpop.f32.mrf.mxu0
      %v1918 = vadd.f32 0.0, %v1917
      %v1919 = vpop.f32.mrf.mxu0
      %v1920 = vadd.f32 0.0, %v1919
      %1921 = vmatmul.bf16.gmra.mxu0 %v1835
      %v1922 = vpop.f32.mrf.mxu0
      %v1923 = vadd.f32 0.0, %v1922
      %v1924 = vpop.f32.mrf.mxu0
      %v1925 = vadd.f32 0.0, %v1924
      %1926 = vmatmul.bf16.gmra.mxu0 %v1843
      %v1927 = vpop.f32.mrf.mxu0
      %v1928 = vadd.f32 0.0, %v1927
      %v1929 = vpop.f32.mrf.mxu0
      %v1930 = vadd.f32 0.0, %v1929
      %1931 = vmatmul.bf16.gmra.mxu0 %v1851
      %v1932 = vpop.f32.mrf.mxu0
      %v1933 = vadd.f32 0.0, %v1932
      %v1934 = vpop.f32.mrf.mxu0
      %v1935 = vadd.f32 0.0, %v1934
      %1936 = vmatmul.bf16.gmra.mxu0 %v1854
      %v1937 = vpop.f32.mrf.mxu0
      %v1938 = vadd.f32 0.0, %v1937
      %v1939 = vpop.f32.mrf.mxu0
      %1940 = vdwg.mxu0
      %v1941 = vadd.f32 %v1755, %v1918
      %v1942 = vadd.f32 %v1756, %v1920
      %v1943 = vadd.f32 %v1757, %v1923
      %v1944 = vadd.f32 %v1758, %v1925
      %v1945 = vadd.f32 %v1759, %v1928
      %v1946 = vadd.f32 %v1760, %v1930
      %v1947 = vadd.f32 %v1761, %v1933
      %v1948 = vadd.f32 %v1762, %v1935
      %v1949 = vadd.f32 %v1763, %v1938
      %v1950 = vld [vmem:[%s856 + $0x4] sm:$0xf]
      %v1951 = vld [vmem:[%s856 + $0x8] sm:$0xf]
      %v1952 = vld [vmem:[%s856 + $0xc] sm:$0xf]
      %v1953 = vld [vmem:[%s856 + $0x10] sm:$0xf]
      %v1954 = vld [vmem:[%s856 + $0x14] sm:$0xf]
      %v1955 = vld [vmem:[%s856 + $0x18] sm:$0xf]
      %v1956 = vld [vmem:[%s856 + $0x1c] sm:$0xf]
      %v1957 = vld [vmem:[%s856 + $0x20] sm:$0xf]
      %v1958 = vld [vmem:[%s856 + $0x24] sm:$0xf]
      %v1959 = vld [vmem:[%s856 + $0x28] sm:$0x1]
      %s1960 = scalar_lea.vmem %s0, 448
      %v1961 = vld [vmem:[%s1960] sm:$0xf]
      %v1962 = vld [vmem:[%s1960 + $0x4] sm:$0xf]
      %v1963 = vld [vmem:[%s1960 + $0x8] sm:$0xf]
      %v1964 = vld [vmem:[%s1960 + $0xc] sm:$0xf]
      %v1965 = vld [vmem:[%s1960 + $0x10] sm:$0xf]
      %v1966 = vld [vmem:[%s1960 + $0x14] sm:$0xf]
      %v1967 = vld [vmem:[%s1960 + $0x18] sm:$0xf]
      %v1968 = vld [vmem:[%s1960 + $0x1c] sm:$0xf]
      %v1969 = vld [vmem:[%s1960 + $0x20] sm:$0xf]
      %v1970 = vld [vmem:[%s1960 + $0x24] sm:$0xf]
      %v1971 = vld [vmem:[%s1960 + $0x28] sm:$0xf]
      %v1972 = vld [vmem:[%s1960 + $0x2c] sm:$0xf]
      %v1973 = vld [vmem:[%s1960 + $0x30] sm:$0xf]
      %v1974 = vld [vmem:[%s1960 + $0x34] sm:$0xf]
      %v1975 = vld [vmem:[%s1960 + $0x38] sm:$0xf]
      %v1976 = vld [vmem:[%s1960 + $0x3c] sm:$0xf]
      %v1987 = vunpack.c.l.b16 %v1950
      %v1988 = vunpack.c.l.b16 %v1951
      %v1989 = vunpack.c.l.b16 %v1952
      %v1990 = vunpack.c.l.b16 %v1953
      %v1991 = vunpack.c.l.b16 %v1954
      %v1992 = vunpack.c.l.b16 %v1955
      %v1993 = vunpack.c.l.b16 %v1956
      %v1994 = vunpack.c.l.b16 %v1957
      %v1995 = vunpack.c.l.b16 %v1958
      %v1996 = vunpack.c.l.b16 %v1959
      %v1997 = vpack.c.b16 %v1988, %v1987
      %v1998 = vpack.c.b16 %v1990, %v1989
      %v1999 = vpack.c.b16 %v1992, %v1991
      %v2000 = vpack.c.b16 %v1994, %v1993
      %v2001 = vpack.c.b16 %v1996, %v1995
      %v2003 = vshrl.u32 %v1997, 16
      %v2005 = vshll.u32 %v1997, 16
      %v2007 = vrot.slane %v2005, 1
      %v2008 = vor.u32 %v2003, %v2007
      %v2010 = vshll.u32 %v1998, 16
      %v2012 = vrot.slane %v2010, 1
      %v2013 = vsel %vm1153, %v2008, %v2012
      %v2014 = vshrl.u32 %v1998, 16
      %v2016 = vor.u32 %v2014, %v2012
      %v2018 = vshll.u32 %v1999, 16
      %v2020 = vrot.slane %v2018, 1
      %v2021 = vsel %vm1153, %v2016, %v2020
      %v2022 = vshrl.u32 %v1999, 16
      %v2024 = vor.u32 %v2022, %v2020
      %v2026 = vshll.u32 %v2000, 16
      %v2028 = vrot.slane %v2026, 1
      %v2029 = vsel %vm1153, %v2024, %v2028
      %v2030 = vshrl.u32 %v2000, 16
      %v2032 = vor.u32 %v2030, %v2028
      %v2034 = vshll.u32 %v2001, 16
      %v2036 = vrot.slane %v2034, 1
      %v2037 = vsel %vm1153, %v2032, %v2036
      %v2038 = vshrl.u32 %v2001, 16
      %v2040 = vor.u32 %v2038, %v2036
      %v2062 = vunpack.c.l.b16 %v1961
      %v2063 = vunpack.c.l.b16 %v1962
      %v2064 = vunpack.c.l.b16 %v1963
      %v2065 = vunpack.c.l.b16 %v1964
      %v2066 = vunpack.c.l.b16 %v1965
      %v2067 = vunpack.c.l.b16 %v1966
      %v2068 = vunpack.c.l.b16 %v1967
      %v2069 = vunpack.c.l.b16 %v1968
      %v2070 = vunpack.c.l.b16 %v1969
      %v2071 = vunpack.c.l.b16 %v1970
      %v2072 = vunpack.c.l.b16 %v1971
      %v2073 = vunpack.c.l.b16 %v1972
      %v2074 = vunpack.c.l.b16 %v1973
      %v2075 = vunpack.c.l.b16 %v1974
      %v2076 = vunpack.c.l.b16 %v1975
      %v2077 = vunpack.c.l.b16 %v1976
      %v2078 = vpack.c.b16 %v2063, %v2062
      %v2079 = vpack.c.b16 %v2065, %v2064
      %v2080 = vpack.c.b16 %v2067, %v2066
      %v2081 = vpack.c.b16 %v2069, %v2068
      %v2082 = vpack.c.b16 %v2071, %v2070
      %v2083 = vpack.c.b16 %v2073, %v2072
      %v2084 = vpack.c.b16 %v2075, %v2074
      %v2085 = vpack.c.b16 %v2077, %v2076
      %2094 = vmatpush.bf16.msra.mxu0 %v2085
      %2095 = vmatpush.bf16.msra.mxu0 %v2084
      %2096 = vmatpush.bf16.msra.mxu0 %v2083
      %2097 = vmatpush.bf16.msra.mxu0 %v2082
      %2098 = vmatpush.bf16.msra.mxu0 %v2081
      %2099 = vmatpush.bf16.msra.mxu0 %v2080
      %2100 = vmatpush.bf16.msra.mxu0 %v2079
      %2101 = vmatpush.bf16.msra.mxu0 %v2078
      %2102 = vmatmul.bf16.gmra.mxu0 %v2013
      %v2103 = vpop.f32.mrf.mxu0
      %v2104 = vadd.f32 0.0, %v2103
      %v2105 = vpop.f32.mrf.mxu0
      %v2106 = vadd.f32 0.0, %v2105
      %2107 = vmatmul.bf16.gmra.mxu0 %v2021
      %v2108 = vpop.f32.mrf.mxu0
      %v2109 = vadd.f32 0.0, %v2108
      %v2110 = vpop.f32.mrf.mxu0
      %v2111 = vadd.f32 0.0, %v2110
      %2112 = vmatmul.bf16.gmra.mxu0 %v2029
      %v2113 = vpop.f32.mrf.mxu0
      %v2114 = vadd.f32 0.0, %v2113
      %v2115 = vpop.f32.mrf.mxu0
      %v2116 = vadd.f32 0.0, %v2115
      %2117 = vmatmul.bf16.gmra.mxu0 %v2037
      %v2118 = vpop.f32.mrf.mxu0
      %v2119 = vadd.f32 0.0, %v2118
      %v2120 = vpop.f32.mrf.mxu0
      %v2121 = vadd.f32 0.0, %v2120
      %2122 = vmatmul.bf16.gmra.mxu0 %v2040
      %v2123 = vpop.f32.mrf.mxu0
      %v2124 = vadd.f32 0.0, %v2123
      %v2125 = vpop.f32.mrf.mxu0
      %2126 = vdwg.mxu0
      %v2127 = vadd.f32 %v1941, %v2104
      %v2128 = vadd.f32 %v1942, %v2106
      %v2129 = vadd.f32 %v1943, %v2109
      %v2130 = vadd.f32 %v1944, %v2111
      %v2131 = vadd.f32 %v1945, %v2114
      %v2132 = vadd.f32 %v1946, %v2116
      %v2133 = vadd.f32 %v1947, %v2119
      %v2134 = vadd.f32 %v1948, %v2121
      %v2135 = vadd.f32 %v1949, %v2124
      %v2136 = vld [vmem:[#allocation7 + $0x4] sm:$0xe]
      %s2137 = scalar_lea.vmem %s0, 512
      %v2138 = vld [vmem:[%s2137] sm:$0xf]
      %v2139 = vld [vmem:[%s2137 + $0x4] sm:$0xf]
      %v2140 = vld [vmem:[%s2137 + $0x8] sm:$0xf]
      %v2141 = vld [vmem:[%s2137 + $0xc] sm:$0xf]
      %v2142 = vld [vmem:[%s2137 + $0x10] sm:$0xf]
      %v2143 = vld [vmem:[%s2137 + $0x14] sm:$0xf]
      %v2144 = vld [vmem:[%s2137 + $0x18] sm:$0xf]
      %v2145 = vld [vmem:[%s2137 + $0x1c] sm:$0xf]
      %v2146 = vld [vmem:[%s2137 + $0x20] sm:$0xf]
      %v2147 = vld [vmem:[%s2137 + $0x24] sm:$0xf]
      %v2148 = vld [vmem:[%s2137 + $0x28] sm:$0xf]
      %v2149 = vld [vmem:[%s2137 + $0x2c] sm:$0xf]
      %v2150 = vld [vmem:[%s2137 + $0x30] sm:$0xf]
      %v2151 = vld [vmem:[%s2137 + $0x34] sm:$0xf]
      %v2152 = vld [vmem:[%s2137 + $0x38] sm:$0xf]
      %v2153 = vld [vmem:[%s2137 + $0x3c] sm:$0xf]
      %v2155 = vunpack.c.l.b16 %v2136
      %v2156 = vpack.c.b16 %v1802, %v2155
      %vm2157 = vcmask 1046528
      %v2158 = vrot.slane %v2156, 1
      %v2159 = vrot.slane %v1812, 1
      %v2160 = vsel %vm2157, %v2158, %v2159
      %v2161 = vrot.slane %v1813, 1
      %v2162 = vsel %vm2157, %v2159, %v2161
      %v2163 = vrot.slane %v1814, 1
      %v2164 = vsel %vm2157, %v2161, %v2163
      %v2165 = vrot.slane %v1815, 1
      %v2166 = vsel %vm2157, %v2163, %v2165
      %v2188 = vunpack.c.l.b16 %v2138
      %v2189 = vunpack.c.l.b16 %v2139
      %v2190 = vunpack.c.l.b16 %v2140
      %v2191 = vunpack.c.l.b16 %v2141
      %v2192 = vunpack.c.l.b16 %v2142
      %v2193 = vunpack.c.l.b16 %v2143
      %v2194 = vunpack.c.l.b16 %v2144
      %v2195 = vunpack.c.l.b16 %v2145
      %v2196 = vunpack.c.l.b16 %v2146
      %v2197 = vunpack.c.l.b16 %v2147
      %v2198 = vunpack.c.l.b16 %v2148
      %v2199 = vunpack.c.l.b16 %v2149
      %v2200 = vunpack.c.l.b16 %v2150
      %v2201 = vunpack.c.l.b16 %v2151
      %v2202 = vunpack.c.l.b16 %v2152
      %v2203 = vunpack.c.l.b16 %v2153
      %v2204 = vpack.c.b16 %v2189, %v2188
      %v2205 = vpack.c.b16 %v2191, %v2190
      %v2206 = vpack.c.b16 %v2193, %v2192
      %v2207 = vpack.c.b16 %v2195, %v2194
      %v2208 = vpack.c.b16 %v2197, %v2196
      %v2209 = vpack.c.b16 %v2199, %v2198
      %v2210 = vpack.c.b16 %v2201, %v2200
      %v2211 = vpack.c.b16 %v2203, %v2202
      %2220 = vmatpush.bf16.msra.mxu0 %v2211
      %2221 = vmatpush.bf16.msra.mxu0 %v2210
      %2222 = vmatpush.bf16.msra.mxu0 %v2209
      %2223 = vmatpush.bf16.msra.mxu0 %v2208
      %2224 = vmatpush.bf16.msra.mxu0 %v2207
      %2225 = vmatpush.bf16.msra.mxu0 %v2206
      %2226 = vmatpush.bf16.msra.mxu0 %v2205
      %2227 = vmatpush.bf16.msra.mxu0 %v2204
      %2228 = vmatmul.bf16.gmra.mxu0 %v2160
      %v2229 = vpop.f32.mrf.mxu0
      %v2230 = vadd.f32 0.0, %v2229
      %v2231 = vpop.f32.mrf.mxu0
      %v2232 = vadd.f32 0.0, %v2231
      %2233 = vmatmul.bf16.gmra.mxu0 %v2162
      %v2234 = vpop.f32.mrf.mxu0
      %v2235 = vadd.f32 0.0, %v2234
      %v2236 = vpop.f32.mrf.mxu0
      %v2237 = vadd.f32 0.0, %v2236
      %2238 = vmatmul.bf16.gmra.mxu0 %v2164
      %v2239 = vpop.f32.mrf.mxu0
      %v2240 = vadd.f32 0.0, %v2239
      %v2241 = vpop.f32.mrf.mxu0
      %v2242 = vadd.f32 0.0, %v2241
      %2243 = vmatmul.bf16.gmra.mxu0 %v2166
      %v2244 = vpop.f32.mrf.mxu0
      %v2245 = vadd.f32 0.0, %v2244
      %v2246 = vpop.f32.mrf.mxu0
      %v2247 = vadd.f32 0.0, %v2246
      %2248 = vmatmul.bf16.gmra.mxu0 %v2165
      %v2249 = vpop.f32.mrf.mxu0
      %v2250 = vadd.f32 0.0, %v2249
      %v2251 = vpop.f32.mrf.mxu0
      %2252 = vdwg.mxu0
      %v2253 = vadd.f32 %v2127, %v2230
      %v2254 = vadd.f32 %v2128, %v2232
      %v2255 = vadd.f32 %v2129, %v2235
      %v2256 = vadd.f32 %v2130, %v2237
      %v2257 = vadd.f32 %v2131, %v2240
      %v2258 = vadd.f32 %v2132, %v2242
      %v2259 = vadd.f32 %v2133, %v2245
      %v2260 = vadd.f32 %v2134, %v2247
      %v2261 = vadd.f32 %v2135, %v2250
      %v2262 = vld [vmem:[#allocation8] sm:$0x1]
      %v2264 = vperm.slane %v2262, 0
      %v2266 = vadd.f32 %v2253, %v2264
      %v2267 = vadd.f32 %v2254, %v2264
      %v2268 = vadd.f32 %v2255, %v2264
      %v2269 = vadd.f32 %v2256, %v2264
      %v2270 = vadd.f32 %v2257, %v2264
      %v2271 = vadd.f32 %v2258, %v2264
      %v2272 = vadd.f32 %v2259, %v2264
      %v2273 = vadd.f32 %v2260, %v2264
      %v2274 = vadd.f32 %v2261, %v2264
      %2275 = vst [vmem:[%s176] sm:$0xff] %v2266
      %2276 = vst [vmem:[%s176 + $0x8] sm:$0xff] %v2267
      %2277 = vst [vmem:[%s176 + $0x10] sm:$0xff] %v2268
      %2278 = vst [vmem:[%s176 + $0x18] sm:$0xff] %v2269
      %2279 = vst [vmem:[%s176 + $0x20] sm:$0xff] %v2270
      %2280 = vst [vmem:[%s176 + $0x28] sm:$0xff] %v2271
      %2281 = vst [vmem:[%s176 + $0x30] sm:$0xff] %v2272
      %2282 = vst [vmem:[%s176 + $0x38] sm:$0xff] %v2273
      %2283 = vst [vmem:[%s176 + $0x40] sm:$0xff] %v2274
      %p2284 = scmp.lt.s32.totalorder %s20, 1
      %s2285 = scalar_select %p2284, %s20, 1
      %s2286 = smul.addr %s2285, 9
      %s2287 = smul.addr %s2286, 8
      %s2288 = scalar_lea.vmem %s4, %s2287
      // Predicated region
      $region33: #{_downsample_conv_impl.2} parent=31 // pred_check
        %p2289 = pneg %p106
      $region34: #{_downsample_conv_impl.2} parent=31 // pred_check_branch
        %2291 = sbr.rel (%p2289) target = $region36
      $region35: #{_downsample_conv_impl.2} parent=31 // pred_region
        _
      $region36: #{_downsample_conv_impl.2} parent=31 // pred_fallthru
        _
    $region32: #{_downsample_conv_impl.2} parent=5 // pred_fallthru
      _
    %p2292 = scmp.le.s32.totalorder 2, %s15
    // Predicated region
    $region37: #{_downsample_conv_impl.2} parent=5 // pred_check
      %p2293 = pneg %p2292
    $region38: #{_downsample_conv_impl.2} parent=5 // pred_check_branch
      %2295 = sbr.rel (%p2293) target = $region40
    $region39: #{_downsample_conv_impl.2} parent=5 // pred_region
      %s2296 = ssub.s32 %s15, 2
      // Predicated region
      $region41: #{_downsample_conv_impl.2} parent=39 // pred_check
        %p2297 = pneg %p112
      $region42: #{_downsample_conv_impl.2} parent=39 // pred_check_branch
        %2299 = sbr.rel (%p2297) target = $region44
      $region43: #{_downsample_conv_impl.2} parent=39 // pred_region
        %p2300 = scmp.lt.s32.totalorder %s21, 1
        %s2301 = scalar_select %p2300, %s21, 1
        %s2302 = smul.addr %s2301, 9
        %s2303 = smul.addr %s2302, 8
        %s2304 = scalar_lea.vmem %s4, %s2303
      $region44: #{_downsample_conv_impl.2} parent=39 // pred_fallthru
        _
    $region40: #{_downsample_conv_impl.2} parent=5 // pred_fallthru
      _
  $region6: #{_downsample_conv_impl.2} parent=0 // loop_footer
    %s19 = sadd.s32 1, %s15
  $region7: #{_downsample_conv_impl.2} parent=0 // loop_footer_branch
    %14 = sbr.rel target = $region3
  $region8: #{_downsample_conv_impl.2} parent=0 // loop_exit
    _

// kernel: _downsample_conv_impl.2
$region0: #{_downsample_conv_impl.2}
  #allocation0 [shape = 'u32[]', space=smem, size = 0x4, offset = 0x4, fixed_abs, tag = 'smem constant byte address 0x4 - core index']
  #allocation1 [shape = 'u32[72,128]{1,0:T(1,128)}', space=vmem, size = 0x9000, scoped, tag = 'internal scratch']
  #allocation2 [shape = 'u32[2048]{0}', space=vmem, size = 0x2000, scoped, tag = 'scoped memory for _downsample_conv_impl.2']
  #allocation3 [shape = 'u32[2048]{0}', space=vmem, size = 0x2000, scoped, tag = 'scoped memory for _downsample_conv_impl.2']
  #allocation4 [shape = 'u32[2048]{0}', space=vmem, size = 0x2000, scoped, tag = 'scoped memory for _downsample_conv_impl.2']
  #allocation5 [shape = 'u32[2048]{0}', space=vmem, size = 0x2000, scoped, tag = 'scoped memory for _downsample_conv_impl.2']
  #allocation6 [shape = 'u32[2048]{0}', space=vmem, size = 0x2000, scoped, tag = 'scoped memory for _downsample_conv_impl.2']
  %s0 = inlined_call_operand.vmem [shape: bf16[9,128,128], index: 0, kind: input, shape index: {}]
  %s1 = inlined_call_operand.vmem [shape: bf16[2,4,81,128], index: 1, kind: input, shape index: {}]
  %s2 = inlined_call_operand.<no memory space> [shape: bf16[], index: 2, kind: input, shape index: {}]
  %s3 = inlined_call_operand.vmem [shape: f32[128], index: 3, kind: input, shape index: {}]
  %s4 = inlined_call_operand.vmem [shape: f32[2,72,128], index: 4, kind: output, shape index: {}]
  %s5 = sld [smem:[#allocation0]]
  $region45: #{_downsample_conv_impl.2} parent=0
    _
  %s7 = ssub.s32 1, %s5
  %s8 = scalar_select 0, %s7, %s5
  %v9 = vstv %s2
  %v10 = vunpack.i.l.bf16 %v9
  %v12 = vunpack.i.h.bf16 %v9
  loop: start=0, step=1, limit=4
  $region2: #{_downsample_conv_impl.2} parent=0 // loop_pre_header
    _
  $region3: #{_downsample_conv_impl.2} parent=0 // loop_header
    %s15 = sphi 0, %s19
    %p16 = scmp.ge.s32.totalorder %s15, 4
    %s25 = sphi 0, %s27
    %s28 = sphi 0, %s25
    %s29 = sphi 0, %s28
    %s45 = sphi 0, %s29
    %s49 = sphi 0, %s49
    %s51 = sphi 0, %s49
    %s52 = sphi 0, %s51
    %s66 = sphi 0, %s52
    %s70 = sphi 0, %s70
    %s72 = sphi 0, %s70
    %s73 = sphi 0, %s72
    %s87 = sphi 0, %s73
    %s93 = sphi 0, %s95
    %s96 = sphi 0, %s93
    %s97 = sphi 0, %s96
    %s113 = sphi 0, %s97
  $region4: #{_downsample_conv_impl.2} parent=0 // loop_header_branch
    %18 = sbr.rel (%p16) target = $region8
  $region5: #{_downsample_conv_impl.2} parent=0 // loop_body
    %s20 = ssub.s32 %s15, 1
    %s21 = ssub.s32 %s15, 2
    %s22 = sadd.s32 %s15, 1
    %s23 = ssub.s32 %s15, %s22
    %p24 = scmp.eq.s32.totalorder %s23, 0
    %s26 = sadd.s32 %s25, 1
    %s27 = scalar_select %p24, %s25, %s26
    %p30 = pneg %p24
    %p31 = scmp.eq.s32.totalorder %s15, 1
    %p32 = por %p30, %p31
    %p33 = scmp.ne.s32.totalorder %s25, %s28
    %p34 = scmp.eq.s32.totalorder %s15, 0
    %p35 = por %p33, %p34
    %p36 = scmp.ne.s32.totalorder %s25, %s28
    %p37 = scmp.eq.s32.totalorder %s20, 1
    %p38 = por %p36, %p37
    %p39 = scmp.ne.s32.totalorder %s28, %s29
    %p40 = scmp.eq.s32.totalorder %s20, 0
    %p41 = por %p39, %p40
    %p42 = scmp.ne.s32.totalorder %s28, %s29
    %p43 = scmp.eq.s32.totalorder %s21, 1
    %p44 = por %p42, %p43
    %p46 = scmp.ne.s32.totalorder %s29, %s45
    %p47 = scmp.eq.s32.totalorder %s21, 0
    %p48 = por %p46, %p47
    %s50 = sadd.s32 %s49, 1
    %p53 = scmp.eq.s32.totalorder %s15, 1
    %p54 = scmp.ne.s32.totalorder %s49, %s51
    %p55 = scmp.eq.s32.totalorder %s15, 0
    %p56 = por %p54, %p55
    %p57 = scmp.ne.s32.totalorder %s49, %s51
    %p58 = scmp.eq.s32.totalorder %s20, 1
    %p59 = por %p57, %p58
    %p60 = scmp.ne.s32.totalorder %s51, %s52
    %p61 = scmp.eq.s32.totalorder %s20, 0
    %p62 = por %p60, %p61
    %p63 = scmp.ne.s32.totalorder %s51, %s52
    %p64 = scmp.eq.s32.totalorder %s21, 1
    %p65 = por %p63, %p64
    %p67 = scmp.ne.s32.totalorder %s52, %s66
    %p68 = scmp.eq.s32.totalorder %s21, 0
    %p69 = por %p67, %p68
    %s71 = sadd.s32 %s70, 1
    %p74 = scmp.eq.s32.totalorder %s15, 1
    %p75 = scmp.ne.s32.totalorder %s70, %s72
    %p76 = scmp.eq.s32.totalorder %s15, 0
    %p77 = por %p75, %p76
    %p78 = scmp.ne.s32.totalorder %s70, %s72
    %p79 = scmp.eq.s32.totalorder %s20, 1
    %p80 = por %p78, %p79
    %p81 = scmp.ne.s32.totalorder %s72, %s73
    %p82 = scmp.eq.s32.totalorder %s20, 0
    %p83 = por %p81, %p82
    %p84 = scmp.ne.s32.totalorder %s72, %s73
    %p85 = scmp.eq.s32.totalorder %s21, 1
    %p86 = por %p84, %p85
    %p88 = scmp.ne.s32.totalorder %s73, %s87
    %p89 = scmp.eq.s32.totalorder %s21, 0
    %p90 = por %p88, %p89
    %s91 = ssub.s32 %s15, %s22
    %p92 = scmp.eq.s32.totalorder %s91, 0
    %s94 = sadd.s32 %s93, 1
    %s95 = scalar_select %p92, %s93, %s94
    %p98 = pneg %p92
    %p99 = scmp.eq.s32.totalorder %s15, 1
    %p100 = por %p98, %p99
    %p101 = scmp.ne.s32.totalorder %s93, %s96
    %p102 = scmp.eq.s32.totalorder %s15, 0
    %p103 = por %p101, %p102
    %p104 = scmp.ne.s32.totalorder %s93, %s96
    %p105 = scmp.eq.s32.totalorder %s20, 1
    %p106 = por %p104, %p105
    %p107 = scmp.ne.s32.totalorder %s96, %s97
    %p108 = scmp.eq.s32.totalorder %s20, 0
    %p109 = por %p107, %p108
    %p110 = scmp.ne.s32.totalorder %s96, %s97
    %p111 = scmp.eq.s32.totalorder %s21, 1
    %p112 = por %p110, %p111
    %p114 = scmp.ne.s32.totalorder %s97, %s113
    %p115 = scmp.eq.s32.totalorder %s21, 0
    %p116 = por %p114, %p115
    %p117 = scmp.le.s32.totalorder 1, %s15
    %p118 = scmp.lt.s32.totalorder %s15, 3
    %p119 = pnand %p117, %p118
    %p120 = pneg %p119
    // Predicated region
    $region9: #{_downsample_conv_impl.2} parent=5 // pred_check
      _
    $region10: #{_downsample_conv_impl.2} parent=5 // pred_check_branch
      %122 = sbr.rel (%p119) target = $region12
    $region11: #{_downsample_conv_impl.2} parent=5 // pred_region
      %s123 = ssub.s32 %s15, 1
      // Predicated region
      $region13: #{_downsample_conv_impl.2} parent=11 // pred_check
        %p124 = pneg %p62
      $region14: #{_downsample_conv_impl.2} parent=11 // pred_check_branch
        %126 = sbr.rel (%p124) target = $region16
      $region15: #{_downsample_conv_impl.2} parent=11 // pred_region
        _
      $region16: #{_downsample_conv_impl.2} parent=11 // pred_fallthru
        _
      // Predicated region
      $region17: #{_downsample_conv_impl.2} parent=11 // pred_check
        %p127 = pneg %p83
      $region18: #{_downsample_conv_impl.2} parent=11 // pred_check_branch
        %129 = sbr.rel (%p127) target = $region20
      $region19: #{_downsample_conv_impl.2} parent=11 // pred_region
        _
      $region20: #{_downsample_conv_impl.2} parent=11 // pred_fallthru
        _
    $region12: #{_downsample_conv_impl.2} parent=5 // pred_fallthru
      _
    %p130 = scmp.lt.s32.totalorder %s15, 2
    // Predicated region
    $region21: #{_downsample_conv_impl.2} parent=5 // pred_check
      %p131 = pneg %p130
    $region22: #{_downsample_conv_impl.2} parent=5 // pred_check_branch
      %133 = sbr.rel (%p131) target = $region24
    $region23: #{_downsample_conv_impl.2} parent=5 // pred_region
      // Predicated region
      $region25: #{_downsample_conv_impl.2} parent=23 // pred_check
        %p134 = pneg %p35
      $region26: #{_downsample_conv_impl.2} parent=23 // pred_check_branch
        %136 = sbr.rel (%p134) target = $region28
      $region27: #{_downsample_conv_impl.2} parent=23 // pred_region
        %p137 = scmp.lt.s32.totalorder %s15, 1
        %s138 = scalar_select %p137, %s15, 1
        %s139 = smul.addr %s138, 44
        %s140 = smul.addr %s139, 4
        %s141 = scalar_lea.vmem %s1, %s140
      $region28: #{_downsample_conv_impl.2} parent=23 // pred_fallthru
        _
    $region24: #{_downsample_conv_impl.2} parent=5 // pred_fallthru
      _
    %p142 = scmp.le.s32.totalorder 1, %s15
    %p143 = scmp.lt.s32.totalorder %s15, 3
    %p144 = pnand %p142, %p143
    %p145 = pneg %p144
    // Predicated region
    $region29: #{_downsample_conv_impl.2} parent=5 // pred_check
      _
    $region30: #{_downsample_conv_impl.2} parent=5 // pred_check_branch
      %147 = sbr.rel (%p144) target = $region32
    $region31: #{_downsample_conv_impl.2} parent=5 // pred_region
      #allocation7 [shape = 'u8[90112]{0}', space=vmem, size = 0x16000, dematerialized = true, scoped, tag = 'FusionAdapter Buffer %fusion.1 = bf16[2,4,88,128]{3,2,1,0:T(8,128)(2,1)} fusion(%param_1.3, %param_2.2), kind=kLoop, calls=%fused_computation.2.clone, metadata={op_name="jit(_downsample_conv_impl)/jit(_pad)/pad" stack_frame_id=12}']
      #allocation8 [shape = 'u8[512]{0}', space=vmem, size = 0x400, dematerialized = true, scoped, tag = 'FusionAdapter Buffer %fusion.2 = f32[1,128]{1,0:T(1,128)} fusion(%param_3.1), kind=kLoop, calls=%fused_computation.5.clone, metadata={op_name="jit(_downsample_conv_impl)/reshape" stack_frame_id=14}']
      %s148 = ssub.s32 %s15, 1
      %p149 = scmp.lt.s32.totalorder %s20, 1
      %s150 = scalar_select %p149, %s20, 1
      %s151 = smul.addr %s150, 44
      %s152 = smul.addr %s151, 4
      %s153 = scalar_lea.vmem %s1, %s152
      %p154 = pneg %p41
      %p155 = pneg %p38
      %p156 = pneg %p62
      %p157 = pneg %p59
      %p158 = pneg %p83
      %p159 = pneg %p80
      %p160 = pneg %p109
      %p161 = pneg %p106
      %p162 = scmp.lt.s32.totalorder %s20, 1
      %s163 = scalar_select %p162, %s20, 1
      %s164 = smul.addr %s163, 9
      %s165 = smul.addr %s164, 8
      %s166 = scalar_lea.vmem %s4, %s165
      %p167 = scmp.lt.s32.totalorder %s20, 1
      %s168 = scalar_select %p167, %s20, 1
      %s169 = smul.addr %s168, 44
      %s170 = smul.addr %s169, 4
      %s171 = scalar_lea.vmem %s1, %s170
      %p172 = scmp.lt.s32.totalorder %s20, 1
      %s173 = scalar_select %p172, %s20, 1
      %s174 = smul.addr %s173, 9
      %s175 = smul.addr %s174, 8
      %s176 = scalar_lea.vmem %s4, %s175
      %v177 = vld [vmem:[%s171] sm:$0xf]
      %v178 = vunpack.c.l.bf16 %v177
      %v179 = vunpack.c.h.bf16 %v177
      %v180 = vlaneseq
      %v181 = vshrl.u32 %v180, 7
      %vm183 = vcmp.lt.s32.totalorder %v181, 81
      %v184 = vsel %vm183, %v178, %v10
      %v185 = vpack.c.bf16 0.0, %v184
      %s187 = ssub.s32 16, 1
      %188 = vst [vmem:[#allocation7] sm:%s187] %v185
      %s189 = scalar_lea.vmem %s171, 4
      %v190 = vld [vmem:[%s189] sm:$0xf]
      %v191 = vunpack.c.l.bf16 %v190
      %v192 = vunpack.c.h.bf16 %v190
      %v193 = vlaneseq
      %v194 = vshrl.u32 %v193, 7
      %v195 = vadd.s32 %v194, 8
      %vm196 = vcmp.lt.s32.totalorder %v195, 81
      %v197 = vsel %vm196, %v191, %v10
      %s198 = scalar_lea.vmem [#allocation7], 4
      %v199 = vpack.c.bf16 0.0, %v197
      %s201 = ssub.s32 16, 1
      %202 = vst [vmem:[%s198] sm:%s201] %v199
      %s203 = scalar_lea.vmem %s171, 8
      %v204 = vld [vmem:[%s203] sm:$0xf]
      %v205 = vunpack.c.l.bf16 %v204
      %v206 = vunpack.c.h.bf16 %v204
      %v207 = vlaneseq
      %v208 = vshrl.u32 %v207, 7
      %v209 = vadd.s32 %v208, 16
      %vm210 = vcmp.lt.s32.totalorder %v209, 81
      %v211 = vsel %vm210, %v205, %v10
      %s212 = scalar_lea.vmem [#allocation7], 8
      %v213 = vpack.c.bf16 0.0, %v211
      %s215 = ssub.s32 16, 1
      %216 = vst [vmem:[%s212] sm:%s215] %v213
      %s217 = scalar_lea.vmem %s171, 12
      %v218 = vld [vmem:[%s217] sm:$0xf]
      %v219 = vunpack.c.l.bf16 %v218
      %v220 = vunpack.c.h.bf16 %v218
      %v221 = vlaneseq
      %v222 = vshrl.u32 %v221, 7
      %v223 = vadd.s32 %v222, 24
      %vm224 = vcmp.lt.s32.totalorder %v223, 81
      %v225 = vsel %vm224, %v219, %v10
      %s226 = scalar_lea.vmem [#allocation7], 12
      %v227 = vpack.c.bf16 0.0, %v225
      %s229 = ssub.s32 16, 1
      %230 = vst [vmem:[%s226] sm:%s229] %v227
      %s231 = scalar_lea.vmem %s171, 16
      %v232 = vld [vmem:[%s231] sm:$0xf]
      %v233 = vunpack.c.l.bf16 %v232
      %v234 = vunpack.c.h.bf16 %v232
      %v235 = vlaneseq
      %v236 = vshrl.u32 %v235, 7
      %v237 = vadd.s32 %v236, 32
      %vm238 = vcmp.lt.s32.totalorder %v237, 81
      %v239 = vsel %vm238, %v233, %v10
      %s240 = scalar_lea.vmem [#allocation7], 16
      %v241 = vpack.c.bf16 0.0, %v239
      %s243 = ssub.s32 16, 1
      %244 = vst [vmem:[%s240] sm:%s243] %v241
      %s245 = scalar_lea.vmem %s171, 20
      %v246 = vld [vmem:[%s245] sm:$0xf]
      %v247 = vunpack.c.l.bf16 %v246
      %v248 = vunpack.c.h.bf16 %v246
      %v249 = vlaneseq
      %v250 = vshrl.u32 %v249, 7
      %v251 = vadd.s32 %v250, 40
      %vm252 = vcmp.lt.s32.totalorder %v251, 81
      %v253 = vsel %vm252, %v247, %v10
      %s254 = scalar_lea.vmem [#allocation7], 20
      %v255 = vpack.c.bf16 0.0, %v253
      %s257 = ssub.s32 16, 1
      %258 = vst [vmem:[%s254] sm:%s257] %v255
      %s259 = scalar_lea.vmem %s171, 24
      %v260 = vld [vmem:[%s259] sm:$0xf]
      %v261 = vunpack.c.l.bf16 %v260
      %v262 = vunpack.c.h.bf16 %v260
      %v263 = vlaneseq
      %v264 = vshrl.u32 %v263, 7
      %v265 = vadd.s32 %v264, 48
      %vm266 = vcmp.lt.s32.totalorder %v265, 81
      %v267 = vsel %vm266, %v261, %v10
      %s268 = scalar_lea.vmem [#allocation7], 24
      %v269 = vpack.c.bf16 0.0, %v267
      %s271 = ssub.s32 16, 1
      %272 = vst [vmem:[%s268] sm:%s271] %v269
      %s273 = scalar_lea.vmem %s171, 28
      %v274 = vld [vmem:[%s273] sm:$0xf]
      %v275 = vunpack.c.l.bf16 %v274
      %v276 = vunpack.c.h.bf16 %v274
      %v277 = vlaneseq
      %v278 = vshrl.u32 %v277, 7
      %v279 = vadd.s32 %v278, 56
      %vm280 = vcmp.lt.s32.totalorder %v279, 81
      %v281 = vsel %vm280, %v275, %v10
      %s282 = scalar_lea.vmem [#allocation7], 28
      %v283 = vpack.c.bf16 0.0, %v281
      %s285 = ssub.s32 16, 1
      %286 = vst [vmem:[%s282] sm:%s285] %v283
      %s287 = scalar_lea.vmem %s171, 32
      %v288 = vld [vmem:[%s287] sm:$0xf]
      %v289 = vunpack.c.l.bf16 %v288
      %v290 = vunpack.c.h.bf16 %v288
      %v291 = vlaneseq
      %v292 = vshrl.u32 %v291, 7
      %v293 = vadd.s32 %v292, 64
      %vm294 = vcmp.lt.s32.totalorder %v293, 81
      %v295 = vsel %vm294, %v289, %v10
      %s296 = scalar_lea.vmem [#allocation7], 32
      %v297 = vpack.c.bf16 0.0, %v295
      %s299 = ssub.s32 16, 1
      %300 = vst [vmem:[%s296] sm:%s299] %v297
      %s301 = scalar_lea.vmem %s171, 36
      %v302 = vld [vmem:[%s301] sm:$0xf]
      %v303 = vunpack.c.l.bf16 %v302
      %v304 = vunpack.c.h.bf16 %v302
      %v305 = vlaneseq
      %v306 = vshrl.u32 %v305, 7
      %v307 = vadd.s32 %v306, 72
      %vm308 = vcmp.lt.s32.totalorder %v307, 81
      %v309 = vsel %vm308, %v303, %v10
      %s310 = scalar_lea.vmem [#allocation7], 36
      %v311 = vpack.c.bf16 0.0, %v309
      %s313 = ssub.s32 16, 1
      %314 = vst [vmem:[%s310] sm:%s313] %v311
      %s315 = scalar_lea.vmem %s171, 40
      %s317 = sor.u32 255, 127
      %s318 = sand.u32 %s317, 85
      %s319 = sshrl.u32 %s318, 1
      %s320 = sor.u32 %s318, %s319
      %s321 = sand.u32 51, %s320
      %s322 = sshrl.u32 %s321, 2
      %s323 = sor.u32 %s321, %s322
      %s324 = sand.u32 15, %s323
      %v325 = vld [vmem:[%s315] sm:%s324]
      %v326 = vunpack.c.l.bf16 %v325
      %v327 = vunpack.c.h.bf16 %v325
      %v328 = vlaneseq
      %v329 = vshrl.u32 %v328, 7
      %v330 = vadd.s32 %v329, 80
      %vm331 = vcmp.lt.s32.totalorder %v330, 81
      %v332 = vsel %vm331, %v326, %v10
      %s333 = scalar_lea.vmem [#allocation7], 40
      %v334 = vpack.c.bf16 0.0, %v332
      %s336 = ssub.s32 16, 1
      %337 = vst [vmem:[%s333] sm:%s336] %v334
      %s338 = scalar_lea.vmem %s171, 44
      %v339 = vld [vmem:[%s338] sm:$0xf]
      %v340 = vunpack.c.l.bf16 %v339
      %v341 = vunpack.c.h.bf16 %v339
      %v342 = vlaneseq
      %v343 = vshrl.u32 %v342, 7
      %vm345 = vcmp.lt.s32.totalorder %v343, 81
      %v346 = vsel %vm345, %v340, %v10
      %s347 = scalar_lea.vmem [#allocation7], 44
      %v348 = vpack.c.bf16 0.0, %v346
      %s350 = ssub.s32 16, 1
      %351 = vst [vmem:[%s347] sm:%s350] %v348
      %s352 = scalar_lea.vmem %s171, 48
      %v353 = vld [vmem:[%s352] sm:$0xf]
      %v354 = vunpack.c.l.bf16 %v353
      %v355 = vunpack.c.h.bf16 %v353
      %v356 = vlaneseq
      %v357 = vshrl.u32 %v356, 7
      %v358 = vadd.s32 %v357, 8
      %vm359 = vcmp.lt.s32.totalorder %v358, 81
      %v360 = vsel %vm359, %v354, %v10
      %s361 = scalar_lea.vmem [#allocation7], 48
      %v362 = vpack.c.bf16 0.0, %v360
      %s364 = ssub.s32 16, 1
      %365 = vst [vmem:[%s361] sm:%s364] %v362
      %s366 = scalar_lea.vmem %s171, 52
      %v367 = vld [vmem:[%s366] sm:$0xf]
      %v368 = vunpack.c.l.bf16 %v367
      %v369 = vunpack.c.h.bf16 %v367
      %v370 = vlaneseq
      %v371 = vshrl.u32 %v370, 7
      %v372 = vadd.s32 %v371, 16
      %vm373 = vcmp.lt.s32.totalorder %v372, 81
      %v374 = vsel %vm373, %v368, %v10
      %s375 = scalar_lea.vmem [#allocation7], 52
      %v376 = vpack.c.bf16 0.0, %v374
      %s378 = ssub.s32 16, 1
      %379 = vst [vmem:[%s375] sm:%s378] %v376
      %s380 = scalar_lea.vmem %s171, 56
      %v381 = vld [vmem:[%s380] sm:$0xf]
      %v382 = vunpack.c.l.bf16 %v381
      %v383 = vunpack.c.h.bf16 %v381
      %v384 = vlaneseq
      %v385 = vshrl.u32 %v384, 7
      %v386 = vadd.s32 %v385, 24
      %vm387 = vcmp.lt.s32.totalorder %v386, 81
      %v388 = vsel %vm387, %v382, %v10
      %s389 = scalar_lea.vmem [#allocation7], 56
      %v390 = vpack.c.bf16 0.0, %v388
      %s392 = ssub.s32 16, 1
      %393 = vst [vmem:[%s389] sm:%s392] %v390
      %s394 = scalar_lea.vmem %s171, 60
      %v395 = vld [vmem:[%s394] sm:$0xf]
      %v396 = vunpack.c.l.bf16 %v395
      %v397 = vunpack.c.h.bf16 %v395
      %v398 = vlaneseq
      %v399 = vshrl.u32 %v398, 7
      %v400 = vadd.s32 %v399, 32
      %vm401 = vcmp.lt.s32.totalorder %v400, 81
      %v402 = vsel %vm401, %v396, %v10
      %s403 = scalar_lea.vmem [#allocation7], 60
      %v404 = vpack.c.bf16 0.0, %v402
      %s406 = ssub.s32 16, 1
      %407 = vst [vmem:[%s403] sm:%s406] %v404
      %s408 = scalar_lea.vmem %s171, 64
      %v409 = vld [vmem:[%s408] sm:$0xf]
      %v410 = vunpack.c.l.bf16 %v409
      %v411 = vunpack.c.h.bf16 %v409
      %v412 = vlaneseq
      %v413 = vshrl.u32 %v412, 7
      %v414 = vadd.s32 %v413, 40
      %vm415 = vcmp.lt.s32.totalorder %v414, 81
      %v416 = vsel %vm415, %v410, %v10
      %s417 = scalar_lea.vmem [#allocation7], 64
      %v418 = vpack.c.bf16 0.0, %v416
      %s420 = ssub.s32 16, 1
      %421 = vst [vmem:[%s417] sm:%s420] %v418
      %s422 = scalar_lea.vmem %s171, 68
      %v423 = vld [vmem:[%s422] sm:$0xf]
      %v424 = vunpack.c.l.bf16 %v423
      %v425 = vunpack.c.h.bf16 %v423
      %v426 = vlaneseq
      %v427 = vshrl.u32 %v426, 7
      %v428 = vadd.s32 %v427, 48
      %vm429 = vcmp.lt.s32.totalorder %v428, 81
      %v430 = vsel %vm429, %v424, %v10
      %s431 = scalar_lea.vmem [#allocation7], 68
      %v432 = vpack.c.bf16 0.0, %v430
      %s434 = ssub.s32 16, 1
      %435 = vst [vmem:[%s431] sm:%s434] %v432
      %s436 = scalar_lea.vmem %s171, 72
      %v437 = vld [vmem:[%s436] sm:$0xf]
      %v438 = vunpack.c.l.bf16 %v437
      %v439 = vunpack.c.h.bf16 %v437
      %v440 = vlaneseq
      %v441 = vshrl.u32 %v440, 7
      %v442 = vadd.s32 %v441, 56
      %vm443 = vcmp.lt.s32.totalorder %v442, 81
      %v444 = vsel %vm443, %v438, %v10
      %s445 = scalar_lea.vmem [#allocation7], 72
      %v446 = vpack.c.bf16 0.0, %v444
      %s448 = ssub.s32 16, 1
      %449 = vst [vmem:[%s445] sm:%s448] %v446
      %s450 = scalar_lea.vmem %s171, 76
      %v451 = vld [vmem:[%s450] sm:$0xf]
      %v452 = vunpack.c.l.bf16 %v451
      %v453 = vunpack.c.h.bf16 %v451
      %v454 = vlaneseq
      %v455 = vshrl.u32 %v454, 7
      %v456 = vadd.s32 %v455, 64
      %vm457 = vcmp.lt.s32.totalorder %v456, 81
      %v458 = vsel %vm457, %v452, %v10
      %s459 = scalar_lea.vmem [#allocation7], 76
      %v460 = vpack.c.bf16 0.0, %v458
      %s462 = ssub.s32 16, 1
      %463 = vst [vmem:[%s459] sm:%s462] %v460
      %s464 = scalar_lea.vmem %s171, 80
      %v465 = vld [vmem:[%s464] sm:$0xf]
      %v466 = vunpack.c.l.bf16 %v465
      %v467 = vunpack.c.h.bf16 %v465
      %v468 = vlaneseq
      %v469 = vshrl.u32 %v468, 7
      %v470 = vadd.s32 %v469, 72
      %vm471 = vcmp.lt.s32.totalorder %v470, 81
      %v472 = vsel %vm471, %v466, %v10
      %s473 = scalar_lea.vmem [#allocation7], 80
      %v474 = vpack.c.bf16 0.0, %v472
      %s476 = ssub.s32 16, 1
      %477 = vst [vmem:[%s473] sm:%s476] %v474
      %s478 = scalar_lea.vmem %s171, 84
      %s480 = sor.u32 255, 127
      %s481 = sand.u32 %s480, 85
      %s482 = sshrl.u32 %s481, 1
      %s483 = sor.u32 %s481, %s482
      %s484 = sand.u32 51, %s483
      %s485 = sshrl.u32 %s484, 2
      %s486 = sor.u32 %s484, %s485
      %s487 = sand.u32 15, %s486
      %v488 = vld [vmem:[%s478] sm:%s487]
      %v489 = vunpack.c.l.bf16 %v488
      %v490 = vunpack.c.h.bf16 %v488
      %v491 = vlaneseq
      %v492 = vshrl.u32 %v491, 7
      %v493 = vadd.s32 %v492, 80
      %vm494 = vcmp.lt.s32.totalorder %v493, 81
      %v495 = vsel %vm494, %v489, %v10
      %s496 = scalar_lea.vmem [#allocation7], 84
      %v497 = vpack.c.bf16 0.0, %v495
      %s499 = ssub.s32 16, 1
      %500 = vst [vmem:[%s496] sm:%s499] %v497
      %s501 = scalar_lea.vmem %s171, 88
      %v502 = vld [vmem:[%s501] sm:$0xf]
      %v503 = vunpack.c.l.bf16 %v502
      %v504 = vunpack.c.h.bf16 %v502
      %v505 = vlaneseq
      %v506 = vshrl.u32 %v505, 7
      %vm508 = vcmp.lt.s32.totalorder %v506, 81
      %v509 = vsel %vm508, %v503, %v10
      %s510 = scalar_lea.vmem [#allocation7], 88
      %v511 = vpack.c.bf16 0.0, %v509
      %s513 = ssub.s32 16, 1
      %514 = vst [vmem:[%s510] sm:%s513] %v511
      %s515 = scalar_lea.vmem %s171, 92
      %v516 = vld [vmem:[%s515] sm:$0xf]
      %v517 = vunpack.c.l.bf16 %v516
      %v518 = vunpack.c.h.bf16 %v516
      %v519 = vlaneseq
      %v520 = vshrl.u32 %v519, 7
      %v521 = vadd.s32 %v520, 8
      %vm522 = vcmp.lt.s32.totalorder %v521, 81
      %v523 = vsel %vm522, %v517, %v10
      %s524 = scalar_lea.vmem [#allocation7], 92
      %v525 = vpack.c.bf16 0.0, %v523
      %s527 = ssub.s32 16, 1
      %528 = vst [vmem:[%s524] sm:%s527] %v525
      %s529 = scalar_lea.vmem %s171, 96
      %v530 = vld [vmem:[%s529] sm:$0xf]
      %v531 = vunpack.c.l.bf16 %v530
      %v532 = vunpack.c.h.bf16 %v530
      %v533 = vlaneseq
      %v534 = vshrl.u32 %v533, 7
      %v535 = vadd.s32 %v534, 16
      %vm536 = vcmp.lt.s32.totalorder %v535, 81
      %v537 = vsel %vm536, %v531, %v10
      %s538 = scalar_lea.vmem [#allocation7], 96
      %v539 = vpack.c.bf16 0.0, %v537
      %s541 = ssub.s32 16, 1
      %542 = vst [vmem:[%s538] sm:%s541] %v539
      %s543 = scalar_lea.vmem %s171, 100
      %v544 = vld [vmem:[%s543] sm:$0xf]
      %v545 = vunpack.c.l.bf16 %v544
      %v546 = vunpack.c.h.bf16 %v544
      %v547 = vlaneseq
      %v548 = vshrl.u32 %v547, 7
      %v549 = vadd.s32 %v548, 24
      %vm550 = vcmp.lt.s32.totalorder %v549, 81
      %v551 = vsel %vm550, %v545, %v10
      %s552 = scalar_lea.vmem [#allocation7], 100
      %v553 = vpack.c.bf16 0.0, %v551
      %s555 = ssub.s32 16, 1
      %556 = vst [vmem:[%s552] sm:%s555] %v553
      %s557 = scalar_lea.vmem %s171, 104
      %v558 = vld [vmem:[%s557] sm:$0xf]
      %v559 = vunpack.c.l.bf16 %v558
      %v560 = vunpack.c.h.bf16 %v558
      %v561 = vlaneseq
      %v562 = vshrl.u32 %v561, 7
      %v563 = vadd.s32 %v562, 32
      %vm564 = vcmp.lt.s32.totalorder %v563, 81
      %v565 = vsel %vm564, %v559, %v10
      %s566 = scalar_lea.vmem [#allocation7], 104
      %v567 = vpack.c.bf16 0.0, %v565
      %s569 = ssub.s32 16, 1
      %570 = vst [vmem:[%s566] sm:%s569] %v567
      %s571 = scalar_lea.vmem %s171, 108
      %v572 = vld [vmem:[%s571] sm:$0xf]
      %v573 = vunpack.c.l.bf16 %v572
      %v574 = vunpack.c.h.bf16 %v572
      %v575 = vlaneseq
      %v576 = vshrl.u32 %v575, 7
      %v577 = vadd.s32 %v576, 40
      %vm578 = vcmp.lt.s32.totalorder %v577, 81
      %v579 = vsel %vm578, %v573, %v10
      %s580 = scalar_lea.vmem [#allocation7], 108
      %v581 = vpack.c.bf16 0.0, %v579
      %s583 = ssub.s32 16, 1
      %584 = vst [vmem:[%s580] sm:%s583] %v581
      %s585 = scalar_lea.vmem %s171, 112
      %v586 = vld [vmem:[%s585] sm:$0xf]
      %v587 = vunpack.c.l.bf16 %v586
      %v588 = vunpack.c.h.bf16 %v586
      %v589 = vlaneseq
      %v590 = vshrl.u32 %v589, 7
      %v591 = vadd.s32 %v590, 48
      %vm592 = vcmp.lt.s32.totalorder %v591, 81
      %v593 = vsel %vm592, %v587, %v10
      %s594 = scalar_lea.vmem [#allocation7], 112
      %v595 = vpack.c.bf16 0.0, %v593
      %s597 = ssub.s32 16, 1
      %598 = vst [vmem:[%s594] sm:%s597] %v595
      %s599 = scalar_lea.vmem %s171, 116
      %v600 = vld [vmem:[%s599] sm:$0xf]
      %v601 = vunpack.c.l.bf16 %v600
      %v602 = vunpack.c.h.bf16 %v600
      %v603 = vlaneseq
      %v604 = vshrl.u32 %v603, 7
      %v605 = vadd.s32 %v604, 56
      %vm606 = vcmp.lt.s32.totalorder %v605, 81
      %v607 = vsel %vm606, %v601, %v10
      %s608 = scalar_lea.vmem [#allocation7], 116
      %v609 = vpack.c.bf16 0.0, %v607
      %s611 = ssub.s32 16, 1
      %612 = vst [vmem:[%s608] sm:%s611] %v609
      %s613 = scalar_lea.vmem %s171, 120
      %v614 = vld [vmem:[%s613] sm:$0xf]
      %v615 = vunpack.c.l.bf16 %v614
      %v616 = vunpack.c.h.bf16 %v614
      %v617 = vlaneseq
      %v618 = vshrl.u32 %v617, 7
      %v619 = vadd.s32 %v618, 64
      %vm620 = vcmp.lt.s32.totalorder %v619, 81
      %v621 = vsel %vm620, %v615, %v10
      %s622 = scalar_lea.vmem [#allocation7], 120
      %v623 = vpack.c.bf16 0.0, %v621
      %s625 = ssub.s32 16, 1
      %626 = vst [vmem:[%s622] sm:%s625] %v623
      %s627 = scalar_lea.vmem %s171, 124
      %v628 = vld [vmem:[%s627] sm:$0xf]
      %v629 = vunpack.c.l.bf16 %v628
      %v630 = vunpack.c.h.bf16 %v628
      %v631 = vlaneseq
      %v632 = vshrl.u32 %v631, 7
      %v633 = vadd.s32 %v632, 72
      %vm634 = vcmp.lt.s32.totalorder %v633, 81
      %v635 = vsel %vm634, %v629, %v10
      %s636 = scalar_lea.vmem [#allocation7], 124
      %v637 = vpack.c.bf16 0.0, %v635
      %s639 = ssub.s32 16, 1
      %640 = vst [vmem:[%s636] sm:%s639] %v637
      %s641 = scalar_lea.vmem %s171, 128
      %s643 = sor.u32 255, 127
      %s644 = sand.u32 %s643, 85
      %s645 = sshrl.u32 %s644, 1
      %s646 = sor.u32 %s644, %s645
      %s647 = sand.u32 51, %s646
      %s648 = sshrl.u32 %s647, 2
      %s649 = sor.u32 %s647, %s648
      %s650 = sand.u32 15, %s649
      %v651 = vld [vmem:[%s641] sm:%s650]
      %v652 = vunpack.c.l.bf16 %v651
      %v653 = vunpack.c.h.bf16 %v651
      %v654 = vlaneseq
      %v655 = vshrl.u32 %v654, 7
      %v656 = vadd.s32 %v655, 80
      %vm657 = vcmp.lt.s32.totalorder %v656, 81
      %v658 = vsel %vm657, %v652, %v10
      %s659 = scalar_lea.vmem [#allocation7], 128
      %v660 = vpack.c.bf16 0.0, %v658
      %s662 = ssub.s32 16, 1
      %663 = vst [vmem:[%s659] sm:%s662] %v660
      %s664 = scalar_lea.vmem %s171, 132
      %v665 = vld [vmem:[%s664] sm:$0xf]
      %v666 = vunpack.c.l.bf16 %v665
      %v667 = vunpack.c.h.bf16 %v665
      %v668 = vlaneseq
      %v669 = vshrl.u32 %v668, 7
      %vm671 = vcmp.lt.s32.totalorder %v669, 81
      %v672 = vsel %vm671, %v666, %v10
      %s673 = scalar_lea.vmem [#allocation7], 132
      %v674 = vpack.c.bf16 0.0, %v672
      %s676 = ssub.s32 16, 1
      %677 = vst [vmem:[%s673] sm:%s676] %v674
      %s678 = scalar_lea.vmem %s171, 136
      %v679 = vld [vmem:[%s678] sm:$0xf]
      %v680 = vunpack.c.l.bf16 %v679
      %v681 = vunpack.c.h.bf16 %v679
      %v682 = vlaneseq
      %v683 = vshrl.u32 %v682, 7
      %v684 = vadd.s32 %v683, 8
      %vm685 = vcmp.lt.s32.totalorder %v684, 81
      %v686 = vsel %vm685, %v680, %v10
      %s687 = scalar_lea.vmem [#allocation7], 136
      %v688 = vpack.c.bf16 0.0, %v686
      %s690 = ssub.s32 16, 1
      %691 = vst [vmem:[%s687] sm:%s690] %v688
      %s692 = scalar_lea.vmem %s171, 140
      %v693 = vld [vmem:[%s692] sm:$0xf]
      %v694 = vunpack.c.l.bf16 %v693
      %v695 = vunpack.c.h.bf16 %v693
      %v696 = vlaneseq
      %v697 = vshrl.u32 %v696, 7
      %v698 = vadd.s32 %v697, 16
      %vm699 = vcmp.lt.s32.totalorder %v698, 81
      %v700 = vsel %vm699, %v694, %v10
      %s701 = scalar_lea.vmem [#allocation7], 140
      %v702 = vpack.c.bf16 0.0, %v700
      %s704 = ssub.s32 16, 1
      %705 = vst [vmem:[%s701] sm:%s704] %v702
      %s706 = scalar_lea.vmem %s171, 144
      %v707 = vld [vmem:[%s706] sm:$0xf]
      %v708 = vunpack.c.l.bf16 %v707
      %v709 = vunpack.c.h.bf16 %v707
      %v710 = vlaneseq
      %v711 = vshrl.u32 %v710, 7
      %v712 = vadd.s32 %v711, 24
      %vm713 = vcmp.lt.s32.totalorder %v712, 81
      %v714 = vsel %vm713, %v708, %v10
      %s715 = scalar_lea.vmem [#allocation7], 144
      %v716 = vpack.c.bf16 0.0, %v714
      %s718 = ssub.s32 16, 1
      %719 = vst [vmem:[%s715] sm:%s718] %v716
      %s720 = scalar_lea.vmem %s171, 148
      %v721 = vld [vmem:[%s720] sm:$0xf]
      %v722 = vunpack.c.l.bf16 %v721
      %v723 = vunpack.c.h.bf16 %v721
      %v724 = vlaneseq
      %v725 = vshrl.u32 %v724, 7
      %v726 = vadd.s32 %v725, 32
      %vm727 = vcmp.lt.s32.totalorder %v726, 81
      %v728 = vsel %vm727, %v722, %v10
      %s729 = scalar_lea.vmem [#allocation7], 148
      %v730 = vpack.c.bf16 0.0, %v728
      %s732 = ssub.s32 16, 1
      %733 = vst [vmem:[%s729] sm:%s732] %v730
      %s734 = scalar_lea.vmem %s171, 152
      %v735 = vld [vmem:[%s734] sm:$0xf]
      %v736 = vunpack.c.l.bf16 %v735
      %v737 = vunpack.c.h.bf16 %v735
      %v738 = vlaneseq
      %v739 = vshrl.u32 %v738, 7
      %v740 = vadd.s32 %v739, 40
      %vm741 = vcmp.lt.s32.totalorder %v740, 81
      %v742 = vsel %vm741, %v736, %v10
      %s743 = scalar_lea.vmem [#allocation7], 152
      %v744 = vpack.c.bf16 0.0, %v742
      %s746 = ssub.s32 16, 1
      %747 = vst [vmem:[%s743] sm:%s746] %v744
      %s748 = scalar_lea.vmem %s171, 156
      %v749 = vld [vmem:[%s748] sm:$0xf]
      %v750 = vunpack.c.l.bf16 %v749
      %v751 = vunpack.c.h.bf16 %v749
      %v752 = vlaneseq
      %v753 = vshrl.u32 %v752, 7
      %v754 = vadd.s32 %v753, 48
      %vm755 = vcmp.lt.s32.totalorder %v754, 81
      %v756 = vsel %vm755, %v750, %v10
      %s757 = scalar_lea.vmem [#allocation7], 156
      %v758 = vpack.c.bf16 0.0, %v756
      %s760 = ssub.s32 16, 1
      %761 = vst [vmem:[%s757] sm:%s760] %v758
      %s762 = scalar_lea.vmem %s171, 160
      %v763 = vld [vmem:[%s762] sm:$0xf]
      %v764 = vunpack.c.l.bf16 %v763
      %v765 = vunpack.c.h.bf16 %v763
      %v766 = vlaneseq
      %v767 = vshrl.u32 %v766, 7
      %v768 = vadd.s32 %v767, 56
      %vm769 = vcmp.lt.s32.totalorder %v768, 81
      %v770 = vsel %vm769, %v764, %v10
      %s771 = scalar_lea.vmem [#allocation7], 160
      %v772 = vpack.c.bf16 0.0, %v770
      %s774 = ssub.s32 16, 1
      %775 = vst [vmem:[%s771] sm:%s774] %v772
      %s776 = scalar_lea.vmem %s171, 164
      %v777 = vld [vmem:[%s776] sm:$0xf]
      %v778 = vunpack.c.l.bf16 %v777
      %v779 = vunpack.c.h.bf16 %v777
      %v780 = vlaneseq
      %v781 = vshrl.u32 %v780, 7
      %v782 = vadd.s32 %v781, 64
      %vm783 = vcmp.lt.s32.totalorder %v782, 81
      %v784 = vsel %vm783, %v778, %v10
      %s785 = scalar_lea.vmem [#allocation7], 164
      %v786 = vpack.c.bf16 0.0, %v784
      %s788 = ssub.s32 16, 1
      %789 = vst [vmem:[%s785] sm:%s788] %v786
      %s790 = scalar_lea.vmem %s171, 168
      %v791 = vld [vmem:[%s790] sm:$0xf]
      %v792 = vunpack.c.l.bf16 %v791
      %v793 = vunpack.c.h.bf16 %v791
      %v794 = vlaneseq
      %v795 = vshrl.u32 %v794, 7
      %v796 = vadd.s32 %v795, 72
      %vm797 = vcmp.lt.s32.totalorder %v796, 81
      %v798 = vsel %vm797, %v792, %v10
      %s799 = scalar_lea.vmem [#allocation7], 168
      %v800 = vpack.c.bf16 0.0, %v798
      %s802 = ssub.s32 16, 1
      %803 = vst [vmem:[%s799] sm:%s802] %v800
      %s804 = scalar_lea.vmem %s171, 172
      %s806 = sor.u32 255, 127
      %s807 = sand.u32 %s806, 85
      %s808 = sshrl.u32 %s807, 1
      %s809 = sor.u32 %s807, %s808
      %s810 = sand.u32 51, %s809
      %s811 = sshrl.u32 %s810, 2
      %s812 = sor.u32 %s810, %s811
      %s813 = sand.u32 15, %s812
      %v814 = vld [vmem:[%s804] sm:%s813]
      %v815 = vunpack.c.l.bf16 %v814
      %v816 = vunpack.c.h.bf16 %v814
      %v817 = vlaneseq
      %v818 = vshrl.u32 %v817, 7
      %v819 = vadd.s32 %v818, 80
      %vm820 = vcmp.lt.s32.totalorder %v819, 81
      %v821 = vsel %vm820, %v815, %v10
      %s822 = scalar_lea.vmem [#allocation7], 172
      %v823 = vpack.c.bf16 0.0, %v821
      %s825 = ssub.s32 16, 1
      %826 = vst [vmem:[%s822] sm:%s825] %v823
      %v827 = vld [vmem:[%s3] sm:$0x1]
      %s829 = ssub.s32 2, 1
      %830 = vst [vmem:[#allocation8] sm:%s829] %v827
      %v831 = vld [vmem:[#allocation7] sm:$0xf]
      %v832 = vld [vmem:[#allocation7 + $0x4] sm:$0xf]
      %v833 = vld [vmem:[#allocation7 + $0x8] sm:$0xf]
      %v834 = vld [vmem:[#allocation7 + $0xc] sm:$0xf]
      %v835 = vld [vmem:[#allocation7 + $0x10] sm:$0xf]
      %v836 = vld [vmem:[#allocation7 + $0x14] sm:$0xf]
      %v837 = vld [vmem:[#allocation7 + $0x18] sm:$0xf]
      %v838 = vld [vmem:[#allocation7 + $0x1c] sm:$0xf]
      %v839 = vld [vmem:[#allocation7 + $0x20] sm:$0xf]
      %v840 = vld [vmem:[%s0] sm:$0xf]
      %v841 = vld [vmem:[%s0 + $0x4] sm:$0xf]
      %v842 = vld [vmem:[%s0 + $0x8] sm:$0xf]
      %v843 = vld [vmem:[%s0 + $0xc] sm:$0xf]
      %v844 = vld [vmem:[%s0 + $0x10] sm:$0xf]
      %v845 = vld [vmem:[%s0 + $0x14] sm:$0xf]
      %v846 = vld [vmem:[%s0 + $0x18] sm:$0xf]
      %v847 = vld [vmem:[%s0 + $0x1c] sm:$0xf]
      %v848 = vld [vmem:[%s0 + $0x20] sm:$0xf]
      %v849 = vld [vmem:[%s0 + $0x24] sm:$0xf]
      %v850 = vld [vmem:[%s0 + $0x28] sm:$0xf]
      %v851 = vld [vmem:[%s0 + $0x2c] sm:$0xf]
      %v852 = vld [vmem:[%s0 + $0x30] sm:$0xf]
      %v853 = vld [vmem:[%s0 + $0x34] sm:$0xf]
      %v854 = vld [vmem:[%s0 + $0x38] sm:$0xf]
      %v855 = vld [vmem:[%s0 + $0x3c] sm:$0xf]
      %s856 = scalar_lea.vmem [#allocation7], 44
      %v857 = vld [vmem:[%s856] sm:$0xf]
      %v858 = vld [vmem:[%s856 + $0x4] sm:$0xf]
      %v859 = vld [vmem:[%s856 + $0x8] sm:$0xf]
      %v860 = vld [vmem:[%s856 + $0xc] sm:$0xf]
      %v861 = vld [vmem:[%s856 + $0x10] sm:$0xf]
      %v862 = vld [vmem:[%s856 + $0x14] sm:$0xf]
      %v863 = vld [vmem:[%s856 + $0x18] sm:$0xf]
      %v864 = vld [vmem:[%s856 + $0x1c] sm:$0xf]
      %v865 = vld [vmem:[%s856 + $0x20] sm:$0xf]
      %s866 = scalar_lea.vmem %s0, 64
      %v867 = vld [vmem:[%s866] sm:$0xf]
      %v868 = vld [vmem:[%s866 + $0x4] sm:$0xf]
      %v869 = vld [vmem:[%s866 + $0x8] sm:$0xf]
      %v870 = vld [vmem:[%s866 + $0xc] sm:$0xf]
      %v871 = vld [vmem:[%s866 + $0x10] sm:$0xf]
      %v872 = vld [vmem:[%s866 + $0x14] sm:$0xf]
      %v873 = vld [vmem:[%s866 + $0x18] sm:$0xf]
      %v874 = vld [vmem:[%s866 + $0x1c] sm:$0xf]
      %v875 = vld [vmem:[%s866 + $0x20] sm:$0xf]
      %v876 = vld [vmem:[%s866 + $0x24] sm:$0xf]
      %v877 = vld [vmem:[%s866 + $0x28] sm:$0xf]
      %v878 = vld [vmem:[%s866 + $0x2c] sm:$0xf]
      %v879 = vld [vmem:[%s866 + $0x30] sm:$0xf]
      %v880 = vld [vmem:[%s866 + $0x34] sm:$0xf]
      %v881 = vld [vmem:[%s866 + $0x38] sm:$0xf]
      %v882 = vld [vmem:[%s866 + $0x3c] sm:$0xf]
      %v892 = vunpack.c.l.b16 %v857
      %v893 = vunpack.c.l.b16 %v858
      %v894 = vunpack.c.l.b16 %v859
      %v895 = vunpack.c.l.b16 %v860
      %v896 = vunpack.c.l.b16 %v861
      %v897 = vunpack.c.l.b16 %v862
      %v898 = vunpack.c.l.b16 %v863
      %v899 = vunpack.c.l.b16 %v864
      %v900 = vunpack.c.l.b16 %v865
      %v901 = vpack.c.b16 %v893, %v892
      %v902 = vpack.c.b16 %v895, %v894
      %v903 = vpack.c.b16 %v897, %v896
      %v904 = vpack.c.b16 %v899, %v898
      %v905 = vpack.c.b16 %v900, %v900
      %v927 = vunpack.c.l.b16 %v867
      %v928 = vunpack.c.l.b16 %v868
      %v929 = vunpack.c.l.b16 %v869
      %v930 = vunpack.c.l.b16 %v870
      %v931 = vunpack.c.l.b16 %v871
      %v932 = vunpack.c.l.b16 %v872
      %v933 = vunpack.c.l.b16 %v873
      %v934 = vunpack.c.l.b16 %v874
      %v935 = vunpack.c.l.b16 %v875
      %v936 = vunpack.c.l.b16 %v876
      %v937 = vunpack.c.l.b16 %v877
      %v938 = vunpack.c.l.b16 %v878
      %v939 = vunpack.c.l.b16 %v879
      %v940 = vunpack.c.l.b16 %v880
      %v941 = vunpack.c.l.b16 %v881
      %v942 = vunpack.c.l.b16 %v882
      %v943 = vpack.c.b16 %v928, %v927
      %v944 = vpack.c.b16 %v930, %v929
      %v945 = vpack.c.b16 %v932, %v931
      %v946 = vpack.c.b16 %v934, %v933
      %v947 = vpack.c.b16 %v936, %v935
      %v948 = vpack.c.b16 %v938, %v937
      %v949 = vpack.c.b16 %v940, %v939
      %v950 = vpack.c.b16 %v942, %v941
      %959 = vmatpush.bf16.msra.mxu0 %v950
      %960 = vmatpush.bf16.msra.mxu0 %v949
      %961 = vmatpush.bf16.msra.mxu0 %v948
      %962 = vmatpush.bf16.msra.mxu0 %v947
      %963 = vmatpush.bf16.msra.mxu0 %v946
      %964 = vmatpush.bf16.msra.mxu0 %v945
      %965 = vmatpush.bf16.msra.mxu0 %v944
      %966 = vmatpush.bf16.msra.mxu0 %v943
      %967 = vmatmul.bf16.gmra.mxu0 %v901
      %v968 = vpop.f32.mrf.mxu0
      %v969 = vadd.f32 0.0, %v968
      %v970 = vpop.f32.mrf.mxu0
      %v971 = vadd.f32 0.0, %v970
      %972 = vmatmul.bf16.gmra.mxu0 %v902
      %v973 = vpop.f32.mrf.mxu0
      %v974 = vadd.f32 0.0, %v973
      %v975 = vpop.f32.mrf.mxu0
      %v976 = vadd.f32 0.0, %v975
      %977 = vmatmul.bf16.gmra.mxu0 %v903
      %v978 = vpop.f32.mrf.mxu0
      %v979 = vadd.f32 0.0, %v978
      %v980 = vpop.f32.mrf.mxu0
      %v981 = vadd.f32 0.0, %v980
      %982 = vmatmul.bf16.gmra.mxu0 %v904
      %v983 = vpop.f32.mrf.mxu0
      %v984 = vadd.f32 0.0, %v983
      %v985 = vpop.f32.mrf.mxu0
      %v986 = vadd.f32 0.0, %v985
      %987 = vmatmul.bf16.gmra.mxu0 %v905
      %v988 = vpop.f32.mrf.mxu0
      %v989 = vadd.f32 0.0, %v988
      %v990 = vpop.f32.mrf.mxu0
      %991 = vdwg.mxu0
      %v1001 = vunpack.c.l.b16 %v831
      %v1002 = vunpack.c.l.b16 %v832
      %v1003 = vunpack.c.l.b16 %v833
      %v1004 = vunpack.c.l.b16 %v834
      %v1005 = vunpack.c.l.b16 %v835
      %v1006 = vunpack.c.l.b16 %v836
      %v1007 = vunpack.c.l.b16 %v837
      %v1008 = vunpack.c.l.b16 %v838
      %v1009 = vunpack.c.l.b16 %v839
      %v1010 = vpack.c.b16 %v1002, %v1001
      %v1011 = vpack.c.b16 %v1004, %v1003
      %v1012 = vpack.c.b16 %v1006, %v1005
      %v1013 = vpack.c.b16 %v1008, %v1007
      %v1014 = vpack.c.b16 %v1009, %v1009
      %v1036 = vunpack.c.l.b16 %v840
      %v1037 = vunpack.c.l.b16 %v841
      %v1038 = vunpack.c.l.b16 %v842
      %v1039 = vunpack.c.l.b16 %v843
      %v1040 = vunpack.c.l.b16 %v844
      %v1041 = vunpack.c.l.b16 %v845
      %v1042 = vunpack.c.l.b16 %v846
      %v1043 = vunpack.c.l.b16 %v847
      %v1044 = vunpack.c.l.b16 %v848
      %v1045 = vunpack.c.l.b16 %v849
      %v1046 = vunpack.c.l.b16 %v850
      %v1047 = vunpack.c.l.b16 %v851
      %v1048 = vunpack.c.l.b16 %v852
      %v1049 = vunpack.c.l.b16 %v853
      %v1050 = vunpack.c.l.b16 %v854
      %v1051 = vunpack.c.l.b16 %v855
      %v1052 = vpack.c.b16 %v1037, %v1036
      %v1053 = vpack.c.b16 %v1039, %v1038
      %v1054 = vpack.c.b16 %v1041, %v1040
      %v1055 = vpack.c.b16 %v1043, %v1042
      %v1056 = vpack.c.b16 %v1045, %v1044
      %v1057 = vpack.c.b16 %v1047, %v1046
      %v1058 = vpack.c.b16 %v1049, %v1048
      %v1059 = vpack.c.b16 %v1051, %v1050
      %1068 = vmatpush.bf16.msra.mxu0 %v1059
      %1069 = vmatpush.bf16.msra.mxu0 %v1058
      %1070 = vmatpush.bf16.msra.mxu0 %v1057
      %1071 = vmatpush.bf16.msra.mxu0 %v1056
      %1072 = vmatpush.bf16.msra.mxu0 %v1055
      %1073 = vmatpush.bf16.msra.mxu0 %v1054
      %1074 = vmatpush.bf16.msra.mxu0 %v1053
      %1075 = vmatpush.bf16.msra.mxu0 %v1052
      %1076 = vmatmul.bf16.gmra.mxu0 %v1010
      %v1077 = vpop.f32.mrf.mxu0
      %v1078 = vadd.f32 %v969, %v1077
      %v1079 = vpop.f32.mrf.mxu0
      %v1080 = vadd.f32 %v971, %v1079
      %1081 = vmatmul.bf16.gmra.mxu0 %v1011
      %v1082 = vpop.f32.mrf.mxu0
      %v1083 = vadd.f32 %v974, %v1082
      %v1084 = vpop.f32.mrf.mxu0
      %v1085 = vadd.f32 %v976, %v1084
      %1086 = vmatmul.bf16.gmra.mxu0 %v1012
      %v1087 = vpop.f32.mrf.mxu0
      %v1088 = vadd.f32 %v979, %v1087
      %v1089 = vpop.f32.mrf.mxu0
      %v1090 = vadd.f32 %v981, %v1089
      %1091 = vmatmul.bf16.gmra.mxu0 %v1013
      %v1092 = vpop.f32.mrf.mxu0
      %v1093 = vadd.f32 %v984, %v1092
      %v1094 = vpop.f32.mrf.mxu0
      %v1095 = vadd.f32 %v986, %v1094
      %1096 = vmatmul.bf16.gmra.mxu0 %v1014
      %v1097 = vpop.f32.mrf.mxu0
      %v1098 = vadd.f32 %v989, %v1097
      %v1099 = vpop.f32.mrf.mxu0
      %1100 = vdwg.mxu0
      %v1101 = vld [vmem:[#allocation7] sm:$0xf]
      %v1102 = vld [vmem:[#allocation7 + $0x4] sm:$0xf]
      %v1103 = vld [vmem:[#allocation7 + $0x8] sm:$0xf]
      %v1104 = vld [vmem:[#allocation7 + $0xc] sm:$0xf]
      %v1105 = vld [vmem:[#allocation7 + $0x10] sm:$0xf]
      %v1106 = vld [vmem:[#allocation7 + $0x14] sm:$0xf]
      %v1107 = vld [vmem:[#allocation7 + $0x18] sm:$0xf]
      %v1108 = vld [vmem:[#allocation7 + $0x1c] sm:$0xf]
      %v1109 = vld [vmem:[#allocation7 + $0x20] sm:$0xf]
      %v1110 = vld [vmem:[#allocation7 + $0x24] sm:$0x1]
      %s1111 = scalar_lea.vmem %s0, 128
      %v1112 = vld [vmem:[%s1111] sm:$0xf]
      %v1113 = vld [vmem:[%s1111 + $0x4] sm:$0xf]
      %v1114 = vld [vmem:[%s1111 + $0x8] sm:$0xf]
      %v1115 = vld [vmem:[%s1111 + $0xc] sm:$0xf]
      %v1116 = vld [vmem:[%s1111 + $0x10] sm:$0xf]
      %v1117 = vld [vmem:[%s1111 + $0x14] sm:$0xf]
      %v1118 = vld [vmem:[%s1111 + $0x18] sm:$0xf]
      %v1119 = vld [vmem:[%s1111 + $0x1c] sm:$0xf]
      %v1120 = vld [vmem:[%s1111 + $0x20] sm:$0xf]
      %v1121 = vld [vmem:[%s1111 + $0x24] sm:$0xf]
      %v1122 = vld [vmem:[%s1111 + $0x28] sm:$0xf]
      %v1123 = vld [vmem:[%s1111 + $0x2c] sm:$0xf]
      %v1124 = vld [vmem:[%s1111 + $0x30] sm:$0xf]
      %v1125 = vld [vmem:[%s1111 + $0x34] sm:$0xf]
      %v1126 = vld [vmem:[%s1111 + $0x38] sm:$0xf]
      %v1127 = vld [vmem:[%s1111 + $0x3c] sm:$0xf]
      %v1138 = vunpack.c.l.b16 %v1101
      %v1139 = vunpack.c.l.b16 %v1102
      %v1140 = vunpack.c.l.b16 %v1103
      %v1141 = vunpack.c.l.b16 %v1104
      %v1142 = vunpack.c.l.b16 %v1105
      %v1143 = vunpack.c.l.b16 %v1106
      %v1144 = vunpack.c.l.b16 %v1107
      %v1145 = vunpack.c.l.b16 %v1108
      %v1146 = vunpack.c.l.b16 %v1109
      %v1147 = vunpack.c.l.b16 %v1110
      %v1148 = vpack.c.b16 %v1139, %v1138
      %v1149 = vpack.c.b16 %v1141, %v1140
      %v1150 = vpack.c.b16 %v1143, %v1142
      %v1151 = vpack.c.b16 %v1145, %v1144
      %v1152 = vpack.c.b16 %v1147, %v1146
      %vm1153 = vsmask.f32 7424
      %v1155 = vshrl.u32 %v1148, 16
      %v1157 = vshll.u32 %v1148, 16
      %v1159 = vrot.slane %v1157, 1
      %v1160 = vor.u32 %v1155, %v1159
      %v1162 = vshll.u32 %v1149, 16
      %v1164 = vrot.slane %v1162, 1
      %v1165 = vsel %vm1153, %v1160, %v1164
      %v1166 = vshrl.u32 %v1149, 16
      %v1168 = vor.u32 %v1166, %v1164
      %v1170 = vshll.u32 %v1150, 16
      %v1172 = vrot.slane %v1170, 1
      %v1173 = vsel %vm1153, %v1168, %v1172
      %v1174 = vshrl.u32 %v1150, 16
      %v1176 = vor.u32 %v1174, %v1172
      %v1178 = vshll.u32 %v1151, 16
      %v1180 = vrot.slane %v1178, 1
      %v1181 = vsel %vm1153, %v1176, %v1180
      %v1182 = vshrl.u32 %v1151, 16
      %v1184 = vor.u32 %v1182, %v1180
      %v1186 = vshll.u32 %v1152, 16
      %v1188 = vrot.slane %v1186, 1
      %v1189 = vsel %vm1153, %v1184, %v1188
      %v1190 = vshrl.u32 %v1152, 16
      %v1192 = vor.u32 %v1190, %v1188
      %v1214 = vunpack.c.l.b16 %v1112
      %v1215 = vunpack.c.l.b16 %v1113
      %v1216 = vunpack.c.l.b16 %v1114
      %v1217 = vunpack.c.l.b16 %v1115
      %v1218 = vunpack.c.l.b16 %v1116
      %v1219 = vunpack.c.l.b16 %v1117
      %v1220 = vunpack.c.l.b16 %v1118
      %v1221 = vunpack.c.l.b16 %v1119
      %v1222 = vunpack.c.l.b16 %v1120
      %v1223 = vunpack.c.l.b16 %v1121
      %v1224 = vunpack.c.l.b16 %v1122
      %v1225 = vunpack.c.l.b16 %v1123
      %v1226 = vunpack.c.l.b16 %v1124
      %v1227 = vunpack.c.l.b16 %v1125
      %v1228 = vunpack.c.l.b16 %v1126
      %v1229 = vunpack.c.l.b16 %v1127
      %v1230 = vpack.c.b16 %v1215, %v1214
      %v1231 = vpack.c.b16 %v1217, %v1216
      %v1232 = vpack.c.b16 %v1219, %v1218
      %v1233 = vpack.c.b16 %v1221, %v1220
      %v1234 = vpack.c.b16 %v1223, %v1222
      %v1235 = vpack.c.b16 %v1225, %v1224
      %v1236 = vpack.c.b16 %v1227, %v1226
      %v1237 = vpack.c.b16 %v1229, %v1228
      %1246 = vmatpush.bf16.msra.mxu0 %v1237
      %1247 = vmatpush.bf16.msra.mxu0 %v1236
      %1248 = vmatpush.bf16.msra.mxu0 %v1235
      %1249 = vmatpush.bf16.msra.mxu0 %v1234
      %1250 = vmatpush.bf16.msra.mxu0 %v1233
      %1251 = vmatpush.bf16.msra.mxu0 %v1232
      %1252 = vmatpush.bf16.msra.mxu0 %v1231
      %1253 = vmatpush.bf16.msra.mxu0 %v1230
      %1254 = vmatmul.bf16.gmra.mxu0 %v1165
      %v1255 = vpop.f32.mrf.mxu0
      %v1256 = vadd.f32 0.0, %v1255
      %v1257 = vpop.f32.mrf.mxu0
      %v1258 = vadd.f32 0.0, %v1257
      %1259 = vmatmul.bf16.gmra.mxu0 %v1173
      %v1260 = vpop.f32.mrf.mxu0
      %v1261 = vadd.f32 0.0, %v1260
      %v1262 = vpop.f32.mrf.mxu0
      %v1263 = vadd.f32 0.0, %v1262
      %1264 = vmatmul.bf16.gmra.mxu0 %v1181
      %v1265 = vpop.f32.mrf.mxu0
      %v1266 = vadd.f32 0.0, %v1265
      %v1267 = vpop.f32.mrf.mxu0
      %v1268 = vadd.f32 0.0, %v1267
      %1269 = vmatmul.bf16.gmra.mxu0 %v1189
      %v1270 = vpop.f32.mrf.mxu0
      %v1271 = vadd.f32 0.0, %v1270
      %v1272 = vpop.f32.mrf.mxu0
      %v1273 = vadd.f32 0.0, %v1272
      %1274 = vmatmul.bf16.gmra.mxu0 %v1192
      %v1275 = vpop.f32.mrf.mxu0
      %v1276 = vadd.f32 0.0, %v1275
      %v1277 = vpop.f32.mrf.mxu0
      %1278 = vdwg.mxu0
      %v1279 = vadd.f32 %v1078, %v1256
      %v1280 = vadd.f32 %v1080, %v1258
      %v1281 = vadd.f32 %v1083, %v1261
      %v1282 = vadd.f32 %v1085, %v1263
      %v1283 = vadd.f32 %v1088, %v1266
      %v1284 = vadd.f32 %v1090, %v1268
      %v1285 = vadd.f32 %v1093, %v1271
      %v1286 = vadd.f32 %v1095, %v1273
      %v1287 = vadd.f32 %v1098, %v1276
      %s1288 = scalar_lea.vmem [#allocation7], 88
      %v1289 = vld [vmem:[%s1288] sm:$0xf]
      %v1290 = vld [vmem:[%s1288 + $0x4] sm:$0xf]
      %v1291 = vld [vmem:[%s1288 + $0x8] sm:$0xf]
      %v1292 = vld [vmem:[%s1288 + $0xc] sm:$0xf]
      %v1293 = vld [vmem:[%s1288 + $0x10] sm:$0xf]
      %v1294 = vld [vmem:[%s1288 + $0x14] sm:$0xf]
      %v1295 = vld [vmem:[%s1288 + $0x18] sm:$0xf]
      %v1296 = vld [vmem:[%s1288 + $0x1c] sm:$0xf]
      %v1297 = vld [vmem:[%s1288 + $0x20] sm:$0xf]
      %s1298 = scalar_lea.vmem %s0, 192
      %v1299 = vld [vmem:[%s1298] sm:$0xf]
      %v1300 = vld [vmem:[%s1298 + $0x4] sm:$0xf]
      %v1301 = vld [vmem:[%s1298 + $0x8] sm:$0xf]
      %v1302 = vld [vmem:[%s1298 + $0xc] sm:$0xf]
      %v1303 = vld [vmem:[%s1298 + $0x10] sm:$0xf]
      %v1304 = vld [vmem:[%s1298 + $0x14] sm:$0xf]
      %v1305 = vld [vmem:[%s1298 + $0x18] sm:$0xf]
      %v1306 = vld [vmem:[%s1298 + $0x1c] sm:$0xf]
      %v1307 = vld [vmem:[%s1298 + $0x20] sm:$0xf]
      %v1308 = vld [vmem:[%s1298 + $0x24] sm:$0xf]
      %v1309 = vld [vmem:[%s1298 + $0x28] sm:$0xf]
      %v1310 = vld [vmem:[%s1298 + $0x2c] sm:$0xf]
      %v1311 = vld [vmem:[%s1298 + $0x30] sm:$0xf]
      %v1312 = vld [vmem:[%s1298 + $0x34] sm:$0xf]
      %v1313 = vld [vmem:[%s1298 + $0x38] sm:$0xf]
      %v1314 = vld [vmem:[%s1298 + $0x3c] sm:$0xf]
      %v1324 = vunpack.c.l.b16 %v1289
      %v1325 = vunpack.c.l.b16 %v1290
      %v1326 = vunpack.c.l.b16 %v1291
      %v1327 = vunpack.c.l.b16 %v1292
      %v1328 = vunpack.c.l.b16 %v1293
      %v1329 = vunpack.c.l.b16 %v1294
      %v1330 = vunpack.c.l.b16 %v1295
      %v1331 = vunpack.c.l.b16 %v1296
      %v1332 = vunpack.c.l.b16 %v1297
      %v1333 = vpack.c.b16 %v1325, %v1324
      %v1334 = vpack.c.b16 %v1327, %v1326
      %v1335 = vpack.c.b16 %v1329, %v1328
      %v1336 = vpack.c.b16 %v1331, %v1330
      %v1337 = vpack.c.b16 %v1332, %v1332
      %v1359 = vunpack.c.l.b16 %v1299
      %v1360 = vunpack.c.l.b16 %v1300
      %v1361 = vunpack.c.l.b16 %v1301
      %v1362 = vunpack.c.l.b16 %v1302
      %v1363 = vunpack.c.l.b16 %v1303
      %v1364 = vunpack.c.l.b16 %v1304
      %v1365 = vunpack.c.l.b16 %v1305
      %v1366 = vunpack.c.l.b16 %v1306
      %v1367 = vunpack.c.l.b16 %v1307
      %v1368 = vunpack.c.l.b16 %v1308
      %v1369 = vunpack.c.l.b16 %v1309
      %v1370 = vunpack.c.l.b16 %v1310
      %v1371 = vunpack.c.l.b16 %v1311
      %v1372 = vunpack.c.l.b16 %v1312
      %v1373 = vunpack.c.l.b16 %v1313
      %v1374 = vunpack.c.l.b16 %v1314
      %v1375 = vpack.c.b16 %v1360, %v1359
      %v1376 = vpack.c.b16 %v1362, %v1361
      %v1377 = vpack.c.b16 %v1364, %v1363
      %v1378 = vpack.c.b16 %v1366, %v1365
      %v1379 = vpack.c.b16 %v1368, %v1367
      %v1380 = vpack.c.b16 %v1370, %v1369
      %v1381 = vpack.c.b16 %v1372, %v1371
      %v1382 = vpack.c.b16 %v1374, %v1373
      %1391 = vmatpush.bf16.msra.mxu0 %v1382
      %1392 = vmatpush.bf16.msra.mxu0 %v1381
      %1393 = vmatpush.bf16.msra.mxu0 %v1380
      %1394 = vmatpush.bf16.msra.mxu0 %v1379
      %1395 = vmatpush.bf16.msra.mxu0 %v1378
      %1396 = vmatpush.bf16.msra.mxu0 %v1377
      %1397 = vmatpush.bf16.msra.mxu0 %v1376
      %1398 = vmatpush.bf16.msra.mxu0 %v1375
      %1399 = vmatmul.bf16.gmra.mxu0 %v1333
      %v1400 = vpop.f32.mrf.mxu0
      %v1401 = vadd.f32 0.0, %v1400
      %v1402 = vpop.f32.mrf.mxu0
      %v1403 = vadd.f32 0.0, %v1402
      %1404 = vmatmul.bf16.gmra.mxu0 %v1334
      %v1405 = vpop.f32.mrf.mxu0
      %v1406 = vadd.f32 0.0, %v1405
      %v1407 = vpop.f32.mrf.mxu0
      %v1408 = vadd.f32 0.0, %v1407
      %1409 = vmatmul.bf16.gmra.mxu0 %v1335
      %v1410 = vpop.f32.mrf.mxu0
      %v1411 = vadd.f32 0.0, %v1410
      %v1412 = vpop.f32.mrf.mxu0
      %v1413 = vadd.f32 0.0, %v1412
      %1414 = vmatmul.bf16.gmra.mxu0 %v1336
      %v1415 = vpop.f32.mrf.mxu0
      %v1416 = vadd.f32 0.0, %v1415
      %v1417 = vpop.f32.mrf.mxu0
      %v1418 = vadd.f32 0.0, %v1417
      %1419 = vmatmul.bf16.gmra.mxu0 %v1337
      %v1420 = vpop.f32.mrf.mxu0
      %v1421 = vadd.f32 0.0, %v1420
      %v1422 = vpop.f32.mrf.mxu0
      %1423 = vdwg.mxu0
      %v1424 = vadd.f32 %v1279, %v1401
      %v1425 = vadd.f32 %v1280, %v1403
      %v1426 = vadd.f32 %v1281, %v1406
      %v1427 = vadd.f32 %v1282, %v1408
      %v1428 = vadd.f32 %v1283, %v1411
      %v1429 = vadd.f32 %v1284, %v1413
      %v1430 = vadd.f32 %v1285, %v1416
      %v1431 = vadd.f32 %v1286, %v1418
      %v1432 = vadd.f32 %v1287, %v1421
      %s1433 = scalar_lea.vmem [#allocation7], 132
      %v1434 = vld [vmem:[%s1433] sm:$0xf]
      %v1435 = vld [vmem:[%s1433 + $0x4] sm:$0xf]
      %v1436 = vld [vmem:[%s1433 + $0x8] sm:$0xf]
      %v1437 = vld [vmem:[%s1433 + $0xc] sm:$0xf]
      %v1438 = vld [vmem:[%s1433 + $0x10] sm:$0xf]
      %v1439 = vld [vmem:[%s1433 + $0x14] sm:$0xf]
      %v1440 = vld [vmem:[%s1433 + $0x18] sm:$0xf]
      %v1441 = vld [vmem:[%s1433 + $0x1c] sm:$0xf]
      %v1442 = vld [vmem:[%s1433 + $0x20] sm:$0xf]
      %s1443 = scalar_lea.vmem %s0, 256
      %v1444 = vld [vmem:[%s1443] sm:$0xf]
      %v1445 = vld [vmem:[%s1443 + $0x4] sm:$0xf]
      %v1446 = vld [vmem:[%s1443 + $0x8] sm:$0xf]
      %v1447 = vld [vmem:[%s1443 + $0xc] sm:$0xf]
      %v1448 = vld [vmem:[%s1443 + $0x10] sm:$0xf]
      %v1449 = vld [vmem:[%s1443 + $0x14] sm:$0xf]
      %v1450 = vld [vmem:[%s1443 + $0x18] sm:$0xf]
      %v1451 = vld [vmem:[%s1443 + $0x1c] sm:$0xf]
      %v1452 = vld [vmem:[%s1443 + $0x20] sm:$0xf]
      %v1453 = vld [vmem:[%s1443 + $0x24] sm:$0xf]
      %v1454 = vld [vmem:[%s1443 + $0x28] sm:$0xf]
      %v1455 = vld [vmem:[%s1443 + $0x2c] sm:$0xf]
      %v1456 = vld [vmem:[%s1443 + $0x30] sm:$0xf]
      %v1457 = vld [vmem:[%s1443 + $0x34] sm:$0xf]
      %v1458 = vld [vmem:[%s1443 + $0x38] sm:$0xf]
      %v1459 = vld [vmem:[%s1443 + $0x3c] sm:$0xf]
      %v1469 = vunpack.c.l.b16 %v1434
      %v1470 = vunpack.c.l.b16 %v1435
      %v1471 = vunpack.c.l.b16 %v1436
      %v1472 = vunpack.c.l.b16 %v1437
      %v1473 = vunpack.c.l.b16 %v1438
      %v1474 = vunpack.c.l.b16 %v1439
      %v1475 = vunpack.c.l.b16 %v1440
      %v1476 = vunpack.c.l.b16 %v1441
      %v1477 = vunpack.c.l.b16 %v1442
      %v1478 = vpack.c.b16 %v1470, %v1469
      %v1479 = vpack.c.b16 %v1472, %v1471
      %v1480 = vpack.c.b16 %v1474, %v1473
      %v1481 = vpack.c.b16 %v1476, %v1475
      %v1482 = vpack.c.b16 %v1477, %v1477
      %v1504 = vunpack.c.l.b16 %v1444
      %v1505 = vunpack.c.l.b16 %v1445
      %v1506 = vunpack.c.l.b16 %v1446
      %v1507 = vunpack.c.l.b16 %v1447
      %v1508 = vunpack.c.l.b16 %v1448
      %v1509 = vunpack.c.l.b16 %v1449
      %v1510 = vunpack.c.l.b16 %v1450
      %v1511 = vunpack.c.l.b16 %v1451
      %v1512 = vunpack.c.l.b16 %v1452
      %v1513 = vunpack.c.l.b16 %v1453
      %v1514 = vunpack.c.l.b16 %v1454
      %v1515 = vunpack.c.l.b16 %v1455
      %v1516 = vunpack.c.l.b16 %v1456
      %v1517 = vunpack.c.l.b16 %v1457
      %v1518 = vunpack.c.l.b16 %v1458
      %v1519 = vunpack.c.l.b16 %v1459
      %v1520 = vpack.c.b16 %v1505, %v1504
      %v1521 = vpack.c.b16 %v1507, %v1506
      %v1522 = vpack.c.b16 %v1509, %v1508
      %v1523 = vpack.c.b16 %v1511, %v1510
      %v1524 = vpack.c.b16 %v1513, %v1512
      %v1525 = vpack.c.b16 %v1515, %v1514
      %v1526 = vpack.c.b16 %v1517, %v1516
      %v1527 = vpack.c.b16 %v1519, %v1518
      %1536 = vmatpush.bf16.msra.mxu0 %v1527
      %1537 = vmatpush.bf16.msra.mxu0 %v1526
      %1538 = vmatpush.bf16.msra.mxu0 %v1525
      %1539 = vmatpush.bf16.msra.mxu0 %v1524
      %1540 = vmatpush.bf16.msra.mxu0 %v1523
      %1541 = vmatpush.bf16.msra.mxu0 %v1522
      %1542 = vmatpush.bf16.msra.mxu0 %v1521
      %1543 = vmatpush.bf16.msra.mxu0 %v1520
      %1544 = vmatmul.bf16.gmra.mxu0 %v1478
      %v1545 = vpop.f32.mrf.mxu0
      %v1546 = vadd.f32 0.0, %v1545
      %v1547 = vpop.f32.mrf.mxu0
      %v1548 = vadd.f32 0.0, %v1547
      %1549 = vmatmul.bf16.gmra.mxu0 %v1479
      %v1550 = vpop.f32.mrf.mxu0
      %v1551 = vadd.f32 0.0, %v1550
      %v1552 = vpop.f32.mrf.mxu0
      %v1553 = vadd.f32 0.0, %v1552
      %1554 = vmatmul.bf16.gmra.mxu0 %v1480
      %v1555 = vpop.f32.mrf.mxu0
      %v1556 = vadd.f32 0.0, %v1555
      %v1557 = vpop.f32.mrf.mxu0
      %v1558 = vadd.f32 0.0, %v1557
      %1559 = vmatmul.bf16.gmra.mxu0 %v1481
      %v1560 = vpop.f32.mrf.mxu0
      %v1561 = vadd.f32 0.0, %v1560
      %v1562 = vpop.f32.mrf.mxu0
      %v1563 = vadd.f32 0.0, %v1562
      %1564 = vmatmul.bf16.gmra.mxu0 %v1482
      %v1565 = vpop.f32.mrf.mxu0
      %v1566 = vadd.f32 0.0, %v1565
      %v1567 = vpop.f32.mrf.mxu0
      %1568 = vdwg.mxu0
      %v1569 = vadd.f32 %v1424, %v1546
      %v1570 = vadd.f32 %v1425, %v1548
      %v1571 = vadd.f32 %v1426, %v1551
      %v1572 = vadd.f32 %v1427, %v1553
      %v1573 = vadd.f32 %v1428, %v1556
      %v1574 = vadd.f32 %v1429, %v1558
      %v1575 = vadd.f32 %v1430, %v1561
      %v1576 = vadd.f32 %v1431, %v1563
      %v1577 = vadd.f32 %v1432, %v1566
      %v1578 = vld [vmem:[%s1288] sm:$0xf]
      %v1579 = vld [vmem:[%s1288 + $0x4] sm:$0xf]
      %v1580 = vld [vmem:[%s1288 + $0x8] sm:$0xf]
      %v1581 = vld [vmem:[%s1288 + $0xc] sm:$0xf]
      %v1582 = vld [vmem:[%s1288 + $0x10] sm:$0xf]
      %v1583 = vld [vmem:[%s1288 + $0x14] sm:$0xf]
      %v1584 = vld [vmem:[%s1288 + $0x18] sm:$0xf]
      %v1585 = vld [vmem:[%s1288 + $0x1c] sm:$0xf]
      %v1586 = vld [vmem:[%s1288 + $0x20] sm:$0xf]
      %v1587 = vld [vmem:[%s1288 + $0x24] sm:$0x1]
      %s1588 = scalar_lea.vmem %s0, 320
      %v1589 = vld [vmem:[%s1588] sm:$0xf]
      %v1590 = vld [vmem:[%s1588 + $0x4] sm:$0xf]
      %v1591 = vld [vmem:[%s1588 + $0x8] sm:$0xf]
      %v1592 = vld [vmem:[%s1588 + $0xc] sm:$0xf]
      %v1593 = vld [vmem:[%s1588 + $0x10] sm:$0xf]
      %v1594 = vld [vmem:[%s1588 + $0x14] sm:$0xf]
      %v1595 = vld [vmem:[%s1588 + $0x18] sm:$0xf]
      %v1596 = vld [vmem:[%s1588 + $0x1c] sm:$0xf]
      %v1597 = vld [vmem:[%s1588 + $0x20] sm:$0xf]
      %v1598 = vld [vmem:[%s1588 + $0x24] sm:$0xf]
      %v1599 = vld [vmem:[%s1588 + $0x28] sm:$0xf]
      %v1600 = vld [vmem:[%s1588 + $0x2c] sm:$0xf]
      %v1601 = vld [vmem:[%s1588 + $0x30] sm:$0xf]
      %v1602 = vld [vmem:[%s1588 + $0x34] sm:$0xf]
      %v1603 = vld [vmem:[%s1588 + $0x38] sm:$0xf]
      %v1604 = vld [vmem:[%s1588 + $0x3c] sm:$0xf]
      %v1615 = vunpack.c.l.b16 %v1578
      %v1616 = vunpack.c.l.b16 %v1579
      %v1617 = vunpack.c.l.b16 %v1580
      %v1618 = vunpack.c.l.b16 %v1581
      %v1619 = vunpack.c.l.b16 %v1582
      %v1620 = vunpack.c.l.b16 %v1583
      %v1621 = vunpack.c.l.b16 %v1584
      %v1622 = vunpack.c.l.b16 %v1585
      %v1623 = vunpack.c.l.b16 %v1586
      %v1624 = vunpack.c.l.b16 %v1587
      %v1625 = vpack.c.b16 %v1616, %v1615
      %v1626 = vpack.c.b16 %v1618, %v1617
      %v1627 = vpack.c.b16 %v1620, %v1619
      %v1628 = vpack.c.b16 %v1622, %v1621
      %v1629 = vpack.c.b16 %v1624, %v1623
      %v1631 = vshrl.u32 %v1625, 16
      %v1633 = vshll.u32 %v1625, 16
      %v1635 = vrot.slane %v1633, 1
      %v1636 = vor.u32 %v1631, %v1635
      %v1638 = vshll.u32 %v1626, 16
      %v1640 = vrot.slane %v1638, 1
      %v1641 = vsel %vm1153, %v1636, %v1640
      %v1642 = vshrl.u32 %v1626, 16
      %v1644 = vor.u32 %v1642, %v1640
      %v1646 = vshll.u32 %v1627, 16
      %v1648 = vrot.slane %v1646, 1
      %v1649 = vsel %vm1153, %v1644, %v1648
      %v1650 = vshrl.u32 %v1627, 16
      %v1652 = vor.u32 %v1650, %v1648
      %v1654 = vshll.u32 %v1628, 16
      %v1656 = vrot.slane %v1654, 1
      %v1657 = vsel %vm1153, %v1652, %v1656
      %v1658 = vshrl.u32 %v1628, 16
      %v1660 = vor.u32 %v1658, %v1656
      %v1662 = vshll.u32 %v1629, 16
      %v1664 = vrot.slane %v1662, 1
      %v1665 = vsel %vm1153, %v1660, %v1664
      %v1666 = vshrl.u32 %v1629, 16
      %v1668 = vor.u32 %v1666, %v1664
      %v1690 = vunpack.c.l.b16 %v1589
      %v1691 = vunpack.c.l.b16 %v1590
      %v1692 = vunpack.c.l.b16 %v1591
      %v1693 = vunpack.c.l.b16 %v1592
      %v1694 = vunpack.c.l.b16 %v1593
      %v1695 = vunpack.c.l.b16 %v1594
      %v1696 = vunpack.c.l.b16 %v1595
      %v1697 = vunpack.c.l.b16 %v1596
      %v1698 = vunpack.c.l.b16 %v1597
      %v1699 = vunpack.c.l.b16 %v1598
      %v1700 = vunpack.c.l.b16 %v1599
      %v1701 = vunpack.c.l.b16 %v1600
      %v1702 = vunpack.c.l.b16 %v1601
      %v1703 = vunpack.c.l.b16 %v1602
      %v1704 = vunpack.c.l.b16 %v1603
      %v1705 = vunpack.c.l.b16 %v1604
      %v1706 = vpack.c.b16 %v1691, %v1690
      %v1707 = vpack.c.b16 %v1693, %v1692
      %v1708 = vpack.c.b16 %v1695, %v1694
      %v1709 = vpack.c.b16 %v1697, %v1696
      %v1710 = vpack.c.b16 %v1699, %v1698
      %v1711 = vpack.c.b16 %v1701, %v1700
      %v1712 = vpack.c.b16 %v1703, %v1702
      %v1713 = vpack.c.b16 %v1705, %v1704
      %1722 = vmatpush.bf16.msra.mxu0 %v1713
      %1723 = vmatpush.bf16.msra.mxu0 %v1712
      %1724 = vmatpush.bf16.msra.mxu0 %v1711
      %1725 = vmatpush.bf16.msra.mxu0 %v1710
      %1726 = vmatpush.bf16.msra.mxu0 %v1709
      %1727 = vmatpush.bf16.msra.mxu0 %v1708
      %1728 = vmatpush.bf16.msra.mxu0 %v1707
      %1729 = vmatpush.bf16.msra.mxu0 %v1706
      %1730 = vmatmul.bf16.gmra.mxu0 %v1641
      %v1731 = vpop.f32.mrf.mxu0
      %v1732 = vadd.f32 0.0, %v1731
      %v1733 = vpop.f32.mrf.mxu0
      %v1734 = vadd.f32 0.0, %v1733
      %1735 = vmatmul.bf16.gmra.mxu0 %v1649
      %v1736 = vpop.f32.mrf.mxu0
      %v1737 = vadd.f32 0.0, %v1736
      %v1738 = vpop.f32.mrf.mxu0
      %v1739 = vadd.f32 0.0, %v1738
      %1740 = vmatmul.bf16.gmra.mxu0 %v1657
      %v1741 = vpop.f32.mrf.mxu0
      %v1742 = vadd.f32 0.0, %v1741
      %v1743 = vpop.f32.mrf.mxu0
      %v1744 = vadd.f32 0.0, %v1743
      %1745 = vmatmul.bf16.gmra.mxu0 %v1665
      %v1746 = vpop.f32.mrf.mxu0
      %v1747 = vadd.f32 0.0, %v1746
      %v1748 = vpop.f32.mrf.mxu0
      %v1749 = vadd.f32 0.0, %v1748
      %1750 = vmatmul.bf16.gmra.mxu0 %v1668
      %v1751 = vpop.f32.mrf.mxu0
      %v1752 = vadd.f32 0.0, %v1751
      %v1753 = vpop.f32.mrf.mxu0
      %1754 = vdwg.mxu0
      %v1755 = vadd.f32 %v1569, %v1732
      %v1756 = vadd.f32 %v1570, %v1734
      %v1757 = vadd.f32 %v1571, %v1737
      %v1758 = vadd.f32 %v1572, %v1739
      %v1759 = vadd.f32 %v1573, %v1742
      %v1760 = vadd.f32 %v1574, %v1744
      %v1761 = vadd.f32 %v1575, %v1747
      %v1762 = vadd.f32 %v1576, %v1749
      %v1763 = vadd.f32 %v1577, %v1752
      %v1764 = vld [vmem:[#allocation7 + $0x4] sm:$0xf]
      %v1765 = vld [vmem:[#allocation7 + $0x8] sm:$0xf]
      %v1766 = vld [vmem:[#allocation7 + $0xc] sm:$0xf]
      %v1767 = vld [vmem:[#allocation7 + $0x10] sm:$0xf]
      %v1768 = vld [vmem:[#allocation7 + $0x14] sm:$0xf]
      %v1769 = vld [vmem:[#allocation7 + $0x18] sm:$0xf]
      %v1770 = vld [vmem:[#allocation7 + $0x1c] sm:$0xf]
      %v1771 = vld [vmem:[#allocation7 + $0x20] sm:$0xf]
      %v1772 = vld [vmem:[#allocation7 + $0x24] sm:$0xf]
      %v1773 = vld [vmem:[#allocation7 + $0x28] sm:$0x1]
      %s1774 = scalar_lea.vmem %s0, 384
      %v1775 = vld [vmem:[%s1774] sm:$0xf]
      %v1776 = vld [vmem:[%s1774 + $0x4] sm:$0xf]
      %v1777 = vld [vmem:[%s1774 + $0x8] sm:$0xf]
      %v1778 = vld [vmem:[%s1774 + $0xc] sm:$0xf]
      %v1779 = vld [vmem:[%s1774 + $0x10] sm:$0xf]
      %v1780 = vld [vmem:[%s1774 + $0x14] sm:$0xf]
      %v1781 = vld [vmem:[%s1774 + $0x18] sm:$0xf]
      %v1782 = vld [vmem:[%s1774 + $0x1c] sm:$0xf]
      %v1783 = vld [vmem:[%s1774 + $0x20] sm:$0xf]
      %v1784 = vld [vmem:[%s1774 + $0x24] sm:$0xf]
      %v1785 = vld [vmem:[%s1774 + $0x28] sm:$0xf]
      %v1786 = vld [vmem:[%s1774 + $0x2c] sm:$0xf]
      %v1787 = vld [vmem:[%s1774 + $0x30] sm:$0xf]
      %v1788 = vld [vmem:[%s1774 + $0x34] sm:$0xf]
      %v1789 = vld [vmem:[%s1774 + $0x38] sm:$0xf]
      %v1790 = vld [vmem:[%s1774 + $0x3c] sm:$0xf]
      %v1801 = vunpack.c.l.b16 %v1764
      %v1802 = vunpack.c.l.b16 %v1765
      %v1803 = vunpack.c.l.b16 %v1766
      %v1804 = vunpack.c.l.b16 %v1767
      %v1805 = vunpack.c.l.b16 %v1768
      %v1806 = vunpack.c.l.b16 %v1769
      %v1807 = vunpack.c.l.b16 %v1770
      %v1808 = vunpack.c.l.b16 %v1771
      %v1809 = vunpack.c.l.b16 %v1772
      %v1810 = vunpack.c.l.b16 %v1773
      %v1811 = vpack.c.b16 %v1802, %v1801
      %v1812 = vpack.c.b16 %v1804, %v1803
      %v1813 = vpack.c.b16 %v1806, %v1805
      %v1814 = vpack.c.b16 %v1808, %v1807
      %v1815 = vpack.c.b16 %v1810, %v1809
      %v1817 = vshrl.u32 %v1811, 16
      %v1819 = vshll.u32 %v1811, 16
      %v1821 = vrot.slane %v1819, 1
      %v1822 = vor.u32 %v1817, %v1821
      %v1824 = vshll.u32 %v1812, 16
      %v1826 = vrot.slane %v1824, 1
      %v1827 = vsel %vm1153, %v1822, %v1826
      %v1828 = vshrl.u32 %v1812, 16
      %v1830 = vor.u32 %v1828, %v1826
      %v1832 = vshll.u32 %v1813, 16
      %v1834 = vrot.slane %v1832, 1
      %v1835 = vsel %vm1153, %v1830, %v1834
      %v1836 = vshrl.u32 %v1813, 16
      %v1838 = vor.u32 %v1836, %v1834
      %v1840 = vshll.u32 %v1814, 16
      %v1842 = vrot.slane %v1840, 1
      %v1843 = vsel %vm1153, %v1838, %v1842
      %v1844 = vshrl.u32 %v1814, 16
      %v1846 = vor.u32 %v1844, %v1842
      %v1848 = vshll.u32 %v1815, 16
      %v1850 = vrot.slane %v1848, 1
      %v1851 = vsel %vm1153, %v1846, %v1850
      %v1852 = vshrl.u32 %v1815, 16
      %v1854 = vor.u32 %v1852, %v1850
      %v1876 = vunpack.c.l.b16 %v1775
      %v1877 = vunpack.c.l.b16 %v1776
      %v1878 = vunpack.c.l.b16 %v1777
      %v1879 = vunpack.c.l.b16 %v1778
      %v1880 = vunpack.c.l.b16 %v1779
      %v1881 = vunpack.c.l.b16 %v1780
      %v1882 = vunpack.c.l.b16 %v1781
      %v1883 = vunpack.c.l.b16 %v1782
      %v1884 = vunpack.c.l.b16 %v1783
      %v1885 = vunpack.c.l.b16 %v1784
      %v1886 = vunpack.c.l.b16 %v1785
      %v1887 = vunpack.c.l.b16 %v1786
      %v1888 = vunpack.c.l.b16 %v1787
      %v1889 = vunpack.c.l.b16 %v1788
      %v1890 = vunpack.c.l.b16 %v1789
      %v1891 = vunpack.c.l.b16 %v1790
      %v1892 = vpack.c.b16 %v1877, %v1876
      %v1893 = vpack.c.b16 %v1879, %v1878
      %v1894 = vpack.c.b16 %v1881, %v1880
      %v1895 = vpack.c.b16 %v1883, %v1882
      %v1896 = vpack.c.b16 %v1885, %v1884
      %v1897 = vpack.c.b16 %v1887, %v1886
      %v1898 = vpack.c.b16 %v1889, %v1888
      %v1899 = vpack.c.b16 %v1891, %v1890
      %1908 = vmatpush.bf16.msra.mxu0 %v1899
      %1909 = vmatpush.bf16.msra.mxu0 %v1898
      %1910 = vmatpush.bf16.msra.mxu0 %v1897
      %1911 = vmatpush.bf16.msra.mxu0 %v1896
      %1912 = vmatpush.bf16.msra.mxu0 %v1895
      %1913 = vmatpush.bf16.msra.mxu0 %v1894
      %1914 = vmatpush.bf16.msra.mxu0 %v1893
      %1915 = vmatpush.bf16.msra.mxu0 %v1892
      %1916 = vmatmul.bf16.gmra.mxu0 %v1827
      %v1917 = vpop.f32.mrf.mxu0
      %v1918 = vadd.f32 0.0, %v1917
      %v1919 = vpop.f32.mrf.mxu0
      %v1920 = vadd.f32 0.0, %v1919
      %1921 = vmatmul.bf16.gmra.mxu0 %v1835
      %v1922 = vpop.f32.mrf.mxu0
      %v1923 = vadd.f32 0.0, %v1922
      %v1924 = vpop.f32.mrf.mxu0
      %v1925 = vadd.f32 0.0, %v1924
      %1926 = vmatmul.bf16.gmra.mxu0 %v1843
      %v1927 = vpop.f32.mrf.mxu0
      %v1928 = vadd.f32 0.0, %v1927
      %v1929 = vpop.f32.mrf.mxu0
      %v1930 = vadd.f32 0.0, %v1929
      %1931 = vmatmul.bf16.gmra.mxu0 %v1851
      %v1932 = vpop.f32.mrf.mxu0
      %v1933 = vadd.f32 0.0, %v1932
      %v1934 = vpop.f32.mrf.mxu0
      %v1935 = vadd.f32 0.0, %v1934
      %1936 = vmatmul.bf16.gmra.mxu0 %v1854
      %v1937 = vpop.f32.mrf.mxu0
      %v1938 = vadd.f32 0.0, %v1937
      %v1939 = vpop.f32.mrf.mxu0
      %1940 = vdwg.mxu0
      %v1941 = vadd.f32 %v1755, %v1918
      %v1942 = vadd.f32 %v1756, %v1920
      %v1943 = vadd.f32 %v1757, %v1923
      %v1944 = vadd.f32 %v1758, %v1925
      %v1945 = vadd.f32 %v1759, %v1928
      %v1946 = vadd.f32 %v1760, %v1930
      %v1947 = vadd.f32 %v1761, %v1933
      %v1948 = vadd.f32 %v1762, %v1935
      %v1949 = vadd.f32 %v1763, %v1938
      %v1950 = vld [vmem:[%s856 + $0x4] sm:$0xf]
      %v1951 = vld [vmem:[%s856 + $0x8] sm:$0xf]
      %v1952 = vld [vmem:[%s856 + $0xc] sm:$0xf]
      %v1953 = vld [vmem:[%s856 + $0x10] sm:$0xf]
      %v1954 = vld [vmem:[%s856 + $0x14] sm:$0xf]
      %v1955 = vld [vmem:[%s856 + $0x18] sm:$0xf]
      %v1956 = vld [vmem:[%s856 + $0x1c] sm:$0xf]
      %v1957 = vld [vmem:[%s856 + $0x20] sm:$0xf]
      %v1958 = vld [vmem:[%s856 + $0x24] sm:$0xf]
      %v1959 = vld [vmem:[%s856 + $0x28] sm:$0x1]
      %s1960 = scalar_lea.vmem %s0, 448
      %v1961 = vld [vmem:[%s1960] sm:$0xf]
      %v1962 = vld [vmem:[%s1960 + $0x4] sm:$0xf]
      %v1963 = vld [vmem:[%s1960 + $0x8] sm:$0xf]
      %v1964 = vld [vmem:[%s1960 + $0xc] sm:$0xf]
      %v1965 = vld [vmem:[%s1960 + $0x10] sm:$0xf]
      %v1966 = vld [vmem:[%s1960 + $0x14] sm:$0xf]
      %v1967 = vld [vmem:[%s1960 + $0x18] sm:$0xf]
      %v1968 = vld [vmem:[%s1960 + $0x1c] sm:$0xf]
      %v1969 = vld [vmem:[%s1960 + $0x20] sm:$0xf]
      %v1970 = vld [vmem:[%s1960 + $0x24] sm:$0xf]
      %v1971 = vld [vmem:[%s1960 + $0x28] sm:$0xf]
      %v1972 = vld [vmem:[%s1960 + $0x2c] sm:$0xf]
      %v1973 = vld [vmem:[%s1960 + $0x30] sm:$0xf]
      %v1974 = vld [vmem:[%s1960 + $0x34] sm:$0xf]
      %v1975 = vld [vmem:[%s1960 + $0x38] sm:$0xf]
      %v1976 = vld [vmem:[%s1960 + $0x3c] sm:$0xf]
      %v1987 = vunpack.c.l.b16 %v1950
      %v1988 = vunpack.c.l.b16 %v1951
      %v1989 = vunpack.c.l.b16 %v1952
      %v1990 = vunpack.c.l.b16 %v1953
      %v1991 = vunpack.c.l.b16 %v1954
      %v1992 = vunpack.c.l.b16 %v1955
      %v1993 = vunpack.c.l.b16 %v1956
      %v1994 = vunpack.c.l.b16 %v1957
      %v1995 = vunpack.c.l.b16 %v1958
      %v1996 = vunpack.c.l.b16 %v1959
      %v1997 = vpack.c.b16 %v1988, %v1987
      %v1998 = vpack.c.b16 %v1990, %v1989
      %v1999 = vpack.c.b16 %v1992, %v1991
      %v2000 = vpack.c.b16 %v1994, %v1993
      %v2001 = vpack.c.b16 %v1996, %v1995
      %v2003 = vshrl.u32 %v1997, 16
      %v2005 = vshll.u32 %v1997, 16
      %v2007 = vrot.slane %v2005, 1
      %v2008 = vor.u32 %v2003, %v2007
      %v2010 = vshll.u32 %v1998, 16
      %v2012 = vrot.slane %v2010, 1
      %v2013 = vsel %vm1153, %v2008, %v2012
      %v2014 = vshrl.u32 %v1998, 16
      %v2016 = vor.u32 %v2014, %v2012
      %v2018 = vshll.u32 %v1999, 16
      %v2020 = vrot.slane %v2018, 1
      %v2021 = vsel %vm1153, %v2016, %v2020
      %v2022 = vshrl.u32 %v1999, 16
      %v2024 = vor.u32 %v2022, %v2020
      %v2026 = vshll.u32 %v2000, 16
      %v2028 = vrot.slane %v2026, 1
      %v2029 = vsel %vm1153, %v2024, %v2028
      %v2030 = vshrl.u32 %v2000, 16
      %v2032 = vor.u32 %v2030, %v2028
      %v2034 = vshll.u32 %v2001, 16
      %v2036 = vrot.slane %v2034, 1
      %v2037 = vsel %vm1153, %v2032, %v2036
      %v2038 = vshrl.u32 %v2001, 16
      %v2040 = vor.u32 %v2038, %v2036
      %v2062 = vunpack.c.l.b16 %v1961
      %v2063 = vunpack.c.l.b16 %v1962
      %v2064 = vunpack.c.l.b16 %v1963
      %v2065 = vunpack.c.l.b16 %v1964
      %v2066 = vunpack.c.l.b16 %v1965
      %v2067 = vunpack.c.l.b16 %v1966
      %v2068 = vunpack.c.l.b16 %v1967
      %v2069 = vunpack.c.l.b16 %v1968
      %v2070 = vunpack.c.l.b16 %v1969
      %v2071 = vunpack.c.l.b16 %v1970
      %v2072 = vunpack.c.l.b16 %v1971
      %v2073 = vunpack.c.l.b16 %v1972
      %v2074 = vunpack.c.l.b16 %v1973
      %v2075 = vunpack.c.l.b16 %v1974
      %v2076 = vunpack.c.l.b16 %v1975
      %v2077 = vunpack.c.l.b16 %v1976
      %v2078 = vpack.c.b16 %v2063, %v2062
      %v2079 = vpack.c.b16 %v2065, %v2064
      %v2080 = vpack.c.b16 %v2067, %v2066
      %v2081 = vpack.c.b16 %v2069, %v2068
      %v2082 = vpack.c.b16 %v2071, %v2070
      %v2083 = vpack.c.b16 %v2073, %v2072
      %v2084 = vpack.c.b16 %v2075, %v2074
      %v2085 = vpack.c.b16 %v2077, %v2076
      %2094 = vmatpush.bf16.msra.mxu0 %v2085
      %2095 = vmatpush.bf16.msra.mxu0 %v2084
      %2096 = vmatpush.bf16.msra.mxu0 %v2083
      %2097 = vmatpush.bf16.msra.mxu0 %v2082
      %2098 = vmatpush.bf16.msra.mxu0 %v2081
      %2099 = vmatpush.bf16.msra.mxu0 %v2080
      %2100 = vmatpush.bf16.msra.mxu0 %v2079
      %2101 = vmatpush.bf16.msra.mxu0 %v2078
      %2102 = vmatmul.bf16.gmra.mxu0 %v2013
      %v2103 = vpop.f32.mrf.mxu0
      %v2104 = vadd.f32 0.0, %v2103
      %v2105 = vpop.f32.mrf.mxu0
      %v2106 = vadd.f32 0.0, %v2105
      %2107 = vmatmul.bf16.gmra.mxu0 %v2021
      %v2108 = vpop.f32.mrf.mxu0
      %v2109 = vadd.f32 0.0, %v2108
      %v2110 = vpop.f32.mrf.mxu0
      %v2111 = vadd.f32 0.0, %v2110
      %2112 = vmatmul.bf16.gmra.mxu0 %v2029
      %v2113 = vpop.f32.mrf.mxu0
      %v2114 = vadd.f32 0.0, %v2113
      %v2115 = vpop.f32.mrf.mxu0
      %v2116 = vadd.f32 0.0, %v2115
      %2117 = vmatmul.bf16.gmra.mxu0 %v2037
      %v2118 = vpop.f32.mrf.mxu0
      %v2119 = vadd.f32 0.0, %v2118
      %v2120 = vpop.f32.mrf.mxu0
      %v2121 = vadd.f32 0.0, %v2120
      %2122 = vmatmul.bf16.gmra.mxu0 %v2040
      %v2123 = vpop.f32.mrf.mxu0
      %v2124 = vadd.f32 0.0, %v2123
      %v2125 = vpop.f32.mrf.mxu0
      %2126 = vdwg.mxu0
      %v2127 = vadd.f32 %v1941, %v2104
      %v2128 = vadd.f32 %v1942, %v2106
      %v2129 = vadd.f32 %v1943, %v2109
      %v2130 = vadd.f32 %v1944, %v2111
      %v2131 = vadd.f32 %v1945, %v2114
      %v2132 = vadd.f32 %v1946, %v2116
      %v2133 = vadd.f32 %v1947, %v2119
      %v2134 = vadd.f32 %v1948, %v2121
      %v2135 = vadd.f32 %v1949, %v2124
      %v2136 = vld [vmem:[#allocation7 + $0x4] sm:$0xe]
      %s2137 = scalar_lea.vmem %s0, 512
      %v2138 = vld [vmem:[%s2137] sm:$0xf]
      %v2139 = vld [vmem:[%s2137 + $0x4] sm:$0xf]
      %v2140 = vld [vmem:[%s2137 + $0x8] sm:$0xf]
      %v2141 = vld [vmem:[%s2137 + $0xc] sm:$0xf]
      %v2142 = vld [vmem:[%s2137 + $0x10] sm:$0xf]
      %v2143 = vld [vmem:[%s2137 + $0x14] sm:$0xf]
      %v2144 = vld [vmem:[%s2137 + $0x18] sm:$0xf]
      %v2145 = vld [vmem:[%s2137 + $0x1c] sm:$0xf]
      %v2146 = vld [vmem:[%s2137 + $0x20] sm:$0xf]
      %v2147 = vld [vmem:[%s2137 + $0x24] sm:$0xf]
      %v2148 = vld [vmem:[%s2137 + $0x28] sm:$0xf]
      %v2149 = vld [vmem:[%s2137 + $0x2c] sm:$0xf]
      %v2150 = vld [vmem:[%s2137 + $0x30] sm:$0xf]
      %v2151 = vld [vmem:[%s2137 + $0x34] sm:$0xf]
      %v2152 = vld [vmem:[%s2137 + $0x38] sm:$0xf]
      %v2153 = vld [vmem:[%s2137 + $0x3c] sm:$0xf]
      %v2155 = vunpack.c.l.b16 %v2136
      %v2156 = vpack.c.b16 %v1802, %v2155
      %vm2157 = vcmask 1046528
      %v2158 = vrot.slane %v2156, 1
      %v2159 = vrot.slane %v1812, 1
      %v2160 = vsel %vm2157, %v2158, %v2159
      %v2161 = vrot.slane %v1813, 1
      %v2162 = vsel %vm2157, %v2159, %v2161
      %v2163 = vrot.slane %v1814, 1
      %v2164 = vsel %vm2157, %v2161, %v2163
      %v2165 = vrot.slane %v1815, 1
      %v2166 = vsel %vm2157, %v2163, %v2165
      %v2188 = vunpack.c.l.b16 %v2138
      %v2189 = vunpack.c.l.b16 %v2139
      %v2190 = vunpack.c.l.b16 %v2140
      %v2191 = vunpack.c.l.b16 %v2141
      %v2192 = vunpack.c.l.b16 %v2142
      %v2193 = vunpack.c.l.b16 %v2143
      %v2194 = vunpack.c.l.b16 %v2144
      %v2195 = vunpack.c.l.b16 %v2145
      %v2196 = vunpack.c.l.b16 %v2146
      %v2197 = vunpack.c.l.b16 %v2147
      %v2198 = vunpack.c.l.b16 %v2148
      %v2199 = vunpack.c.l.b16 %v2149
      %v2200 = vunpack.c.l.b16 %v2150
      %v2201 = vunpack.c.l.b16 %v2151
      %v2202 = vunpack.c.l.b16 %v2152
      %v2203 = vunpack.c.l.b16 %v2153
      %v2204 = vpack.c.b16 %v2189, %v2188
      %v2205 = vpack.c.b16 %v2191, %v2190
      %v2206 = vpack.c.b16 %v2193, %v2192
      %v2207 = vpack.c.b16 %v2195, %v2194
      %v2208 = vpack.c.b16 %v2197, %v2196
      %v2209 = vpack.c.b16 %v2199, %v2198
      %v2210 = vpack.c.b16 %v2201, %v2200
      %v2211 = vpack.c.b16 %v2203, %v2202
      %2220 = vmatpush.bf16.msra.mxu0 %v2211
      %2221 = vmatpush.bf16.msra.mxu0 %v2210
      %2222 = vmatpush.bf16.msra.mxu0 %v2209
      %2223 = vmatpush.bf16.msra.mxu0 %v2208
      %2224 = vmatpush.bf16.msra.mxu0 %v2207
      %2225 = vmatpush.bf16.msra.mxu0 %v2206
      %2226 = vmatpush.bf16.msra.mxu0 %v2205
      %2227 = vmatpush.bf16.msra.mxu0 %v2204
      %2228 = vmatmul.bf16.gmra.mxu0 %v2160
      %v2229 = vpop.f32.mrf.mxu0
      %v2230 = vadd.f32 0.0, %v2229
      %v2231 = vpop.f32.mrf.mxu0
      %v2232 = vadd.f32 0.0, %v2231
      %2233 = vmatmul.bf16.gmra.mxu0 %v2162
      %v2234 = vpop.f32.mrf.mxu0
      %v2235 = vadd.f32 0.0, %v2234
      %v2236 = vpop.f32.mrf.mxu0
      %v2237 = vadd.f32 0.0, %v2236
      %2238 = vmatmul.bf16.gmra.mxu0 %v2164
      %v2239 = vpop.f32.mrf.mxu0
      %v2240 = vadd.f32 0.0, %v2239
      %v2241 = vpop.f32.mrf.mxu0
      %v2242 = vadd.f32 0.0, %v2241
      %2243 = vmatmul.bf16.gmra.mxu0 %v2166
      %v2244 = vpop.f32.mrf.mxu0
      %v2245 = vadd.f32 0.0, %v2244
      %v2246 = vpop.f32.mrf.mxu0
      %v2247 = vadd.f32 0.0, %v2246
      %2248 = vmatmul.bf16.gmra.mxu0 %v2165
      %v2249 = vpop.f32.mrf.mxu0
      %v2250 = vadd.f32 0.0, %v2249
      %v2251 = vpop.f32.mrf.mxu0
      %2252 = vdwg.mxu0
      %v2253 = vadd.f32 %v2127, %v2230
      %v2254 = vadd.f32 %v2128, %v2232
      %v2255 = vadd.f32 %v2129, %v2235
      %v2256 = vadd.f32 %v2130, %v2237
      %v2257 = vadd.f32 %v2131, %v2240
      %v2258 = vadd.f32 %v2132, %v2242
      %v2259 = vadd.f32 %v2133, %v2245
      %v2260 = vadd.f32 %v2134, %v2247
      %v2261 = vadd.f32 %v2135, %v2250
      %v2262 = vld [vmem:[#allocation8] sm:$0x1]
      %v2264 = vperm.slane %v2262, 0
      %v2266 = vadd.f32 %v2253, %v2264
      %v2267 = vadd.f32 %v2254, %v2264
      %v2268 = vadd.f32 %v2255, %v2264
      %v2269 = vadd.f32 %v2256, %v2264
      %v2270 = vadd.f32 %v2257, %v2264
      %v2271 = vadd.f32 %v2258, %v2264
      %v2272 = vadd.f32 %v2259, %v2264
      %v2273 = vadd.f32 %v2260, %v2264
      %v2274 = vadd.f32 %v2261, %v2264
      %2275 = vst [vmem:[%s176] sm:$0xff] %v2266
      %2276 = vst [vmem:[%s176 + $0x8] sm:$0xff] %v2267
      %2277 = vst [vmem:[%s176 + $0x10] sm:$0xff] %v2268
      %2278 = vst [vmem:[%s176 + $0x18] sm:$0xff] %v2269
      %2279 = vst [vmem:[%s176 + $0x20] sm:$0xff] %v2270
      %2280 = vst [vmem:[%s176 + $0x28] sm:$0xff] %v2271
      %2281 = vst [vmem:[%s176 + $0x30] sm:$0xff] %v2272
      %2282 = vst [vmem:[%s176 + $0x38] sm:$0xff] %v2273
      %2283 = vst [vmem:[%s176 + $0x40] sm:$0xff] %v2274
      %p2284 = scmp.lt.s32.totalorder %s20, 1
      %s2285 = scalar_select %p2284, %s20, 1
      %s2286 = smul.addr %s2285, 9
      %s2287 = smul.addr %s2286, 8
      %s2288 = scalar_lea.vmem %s4, %s2287
      // Predicated region
      $region33: #{_downsample_conv_impl.2} parent=31 // pred_check
        %p2289 = pneg %p106
      $region34: #{_downsample_conv_impl.2} parent=31 // pred_check_branch
        %2291 = sbr.rel (%p2289) target = $region36
      $region35: #{_downsample_conv_impl.2} parent=31 // pred_region
        _
      $region36: #{_downsample_conv_impl.2} parent=31 // pred_fallthru
        _
    $region32: #{_downsample_conv_impl.2} parent=5 // pred_fallthru
      _
    %p2292 = scmp.le.s32.totalorder 2, %s15
    // Predicated region
    $region37: #{_downsample_conv_impl.2} parent=5 // pred_check
      %p2293 = pneg %p2292
    $region38: #{_downsample_conv_impl.2} parent=5 // pred_check_branch
      %2295 = sbr.rel (%p2293) target = $region40
    $region39: #{_downsample_conv_impl.2} parent=5 // pred_region
      %s2296 = ssub.s32 %s15, 2
      // Predicated region
      $region41: #{_downsample_conv_impl.2} parent=39 // pred_check
        %p2297 = pneg %p112
      $region42: #{_downsample_conv_impl.2} parent=39 // pred_check_branch
        %2299 = sbr.rel (%p2297) target = $region44
      $region43: #{_downsample_conv_impl.2} parent=39 // pred_region
        %p2300 = scmp.lt.s32.totalorder %s21, 1
        %s2301 = scalar_select %p2300, %s21, 1
        %s2302 = smul.addr %s2301, 9
        %s2303 = smul.addr %s2302, 8
        %s2304 = scalar_lea.vmem %s4, %s2303
      $region44: #{_downsample_conv_impl.2} parent=39 // pred_fallthru
        _
    $region40: #{_downsample_conv_impl.2} parent=5 // pred_fallthru
      _
  $region6: #{_downsample_conv_impl.2} parent=0 // loop_footer
    %s19 = sadd.s32 1, %s15
  $region7: #{_downsample_conv_impl.2} parent=0 // loop_footer_branch
    %14 = sbr.rel target = $region3
  $region8: #{_downsample_conv_impl.2} parent=0 // loop_exit
    _

</llo_original>
